<compile_context>
chip_gen: v6e
topology: v6e:2x2x1
jax: 0.10.0
libtpu: 0.0.40
codegen_flags: <defaults>
</compile_context>

<pallas_src>
import functools

import jax
import jax.numpy as jnp
from jax.experimental import pallas as pl
from jax.experimental.pallas import tpu as pltpu

ENCODED_DIM = 3                      # encoded_space_dim (mu_vec has 3 entries)
HIDDEN = 16 * 32                     # 512
NOUT = (11, 501)                     # unflatten target
NOUT_FLAT = NOUT[0] * NOUT[1]        # 5511
NOUT_PAD = 44 * 128                  # 5632: next multiple of 128 -> full lane-dense tiles


def _decoder_kernel(x_ref, w1_ref, b1_ref, w2_ref, b2_ref, o_ref):
    # x_ref:  (B, ENCODED_DIM)      full block, replicated across grid
    # w1_ref: (ENCODED_DIM, HIDDEN) full block, replicated across grid (f32)
    # b1_ref: (1, HIDDEN)           full block, replicated across grid (f32)
    # w2_ref: (HIDDEN, tn)          tile j of the padded second-layer weight (bf16)
    # b2_ref: (1, tn)               tile j of the padded second-layer bias   (f32)
    # o_ref:  (B, tn)               tile j of the padded output              (f32)
    h = jnp.dot(x_ref[...], w1_ref[...], preferred_element_type=jnp.float32)
    h = jnp.maximum(h + b1_ref[...], 0.0)                       # ReLU(True)
    y = jnp.dot(h.astype(jnp.bfloat16), w2_ref[...],            # native bf16 MXU path
                preferred_element_type=jnp.float32)
    o_ref[...] = (y + b2_ref[...]).astype(o_ref.dtype)


@functools.partial(jax.jit, static_argnames=("tn",))
def decoder_forward(x, w1, b1_2d, w2p, b2p, *, tn=2816):
    """x: (B, ENCODED_DIM) f32; w2p/b2p are the padded (to 5632 cols) / bf16-W2 params.

    Returns (B, 11, 501) float32.
    """
    B = x.shape[0]
    n_pad = w2p.shape[1]                                        # 5632
    if n_pad % tn != 0:
        raise ValueError(f"padded output width {n_pad} must be divisible by tn={tn}")
    grid = (n_pad // tn,)                                       # 2 tiles at tn=2816

    # Advisory cost hint: the kernel is memory-bound on the W2 stream.
    flops = 2 * B * (ENCODED_DIM * HIDDEN + HIDDEN * n_pad)
    bytes_accessed = (
        w2p.size * w2p.dtype.itemsize      # dominant: bf16 W2 stream
        + b2p.size * b2p.dtype.itemsize
        + w1.size * w1.dtype.itemsize
        + b1_2d.size * b1_2d.dtype.itemsize
        + x.size * x.dtype.itemsize
        + B * n_pad * 4                    # f32 output
    )
    cost = pl.CostEstimate(flops=flops, transcendentals=0, bytes_accessed=bytes_accessed)

    out = pl.pallas_call(
        _decoder_kernel,
        out_shape=jax.ShapeDtypeStruct((B, n_pad), jnp.float32),
        grid_spec=pltpu.PrefetchScalarGridSpec(
            num_scalar_prefetch=0,
            grid=grid,
            in_specs=[
                pl.BlockSpec((B, ENCODED_DIM), lambda j: (0, 0)),       # x  (replicated)
                pl.BlockSpec((ENCODED_DIM, HIDDEN), lambda j: (0, 0)),  # W1 (replicated)
                pl.BlockSpec((1, HIDDEN), lambda j: (0, 0)),            # b1 (replicated)
                pl.BlockSpec((HIDDEN, tn), lambda j: (0, j)),           # W2 tile (bf16, full)
                pl.BlockSpec((1, tn), lambda j: (0, j)),                # b2 tile (full)
            ],
            out_specs=pl.BlockSpec((B, tn), lambda j: (0, j)),          # output tile (full)
        ),
        compiler_params=pltpu.CompilerParams(
            dimension_semantics=("parallel",),                          # even 2-TC split on v7x
        ),
        cost_estimate=cost,
    )(x, w1, b1_2d, w2p, b2p)

    # Drop the zero-padded columns, then nn.Unflatten(dim=1, (11, 501)).
    return out[:, :NOUT_FLAT].reshape(B, *NOUT)


def init_params(key):
    """Deterministic init matching PyTorch nn.Linear default (U[-1/sqrt(fan_in), 1/sqrt(fan_in)])."""
    k1, k2, k3, k4 = jax.random.split(key, 4)
    bound1 = 1.0 / jnp.sqrt(jnp.float32(ENCODED_DIM))
    bound2 = 1.0 / jnp.sqrt(jnp.float32(HIDDEN))
    w1 = jax.random.uniform(k1, (ENCODED_DIM, HIDDEN), jnp.float32, -bound1, bound1)
    b1 = jax.random.uniform(k2, (HIDDEN,), jnp.float32, -bound1, bound1)
    w2 = jax.random.uniform(k3, (HIDDEN, NOUT_FLAT), jnp.float32, -bound2, bound2)
    b2 = jax.random.uniform(k4, (NOUT_FLAT,), jnp.float32, -bound2, bound2)
    return w1, b1, w2, b2


def preprocess_params(w1, b1, w2, b2):
    """One-time (outside the jit) param prep: pad 5511 -> 5632 cols, cast W2 to bf16."""
    pad = NOUT_PAD - w2.shape[1]
    w2p = jnp.pad(w2, ((0, 0), (0, pad))).astype(jnp.bfloat16)   # (512, 5632) bf16
    b2p = jnp.pad(b2, (0, pad)).reshape(1, -1)                   # (1, 5632)   f32
    b1_2d = b1.reshape(1, -1)                                    # (1, 512)    f32
    return w1, b1_2d, w2p, b2p


def reference_forward(x, w1, b1_2d, w2p, b2p):
    """Plain-JAX reference using the same (bf16-stored) params as the kernel."""
    h = jnp.maximum(x @ w1 + b1_2d, 0.0)
    y = jnp.dot(h.astype(jnp.bfloat16), w2p, preferred_element_type=jnp.float32) + b2p
    return y[:, :NOUT_FLAT].reshape(x.shape[0], *NOUT)


if __name__ == "__main__":
    key = jax.random.PRNGKey(0)
    kx, kp = jax.random.split(key)

    B = 2  # small batch of mu-vectors, each of length 3
    x = jax.random.normal(kx, (B, ENCODED_DIM), jnp.float32)
    w1, b1, w2, b2 = init_params(kp)
    w1, b1_2d, w2p, b2p = preprocess_params(w1, b1, w2, b2)   # one-time, outside the jit

    out = decoder_forward(x, w1, b1_2d, w2p, b2p)
    out = jax.block_until_ready(out)

    ref = reference_forward(x, w1, b1_2d, w2p, b2p)
    assert out.shape == (B, 11, 501), out.shape
    assert jnp.allclose(out, ref, atol=1e-2, rtol=1e-2), "mismatch vs JAX reference"

    print("KERNEL_OK")
</pallas_src>

<mosaic_0001>
module attributes {stable_mosaic.version = 11 : i64} {
  func.func @_decoder_kernel(%arg0: i32, %arg1: memref<2x3xf32, #tpu.memory_space<vmem>>, %arg2: memref<3x512xf32, #tpu.memory_space<vmem>>, %arg3: memref<1x512xf32, #tpu.memory_space<vmem>>, %arg4: memref<512x2816xbf16, #tpu.memory_space<vmem>>, %arg5: memref<1x2816xf32, #tpu.memory_space<vmem>>, %arg6: memref<2x2816xf32, #tpu.memory_space<vmem>>) attributes {dimension_semantics = [#tpu.dimension_semantics<parallel>], iteration_bounds = array<i64: 2>, scalar_prefetch = 0 : i64, scratch_operands = 0 : i64, tpu.core_type = #tpu.core_type<tc>, window_params = [{pipeline_mode = #tpu.pipeline_mode<synchronous>, transform_indices = @transform_0, window_bounds = array<i64: 2, 3>}, {pipeline_mode = #tpu.pipeline_mode<synchronous>, transform_indices = @transform_1, window_bounds = array<i64: 3, 512>}, {pipeline_mode = #tpu.pipeline_mode<synchronous>, transform_indices = @transform_2, window_bounds = array<i64: 1, 512>}, {transform_indices = @transform_3, window_bounds = array<i64: 512, 2816>}, {transform_indices = @transform_4, window_bounds = array<i64: 1, 2816>}, {transform_indices = @transform_5, window_bounds = array<i64: 2, 2816>}]} {
    %c0 = arith.constant 0 : index
    %c0_0 = arith.constant 0 : index
    %0 = vector.load %arg1[%c0, %c0_0] : memref<2x3xf32, #tpu.memory_space<vmem>>, vector<2x3xf32>
    %c0_1 = arith.constant 0 : index
    %c0_2 = arith.constant 0 : index
    %1 = vector.load %arg2[%c0_1, %c0_2] : memref<3x512xf32, #tpu.memory_space<vmem>>, vector<3x512xf32>
    %cst = arith.constant dense<0.000000e+00> : vector<2x512xf32>
    %2 = tpu.matmul %0, %1, %cst {dimension_numbers = #tpu.dot_dimension_numbers<[1], [0], [0], [1], [0, 0, 1, 1], [], []>} : vector<2x3xf32>, vector<3x512xf32>, vector<2x512xf32> -> vector<2x512xf32>
    %c0_3 = arith.constant 0 : index
    %c0_4 = arith.constant 0 : index
    %3 = vector.load %arg3[%c0_3, %c0_4] : memref<1x512xf32, #tpu.memory_space<vmem>>, vector<1x512xf32>
    %4 = vector.broadcast %3 : vector<1x512xf32> to vector<2x512xf32>
    %5 = arith.addf %2, %4 : vector<2x512xf32>
    %cst_5 = arith.constant 0.000000e+00 : f32
    %6 = vector.broadcast %cst_5 : f32 to vector<2x512xf32>
    %7 = arith.maximumf %5, %6 : vector<2x512xf32>
    %8 = arith.truncf %7 : vector<2x512xf32> to vector<2x512xbf16>
    %c0_6 = arith.constant 0 : index
    %c0_7 = arith.constant 0 : index
    %9 = vector.load %arg4[%c0_6, %c0_7] : memref<512x2816xbf16, #tpu.memory_space<vmem>>, vector<512x2816xbf16>
    %cst_8 = arith.constant dense<0.000000e+00> : vector<2x2816xf32>
    %10 = tpu.matmul %8, %9, %cst_8 {dimension_numbers = #tpu.dot_dimension_numbers<[1], [0], [0], [1], [0, 0, 1, 1], [], []>} : vector<2x512xbf16>, vector<512x2816xbf16>, vector<2x2816xf32> -> vector<2x2816xf32>
    %c0_9 = arith.constant 0 : index
    %c0_10 = arith.constant 0 : index
    %11 = vector.load %arg5[%c0_9, %c0_10] : memref<1x2816xf32, #tpu.memory_space<vmem>>, vector<1x2816xf32>
    %12 = vector.broadcast %11 : vector<1x2816xf32> to vector<2x2816xf32>
    %13 = arith.addf %10, %12 : vector<2x2816xf32>
    %c0_11 = arith.constant 0 : index
    %c0_12 = arith.constant 0 : index
    %14 = vector.load %arg6[%c0_11, %c0_12] : memref<2x2816xf32, #tpu.memory_space<vmem>>, vector<2x2816xf32>
    tpu.vector_store %arg6[%c0_11, %c0_12], %13 {strides = array<i32>} : memref<2x2816xf32, #tpu.memory_space<vmem>>, vector<2x2816xf32>,
    return
  }
  func.func @transform_0(%arg0: i32) -> (i32, i32) {
    %c0_i32 = arith.constant 0 : i32
    %c0_i32_0 = arith.constant 0 : i32
    %c0_i32_1 = arith.constant 0 : i32
    return %c0_i32, %c0_i32_0 : i32, i32
  }
  func.func @transform_1(%arg0: i32) -> (i32, i32) {
    %c0_i32 = arith.constant 0 : i32
    %c0_i32_0 = arith.constant 0 : i32
    %c0_i32_1 = arith.constant 0 : i32
    return %c0_i32, %c0_i32_0 : i32, i32
  }
  func.func @transform_2(%arg0: i32) -> (i32, i32) {
    %c0_i32 = arith.constant 0 : i32
    %c0_i32_0 = arith.constant 0 : i32
    %c0_i32_1 = arith.constant 0 : i32
    return %c0_i32, %c0_i32_0 : i32, i32
  }
  func.func @transform_3(%arg0: i32) -> (i32, i32) {
    %c0_i32 = arith.constant 0 : i32
    %c0_i32_0 = arith.constant 0 : i32
    return %c0_i32, %arg0 : i32, i32
  }
  func.func @transform_4(%arg0: i32) -> (i32, i32) {
    %c0_i32 = arith.constant 0 : i32
    %c0_i32_0 = arith.constant 0 : i32
    return %c0_i32, %arg0 : i32, i32
  }
  func.func @transform_5(%arg0: i32) -> (i32, i32) {
    %c0_i32 = arith.constant 0 : i32
    %c0_i32_0 = arith.constant 0 : i32
    return %c0_i32, %arg0 : i32, i32
  }
}

</mosaic_0001>

<llo_original>
// kernel: decoder_forward.1
$region0: #{decoder_forward.1}
  #allocation0 [shape = 'u32[]', space=smem, size = 0x4, offset = 0x4, fixed_abs, tag = 'smem constant byte address 0x4 - core index']
  #allocation1 [shape = 'u32[144,128]{1,0:T(1,128)}', space=vmem, size = 0x12000, scoped, tag = 'internal scratch']
  %s0 = inlined_call_operand.hbm [shape: f32[2,3], index: 0, kind: input, shape index: {}]
  %s1 = inlined_call_operand.hbm [shape: f32[3,512], index: 1, kind: input, shape index: {}]
  %s2 = inlined_call_operand.hbm [shape: f32[1,512], index: 2, kind: input, shape index: {}]
  %s3 = inlined_call_operand.hbm [shape: bf16[512,5632], index: 3, kind: input, shape index: {}]
  %s4 = inlined_call_operand.hbm [shape: f32[1,5632], index: 4, kind: input, shape index: {}]
  %s5 = inlined_call_operand.vmem [shape: f32[2,5632], index: 5, kind: output, shape index: {}]
  %s6 = sld [smem:[#allocation0]]
  $region73: #{decoder_forward.1} parent=0
    _
  %s8 = ssub.s32 1, %s6
  %s9 = scalar_select 0, %s8, %s6
  $region1: #{decoder_forward.1} parent=0
    #allocation2 [shape = 'u8[1024]{0}', space=vmem, size = 0x400, scoped, tag = 'input window, operand 0, single buffered']
    #allocation3 [shape = 's32[2]{0}', space=sflag, size = 0x8, scoped, tag = 'scoped memory for decoder_forward.1']
    #allocation4 [shape = 'u8[8192]{0}', space=vmem, size = 0x2000, scoped, tag = 'input window, operand 1, single buffered']
    #allocation5 [shape = 's32[1]{0}', space=sflag, size = 0x4, scoped, tag = 'scoped memory for decoder_forward.1']
    #allocation6 [shape = 'u8[2048]{0}', space=vmem, size = 0x800, scoped, tag = 'input window, operand 2, single buffered']
    #allocation7 [shape = 'u8[5767168]{0}', space=vmem, size = 0x580000, scoped, tag = 'input window, operand 3']
    #allocation8 [shape = 's32[2]{0}', space=sflag, size = 0x8, scoped, tag = 'scoped memory for decoder_forward.1']
    #allocation9 [shape = 'u8[22528]{0}', space=vmem, size = 0x5800, scoped, tag = 'input window, operand 4']
    %10 = vsyncpa [#allocation3], 0
    %11 = vsyncpa [#allocation5], 0
    %12 = vsyncpa [#allocation8], 0
    %s13 = scalar_lea.sflag [#allocation8], 1
    %14 = vsyncpa %s13, 0
    loop: start=0, step=1, limit=4
    $region2: #{decoder_forward.1} parent=1 // loop_pre_header
      _
    $region3: #{decoder_forward.1} parent=1 // loop_header
      %s16 = sphi 0, %s20
      %p17 = scmp.ge.s32.totalorder %s16, 4
      %s24 = sphi 0, %s24
      %s26 = sphi 0, %s24
      %s27 = sphi 0, %s26
      %s41 = sphi 0, %s27
      %s45 = sphi 0, %s45
      %s47 = sphi 0, %s45
      %s48 = sphi 0, %s47
      %s62 = sphi 0, %s48
      %s66 = sphi 0, %s66
      %s68 = sphi 0, %s66
      %s69 = sphi 0, %s68
      %s83 = sphi 0, %s69
      %s89 = sphi 0, %s91
      %s92 = sphi 0, %s89
      %s93 = sphi 0, %s92
      %s109 = sphi 0, %s93
      %s115 = sphi 0, %s117
      %s118 = sphi 0, %s115
      %s119 = sphi 0, %s118
      %s135 = sphi 0, %s119
      %s141 = sphi 0, %s143
      %s144 = sphi 0, %s141
      %s145 = sphi 0, %s144
      %s161 = sphi 0, %s145
    $region4: #{decoder_forward.1} parent=1 // loop_header_branch
      %19 = sbr.rel (%p17) target = $region8
    $region5: #{decoder_forward.1} parent=1 // loop_body
      %s21 = ssub.s32 %s16, 1
      %s22 = ssub.s32 %s16, 2
      %s23 = sadd.s32 %s16, 1
      %s25 = sadd.s32 %s24, 1
      %p28 = scmp.eq.s32.totalorder %s16, 1
      %p29 = scmp.ne.s32.totalorder %s24, %s26
      %p30 = scmp.eq.s32.totalorder %s16, 0
      %p31 = por %p29, %p30
      %p32 = scmp.ne.s32.totalorder %s24, %s26
      %p33 = scmp.eq.s32.totalorder %s21, 1
      %p34 = por %p32, %p33
      %p35 = scmp.ne.s32.totalorder %s26, %s27
      %p36 = scmp.eq.s32.totalorder %s21, 0
      %p37 = por %p35, %p36
      %p38 = scmp.ne.s32.totalorder %s26, %s27
      %p39 = scmp.eq.s32.totalorder %s22, 1
      %p40 = por %p38, %p39
      %p42 = scmp.ne.s32.totalorder %s27, %s41
      %p43 = scmp.eq.s32.totalorder %s22, 0
      %p44 = por %p42, %p43
      %s46 = sadd.s32 %s45, 1
      %p49 = scmp.eq.s32.totalorder %s16, 1
      %p50 = scmp.ne.s32.totalorder %s45, %s47
      %p51 = scmp.eq.s32.totalorder %s16, 0
      %p52 = por %p50, %p51
      %p53 = scmp.ne.s32.totalorder %s45, %s47
      %p54 = scmp.eq.s32.totalorder %s21, 1
      %p55 = por %p53, %p54
      %p56 = scmp.ne.s32.totalorder %s47, %s48
      %p57 = scmp.eq.s32.totalorder %s21, 0
      %p58 = por %p56, %p57
      %p59 = scmp.ne.s32.totalorder %s47, %s48
      %p60 = scmp.eq.s32.totalorder %s22, 1
      %p61 = por %p59, %p60
      %p63 = scmp.ne.s32.totalorder %s48, %s62
      %p64 = scmp.eq.s32.totalorder %s22, 0
      %p65 = por %p63, %p64
      %s67 = sadd.s32 %s66, 1
      %p70 = scmp.eq.s32.totalorder %s16, 1
      %p71 = scmp.ne.s32.totalorder %s66, %s68
      %p72 = scmp.eq.s32.totalorder %s16, 0
      %p73 = por %p71, %p72
      %p74 = scmp.ne.s32.totalorder %s66, %s68
      %p75 = scmp.eq.s32.totalorder %s21, 1
      %p76 = por %p74, %p75
      %p77 = scmp.ne.s32.totalorder %s68, %s69
      %p78 = scmp.eq.s32.totalorder %s21, 0
      %p79 = por %p77, %p78
      %p80 = scmp.ne.s32.totalorder %s68, %s69
      %p81 = scmp.eq.s32.totalorder %s22, 1
      %p82 = por %p80, %p81
      %p84 = scmp.ne.s32.totalorder %s69, %s83
      %p85 = scmp.eq.s32.totalorder %s22, 0
      %p86 = por %p84, %p85
      %s87 = ssub.s32 %s16, %s23
      %p88 = scmp.eq.s32.totalorder %s87, 0
      %s90 = sadd.s32 %s89, 1
      %s91 = scalar_select %p88, %s89, %s90
      %p94 = pneg %p88
      %p95 = scmp.eq.s32.totalorder %s16, 1
      %p96 = por %p94, %p95
      %p97 = scmp.ne.s32.totalorder %s89, %s92
      %p98 = scmp.eq.s32.totalorder %s16, 0
      %p99 = por %p97, %p98
      %p100 = scmp.ne.s32.totalorder %s89, %s92
      %p101 = scmp.eq.s32.totalorder %s21, 1
      %p102 = por %p100, %p101
      %p103 = scmp.ne.s32.totalorder %s92, %s93
      %p104 = scmp.eq.s32.totalorder %s21, 0
      %p105 = por %p103, %p104
      %p106 = scmp.ne.s32.totalorder %s92, %s93
      %p107 = scmp.eq.s32.totalorder %s22, 1
      %p108 = por %p106, %p107
      %p110 = scmp.ne.s32.totalorder %s93, %s109
      %p111 = scmp.eq.s32.totalorder %s22, 0
      %p112 = por %p110, %p111
      %s113 = ssub.s32 %s16, %s23
      %p114 = scmp.eq.s32.totalorder %s113, 0
      %s116 = sadd.s32 %s115, 1
      %s117 = scalar_select %p114, %s115, %s116
      %p120 = pneg %p114
      %p121 = scmp.eq.s32.totalorder %s16, 1
      %p122 = por %p120, %p121
      %p123 = scmp.ne.s32.totalorder %s115, %s118
      %p124 = scmp.eq.s32.totalorder %s16, 0
      %p125 = por %p123, %p124
      %p126 = scmp.ne.s32.totalorder %s115, %s118
      %p127 = scmp.eq.s32.totalorder %s21, 1
      %p128 = por %p126, %p127
      %p129 = scmp.ne.s32.totalorder %s118, %s119
      %p130 = scmp.eq.s32.totalorder %s21, 0
      %p131 = por %p129, %p130
      %p132 = scmp.ne.s32.totalorder %s118, %s119
      %p133 = scmp.eq.s32.totalorder %s22, 1
      %p134 = por %p132, %p133
      %p136 = scmp.ne.s32.totalorder %s119, %s135
      %p137 = scmp.eq.s32.totalorder %s22, 0
      %p138 = por %p136, %p137
      %s139 = ssub.s32 %s16, %s23
      %p140 = scmp.eq.s32.totalorder %s139, 0
      %s142 = sadd.s32 %s141, 1
      %s143 = scalar_select %p140, %s141, %s142
      %p146 = pneg %p140
      %p147 = scmp.eq.s32.totalorder %s16, 1
      %p148 = por %p146, %p147
      %p149 = scmp.ne.s32.totalorder %s141, %s144
      %p150 = scmp.eq.s32.totalorder %s16, 0
      %p151 = por %p149, %p150
      %p152 = scmp.ne.s32.totalorder %s141, %s144
      %p153 = scmp.eq.s32.totalorder %s21, 1
      %p154 = por %p152, %p153
      %p155 = scmp.ne.s32.totalorder %s144, %s145
      %p156 = scmp.eq.s32.totalorder %s21, 0
      %p157 = por %p155, %p156
      %p158 = scmp.ne.s32.totalorder %s144, %s145
      %p159 = scmp.eq.s32.totalorder %s22, 1
      %p160 = por %p158, %p159
      %p162 = scmp.ne.s32.totalorder %s145, %s161
      %p163 = scmp.eq.s32.totalorder %s22, 0
      %p164 = por %p162, %p163
      %p165 = scmp.le.s32.totalorder 1, %s16
      %p166 = scmp.lt.s32.totalorder %s16, 3
      %p167 = pnand %p165, %p166
      %p168 = pneg %p167
      // Predicated region
      $region9: #{decoder_forward.1} parent=5 // pred_check
        _
      $region10: #{decoder_forward.1} parent=5 // pred_check_branch
        %170 = sbr.rel (%p167) target = $region12
      $region11: #{decoder_forward.1} parent=5 // pred_region
        %s171 = ssub.s32 %s16, 1
        // Predicated region
        $region13: #{decoder_forward.1} parent=11 // pred_check
          %p172 = pneg %p37
        $region14: #{decoder_forward.1} parent=11 // pred_check_branch
          %174 = sbr.rel (%p172) target = $region16
        $region15: #{decoder_forward.1} parent=11 // pred_region
          %s176 = ssub.s32 32, 32
          %177 = vsyncadd [#allocation3], %s176
          %s179 = sshll.u32 [#allocation2], 4
          %s180 = int_to_ptr.vmem [resolvable:$true] %s179
          %182 = dma.hbm_to_vmem [thread:$0]  %s0, 32, %s180, [#allocation3]
        $region16: #{decoder_forward.1} parent=11 // pred_fallthru
          _
        // Predicated region
        $region17: #{decoder_forward.1} parent=11 // pred_check
          %p183 = pneg %p58
        $region18: #{decoder_forward.1} parent=11 // pred_check_branch
          %185 = sbr.rel (%p183) target = $region20
        $region19: #{decoder_forward.1} parent=11 // pred_region
          %s187 = ssub.s32 256, 256
          %188 = vsyncadd [#allocation5], %s187
          %s190 = sshll.u32 [#allocation4], 4
          %s191 = int_to_ptr.vmem [resolvable:$true] %s190
          %193 = dma.hbm_to_vmem [thread:$0]  %s1, 256, %s191, [#allocation5]
        $region20: #{decoder_forward.1} parent=11 // pred_fallthru
          _
        // Predicated region
        $region21: #{decoder_forward.1} parent=11 // pred_check
          %p194 = pneg %p79
        $region22: #{decoder_forward.1} parent=11 // pred_check_branch
          %196 = sbr.rel (%p194) target = $region24
        $region23: #{decoder_forward.1} parent=11 // pred_region
          %s198 = ssub.s32 64, 64
          %199 = vsyncadd [#allocation5], %s198
          %s201 = sshll.u32 [#allocation6], 4
          %s202 = int_to_ptr.vmem [resolvable:$true] %s201
          %204 = dma.hbm_to_vmem [thread:$0]  %s2, 64, %s202, [#allocation5]
        $region24: #{decoder_forward.1} parent=11 // pred_fallthru
          _
      $region12: #{decoder_forward.1} parent=5 // pred_fallthru
        _
      %p205 = scmp.lt.s32.totalorder %s16, 2
      // Predicated region
      $region25: #{decoder_forward.1} parent=5 // pred_check
        %p206 = pneg %p205
      $region26: #{decoder_forward.1} parent=5 // pred_check_branch
        %208 = sbr.rel (%p206) target = $region28
      $region27: #{decoder_forward.1} parent=5 // pred_region
        // Predicated region
        $region29: #{decoder_forward.1} parent=27 // pred_check
          %p209 = pneg %p99
        $region30: #{decoder_forward.1} parent=27 // pred_check_branch
          %211 = sbr.rel (%p209) target = $region32
        $region31: #{decoder_forward.1} parent=27 // pred_region
          %s212 = sand.u32 %s16, 1
          %s213 = scalar_lea.sflag [#allocation8], %s212
          %s214 = sand.u32 %s89, 1
          %s215 = smul.addr %s214, 5632
          %s216 = scalar_lea.vmem [#allocation7], %s215
          %s217 = smul.u32 22, %s16
          %s219 = ssub.s32 90112, 90112
          %220 = vsyncadd %s213, %s219
          %s221 = smul.addr %s217, 64
          %s222 = scalar_lea.hbm %s3, %s221
          %s223 = sshll.u32 %s216, 4
          %s224 = int_to_ptr.vmem [resolvable:$true] %s223
          %229 = dma.hbm_to_vmem [thread:$0]  %s222, 90112, %s224, %s213, 2816, 1408, 88
        $region32: #{decoder_forward.1} parent=27 // pred_fallthru
          _
        // Predicated region
        $region33: #{decoder_forward.1} parent=27 // pred_check
          %p230 = pneg %p125
        $region34: #{decoder_forward.1} parent=27 // pred_check_branch
          %232 = sbr.rel (%p230) target = $region36
        $region35: #{decoder_forward.1} parent=27 // pred_region
          %s233 = sand.u32 %s16, 1
          %s234 = scalar_lea.sflag [#allocation8], %s233
          %s235 = sand.u32 %s115, 1
          %s236 = smul.addr %s235, 22
          %s237 = scalar_lea.vmem [#allocation9], %s236
          %s238 = smul.u32 22, %s16
          %s240 = ssub.s32 352, 352
          %241 = vsyncadd %s234, %s240
          %s242 = smul.addr %s238, 16
          %s243 = scalar_lea.hbm %s4, %s242
          %s245 = sshll.u32 %s237, 4
          %s246 = int_to_ptr.vmem [resolvable:$true] %s245
          %248 = dma.hbm_to_vmem [thread:$0]  %s243, 352, %s246, %s234
        $region36: #{decoder_forward.1} parent=27 // pred_fallthru
          _
      $region28: #{decoder_forward.1} parent=5 // pred_fallthru
        _
      %p249 = scmp.le.s32.totalorder 1, %s16
      %p250 = scmp.lt.s32.totalorder %s16, 3
      %p251 = pnand %p249, %p250
      %p252 = pneg %p251
      // Predicated region
      $region37: #{decoder_forward.1} parent=5 // pred_check
        _
      $region38: #{decoder_forward.1} parent=5 // pred_check_branch
        %254 = sbr.rel (%p251) target = $region40
      $region39: #{decoder_forward.1} parent=5 // pred_region
        %s255 = ssub.s32 %s16, 1
        // Predicated region
        $region41: #{decoder_forward.1} parent=39 // pred_check
          %p256 = pneg %p37
        $region42: #{decoder_forward.1} parent=39 // pred_check_branch
          %258 = sbr.rel (%p256) target = $region44
        $region43: #{decoder_forward.1} parent=39 // pred_region
          %259 = dma.done [#allocation3], 32
        $region44: #{decoder_forward.1} parent=39 // pred_fallthru
          _
        // Predicated region
        $region45: #{decoder_forward.1} parent=39 // pred_check
          %p260 = pneg %p58
        $region46: #{decoder_forward.1} parent=39 // pred_check_branch
          %262 = sbr.rel (%p260) target = $region48
        $region47: #{decoder_forward.1} parent=39 // pred_region
          %263 = dma.done [#allocation5], 256
        $region48: #{decoder_forward.1} parent=39 // pred_fallthru
          _
        // Predicated region
        $region49: #{decoder_forward.1} parent=39 // pred_check
          %p264 = pneg %p79
        $region50: #{decoder_forward.1} parent=39 // pred_check_branch
          %266 = sbr.rel (%p264) target = $region52
        $region51: #{decoder_forward.1} parent=39 // pred_region
          %267 = dma.done [#allocation5], 64
        $region52: #{decoder_forward.1} parent=39 // pred_fallthru
          _
        %s268 = sand.u32 %s21, 1
        %s269 = scalar_lea.sflag [#allocation8], %s268
        %s270 = sand.u32 %s92, 1
        %s271 = smul.addr %s270, 5632
        %s272 = scalar_lea.vmem [#allocation7], %s271
        // Predicated region
        $region53: #{decoder_forward.1} parent=39 // pred_check
          %p273 = pneg %p105
        $region54: #{decoder_forward.1} parent=39 // pred_check_branch
          %275 = sbr.rel (%p273) target = $region56
        $region55: #{decoder_forward.1} parent=39 // pred_region
          %276 = dma.done %s269, 90112
        $region56: #{decoder_forward.1} parent=39 // pred_fallthru
          _
        %s277 = sand.u32 %s21, 1
        %s278 = scalar_lea.sflag [#allocation8], %s277
        %s279 = sand.u32 %s118, 1
        %s280 = smul.addr %s279, 22
        %s281 = scalar_lea.vmem [#allocation9], %s280
        // Predicated region
        $region57: #{decoder_forward.1} parent=39 // pred_check
          %p282 = pneg %p131
        $region58: #{decoder_forward.1} parent=39 // pred_check_branch
          %284 = sbr.rel (%p282) target = $region60
        $region59: #{decoder_forward.1} parent=39 // pred_region
          %285 = dma.done %s278, 352
        $region60: #{decoder_forward.1} parent=39 // pred_fallthru
          _
        %p286 = pneg %p37
        %p287 = pneg %p34
        %p288 = pneg %p58
        %p289 = pneg %p55
        %p290 = pneg %p79
        %p291 = pneg %p76
        %s292 = sand.u32 %s21, 1
        %s293 = scalar_lea.sflag [#allocation8], %s292
        %s294 = sand.u32 %s92, 1
        %s295 = smul.addr %s294, 5632
        %s296 = scalar_lea.vmem [#allocation7], %s295
        %p297 = pneg %p105
        %p298 = pneg %p102
        %s299 = sand.u32 %s21, 1
        %s300 = scalar_lea.sflag [#allocation8], %s299
        %s301 = sand.u32 %s118, 1
        %s302 = smul.addr %s301, 22
        %s303 = scalar_lea.vmem [#allocation9], %s302
        %p304 = pneg %p131
        %p305 = pneg %p128
        %p306 = pneg %p157
        %p307 = pneg %p154
        %s308 = smul.u32 22, %s21
        %p309 = scmp.lt.s32.totalorder %s308, 43
        %s310 = scalar_select %p309, %s308, 43
        %s311 = smul.addr %s310, 2
        %s312 = scalar_lea.vmem %s5, %s311
        %s313 = smul.u32 22, %s21
        %s314 = smul.u32 22, %s21
        %s315 = smul.u32 22, %s21
        %p316 = scmp.lt.s32.totalorder %s315, 43
        %s317 = scalar_select %p316, %s315, 43
        %s318 = smul.addr %s317, 2
        %s319 = scalar_lea.vmem %s5, %s318
        %s320 = smul.u32 22, %s21
        %v321 = vld [vmem:[#allocation2] sm:$0x3]
        %v322 = vld [vmem:[#allocation4] sm:$0x77]
        %v323 = vld [vmem:[#allocation4 + $0x8] sm:$0x77]
        %v324 = vld [vmem:[#allocation6] sm:$0xf]
        %v326 = vlaneseq
        %v327 = vshrl.u32 %v326, 7
        %v328 = vsub.s32 0, %v327
        %v329 = vrot.slane %v324, %v328
        %v330 = vlaneseq
        %v331 = vshrl.u32 %v330, 7
        %v332 = vsub.s32 1, %v331
        %v333 = vrot.slane %v324, %v332
        %v334 = vlaneseq
        %v335 = vshrl.u32 %v334, 7
        %v336 = vsub.s32 2, %v335
        %v337 = vrot.slane %v324, %v336
        %v338 = vlaneseq
        %v339 = vshrl.u32 %v338, 7
        %v340 = vsub.s32 3, %v339
        %v341 = vrot.slane %v324, %v340
        %v348 = vcombine.high %v322, %v322
        %v349 = vcombine.high %v323, %v323
        %vm350 = vcmask 23552
        %v352 = vsel %vm350, %v321, 0
        %vm354 = vcmask 1042432
        %v355 = vsel %vm354, %v322, 0
        %v357 = vsel %vm354, %v348, 0
        %v359 = vsel %vm354, %v323, 0
        %v361 = vsel %vm354, %v349, 0
        %363 = vmatprep.subr.mxu0 0.0
        %364 = vmatpush1.msra.mxu0 0.0
        %365 = vmatprep.subr.mxu0 0.0
        %366 = vmatpush1.msra.mxu0 0.0
        %367 = vmatprep.subr.mxu0 0.0
        %368 = vmatpush1.msra.mxu0 0.0
        %369 = vmatprep.subr.mxu0 0.0
        %370 = vmatpush1.msra.mxu0 0.0
        %371 = vmatprep.subr.mxu0 0.0
        %372 = vmatpush1.msra.mxu0 0.0
        %373 = vmatprep.subr.mxu0 0.0
        %374 = vmatpush1.msra.mxu0 0.0
        %375 = vmatprep.subr.mxu0 0.0
        %376 = vmatpush1.msra.mxu0 0.0
        %377 = vmatprep.subr.mxu0 0.0
        %378 = vmatpush1.msra.mxu0 0.0
        %379 = vmatprep.subr.mxu0 0.0
        %380 = vmatpush1.msra.mxu0 0.0
        %381 = vmatprep.subr.mxu0 0.0
        %382 = vmatpush1.msra.mxu0 0.0
        %383 = vmatprep.subr.mxu0 0.0
        %384 = vmatpush1.msra.mxu0 0.0
        %385 = vmatprep.subr.mxu0 0.0
        %386 = vmatpush1.msra.mxu0 0.0
        %387 = vmatprep.subr.mxu0 0.0
        %388 = vmatpush1.msra.mxu0 0.0
        %389 = vmatprep.subr.mxu0 0.0
        %390 = vmatpush1.msra.mxu0 0.0
        %391 = vmatprep.subr.mxu0 0.0
        %392 = vmatpush1.msra.mxu0 0.0
        %393 = vmatprep.subr.mxu0 %v357
        %394 = vmatpush1.msra.mxu0 %v355
        %395 = vmatprep.subr.mxu0 0.0
        %396 = vmatpush2.msra.mxu0 0.0
        %397 = vmatprep.subr.mxu0 0.0
        %398 = vmatpush2.msra.mxu0 0.0
        %399 = vmatprep.subr.mxu0 0.0
        %400 = vmatpush2.msra.mxu0 0.0
        %401 = vmatprep.subr.mxu0 0.0
        %402 = vmatpush2.msra.mxu0 0.0
        %403 = vmatprep.subr.mxu0 0.0
        %404 = vmatpush2.msra.mxu0 0.0
        %405 = vmatprep.subr.mxu0 0.0
        %406 = vmatpush2.msra.mxu0 0.0
        %407 = vmatprep.subr.mxu0 0.0
        %408 = vmatpush2.msra.mxu0 0.0
        %409 = vmatprep.subr.mxu0 0.0
        %410 = vmatpush2.msra.mxu0 0.0
        %411 = vmatprep.subr.mxu0 0.0
        %412 = vmatpush2.msra.mxu0 0.0
        %413 = vmatprep.subr.mxu0 0.0
        %414 = vmatpush2.msra.mxu0 0.0
        %415 = vmatprep.subr.mxu0 0.0
        %416 = vmatpush2.msra.mxu0 0.0
        %417 = vmatprep.subr.mxu0 0.0
        %418 = vmatpush2.msra.mxu0 0.0
        %419 = vmatprep.subr.mxu0 0.0
        %420 = vmatpush2.msra.mxu0 0.0
        %421 = vmatprep.subr.mxu0 0.0
        %422 = vmatpush2.msra.mxu0 0.0
        %423 = vmatprep.subr.mxu0 0.0
        %424 = vmatpush2.msra.mxu0 0.0
        %425 = vmatprep.subr.mxu0 0.0
        %426 = vmatpush2.msra.mxu0 0.0
        %427 = vmatprep.mubr.f32.mxu0 0.0
        %428 = vmatmul.mubr.f32.gmra.mxu0 %v352
        %v429 = vpop.f32.mrf.mxu0
        %v430 = vadd.f32 %v329, %v429
        %v431 = vpop.f32.mrf.mxu0
        %v432 = vadd.f32 %v333, %v431
        %433 = vdwg.mxu0
        %434 = vmatprep.subr.mxu0 0.0
        %435 = vmatpush1.msra.mxu0 0.0
        %436 = vmatprep.subr.mxu0 0.0
        %437 = vmatpush1.msra.mxu0 0.0
        %438 = vmatprep.subr.mxu0 0.0
        %439 = vmatpush1.msra.mxu0 0.0
        %440 = vmatprep.subr.mxu0 0.0
        %441 = vmatpush1.msra.mxu0 0.0
        %442 = vmatprep.subr.mxu0 0.0
        %443 = vmatpush1.msra.mxu0 0.0
        %444 = vmatprep.subr.mxu0 0.0
        %445 = vmatpush1.msra.mxu0 0.0
        %446 = vmatprep.subr.mxu0 0.0
        %447 = vmatpush1.msra.mxu0 0.0
        %448 = vmatprep.subr.mxu0 0.0
        %449 = vmatpush1.msra.mxu0 0.0
        %450 = vmatprep.subr.mxu0 0.0
        %451 = vmatpush1.msra.mxu0 0.0
        %452 = vmatprep.subr.mxu0 0.0
        %453 = vmatpush1.msra.mxu0 0.0
        %454 = vmatprep.subr.mxu0 0.0
        %455 = vmatpush1.msra.mxu0 0.0
        %456 = vmatprep.subr.mxu0 0.0
        %457 = vmatpush1.msra.mxu0 0.0
        %458 = vmatprep.subr.mxu0 0.0
        %459 = vmatpush1.msra.mxu0 0.0
        %460 = vmatprep.subr.mxu0 0.0
        %461 = vmatpush1.msra.mxu0 0.0
        %462 = vmatprep.subr.mxu0 0.0
        %463 = vmatpush1.msra.mxu0 0.0
        %464 = vmatprep.subr.mxu0 %v361
        %465 = vmatpush1.msra.mxu0 %v359
        %466 = vmatprep.subr.mxu0 0.0
        %467 = vmatpush2.msra.mxu0 0.0
        %468 = vmatprep.subr.mxu0 0.0
        %469 = vmatpush2.msra.mxu0 0.0
        %470 = vmatprep.subr.mxu0 0.0
        %471 = vmatpush2.msra.mxu0 0.0
        %472 = vmatprep.subr.mxu0 0.0
        %473 = vmatpush2.msra.mxu0 0.0
        %474 = vmatprep.subr.mxu0 0.0
        %475 = vmatpush2.msra.mxu0 0.0
        %476 = vmatprep.subr.mxu0 0.0
        %477 = vmatpush2.msra.mxu0 0.0
        %478 = vmatprep.subr.mxu0 0.0
        %479 = vmatpush2.msra.mxu0 0.0
        %480 = vmatprep.subr.mxu0 0.0
        %481 = vmatpush2.msra.mxu0 0.0
        %482 = vmatprep.subr.mxu0 0.0
        %483 = vmatpush2.msra.mxu0 0.0
        %484 = vmatprep.subr.mxu0 0.0
        %485 = vmatpush2.msra.mxu0 0.0
        %486 = vmatprep.subr.mxu0 0.0
        %487 = vmatpush2.msra.mxu0 0.0
        %488 = vmatprep.subr.mxu0 0.0
        %489 = vmatpush2.msra.mxu0 0.0
        %490 = vmatprep.subr.mxu0 0.0
        %491 = vmatpush2.msra.mxu0 0.0
        %492 = vmatprep.subr.mxu0 0.0
        %493 = vmatpush2.msra.mxu0 0.0
        %494 = vmatprep.subr.mxu0 0.0
        %495 = vmatpush2.msra.mxu0 0.0
        %496 = vmatprep.subr.mxu0 0.0
        %497 = vmatpush2.msra.mxu0 0.0
        %498 = vmatprep.mubr.f32.mxu0 0.0
        %499 = vmatmul.mubr.f32.gmra.mxu0 %v352
        %v500 = vpop.f32.mrf.mxu0
        %v501 = vadd.f32 %v337, %v500
        %v502 = vpop.f32.mrf.mxu0
        %v503 = vadd.f32 %v341, %v502
        %504 = vdwg.mxu0
        %v505 = vmax.f32 %v430, 0.0
        %v506 = vmax.f32 %v432, 0.0
        %v507 = vmax.f32 %v501, 0.0
        %v508 = vmax.f32 %v503, 0.0
        %v509 = vpack.c.bf16 %v505, %v505
        %v510 = vpack.c.bf16 %v506, %v506
        %v511 = vpack.c.bf16 %v507, %v507
        %v512 = vpack.c.bf16 %v508, %v508
        %v513 = vld [vmem:[%s272] sm:$0xff]
        %v514 = vld [vmem:[%s272 + $0x8] sm:$0xff]
        %v515 = vld [vmem:[%s272 + $0x10] sm:$0xff]
        %v516 = vld [vmem:[%s272 + $0x18] sm:$0xff]
        %v517 = vld [vmem:[%s272 + $0x20] sm:$0xff]
        %v518 = vld [vmem:[%s272 + $0x28] sm:$0xff]
        %v519 = vld [vmem:[%s272 + $0x30] sm:$0xff]
        %v520 = vld [vmem:[%s272 + $0x38] sm:$0xff]
        %v521 = vld [vmem:[%s272 + $0x40] sm:$0xff]
        %v522 = vld [vmem:[%s272 + $0x48] sm:$0xff]
        %v523 = vld [vmem:[%s272 + $0x50] sm:$0xff]
        %v524 = vld [vmem:[%s272 + $0x58] sm:$0xff]
        %v525 = vld [vmem:[%s272 + $0x60] sm:$0xff]
        %v526 = vld [vmem:[%s272 + $0x68] sm:$0xff]
        %v527 = vld [vmem:[%s272 + $0x70] sm:$0xff]
        %v528 = vld [vmem:[%s272 + $0x78] sm:$0xff]
        %v529 = vld [vmem:[%s272 + $0x80] sm:$0xff]
        %v530 = vld [vmem:[%s272 + $0x88] sm:$0xff]
        %v531 = vld [vmem:[%s272 + $0x90] sm:$0xff]
        %v532 = vld [vmem:[%s272 + $0x98] sm:$0xff]
        %v533 = vld [vmem:[%s272 + $0xa0] sm:$0xff]
        %v534 = vld [vmem:[%s272 + $0xa8] sm:$0xff]
        %v535 = vld [vmem:[%s272 + $0xb0] sm:$0xff]
        %v536 = vld [vmem:[%s272 + $0xb8] sm:$0xff]
        %v537 = vld [vmem:[%s272 + $0xc0] sm:$0xff]
        %v538 = vld [vmem:[%s272 + $0xc8] sm:$0xff]
        %v539 = vld [vmem:[%s272 + $0xd0] sm:$0xff]
        %v540 = vld [vmem:[%s272 + $0xd8] sm:$0xff]
        %v541 = vld [vmem:[%s272 + $0xe0] sm:$0xff]
        %v542 = vld [vmem:[%s272 + $0xe8] sm:$0xff]
        %v543 = vld [vmem:[%s272 + $0xf0] sm:$0xff]
        %v544 = vld [vmem:[%s272 + $0xf8] sm:$0xff]
        %v545 = vld [vmem:[%s272 + $0x100] sm:$0xff]
        %v546 = vld [vmem:[%s272 + $0x108] sm:$0xff]
        %v547 = vld [vmem:[%s272 + $0x110] sm:$0xff]
        %v548 = vld [vmem:[%s272 + $0x118] sm:$0xff]
        %v549 = vld [vmem:[%s272 + $0x120] sm:$0xff]
        %v550 = vld [vmem:[%s272 + $0x128] sm:$0xff]
        %v551 = vld [vmem:[%s272 + $0x130] sm:$0xff]
        %v552 = vld [vmem:[%s272 + $0x138] sm:$0xff]
        %v553 = vld [vmem:[%s272 + $0x140] sm:$0xff]
        %v554 = vld [vmem:[%s272 + $0x148] sm:$0xff]
        %v555 = vld [vmem:[%s272 + $0x150] sm:$0xff]
        %v556 = vld [vmem:[%s272 + $0x158] sm:$0xff]
        %v557 = vld [vmem:[%s272 + $0x160] sm:$0xff]
        %v558 = vld [vmem:[%s272 + $0x168] sm:$0xff]
        %v559 = vld [vmem:[%s272 + $0x170] sm:$0xff]
        %v560 = vld [vmem:[%s272 + $0x178] sm:$0xff]
        %v561 = vld [vmem:[%s272 + $0x180] sm:$0xff]
        %v562 = vld [vmem:[%s272 + $0x188] sm:$0xff]
        %v563 = vld [vmem:[%s272 + $0x190] sm:$0xff]
        %v564 = vld [vmem:[%s272 + $0x198] sm:$0xff]
        %v565 = vld [vmem:[%s272 + $0x1a0] sm:$0xff]
        %v566 = vld [vmem:[%s272 + $0x1a8] sm:$0xff]
        %v567 = vld [vmem:[%s272 + $0x1b0] sm:$0xff]
        %v568 = vld [vmem:[%s272 + $0x1b8] sm:$0xff]
        %v569 = vld [vmem:[%s272 + $0x1c0] sm:$0xff]
        %v570 = vld [vmem:[%s272 + $0x1c8] sm:$0xff]
        %v571 = vld [vmem:[%s272 + $0x1d0] sm:$0xff]
        %v572 = vld [vmem:[%s272 + $0x1d8] sm:$0xff]
        %v573 = vld [vmem:[%s272 + $0x1e0] sm:$0xff]
        %v574 = vld [vmem:[%s272 + $0x1e8] sm:$0xff]
        %v575 = vld [vmem:[%s272 + $0x1f0] sm:$0xff]
        %v576 = vld [vmem:[%s272 + $0x1f8] sm:$0xff]
        %v577 = vld [vmem:[%s272 + $0x200] sm:$0xff]
        %v578 = vld [vmem:[%s272 + $0x208] sm:$0xff]
        %v579 = vld [vmem:[%s272 + $0x210] sm:$0xff]
        %v580 = vld [vmem:[%s272 + $0x218] sm:$0xff]
        %v581 = vld [vmem:[%s272 + $0x220] sm:$0xff]
        %v582 = vld [vmem:[%s272 + $0x228] sm:$0xff]
        %v583 = vld [vmem:[%s272 + $0x230] sm:$0xff]
        %v584 = vld [vmem:[%s272 + $0x238] sm:$0xff]
        %v585 = vld [vmem:[%s272 + $0x240] sm:$0xff]
        %v586 = vld [vmem:[%s272 + $0x248] sm:$0xff]
        %v587 = vld [vmem:[%s272 + $0x250] sm:$0xff]
        %v588 = vld [vmem:[%s272 + $0x258] sm:$0xff]
        %v589 = vld [vmem:[%s272 + $0x260] sm:$0xff]
        %v590 = vld [vmem:[%s272 + $0x268] sm:$0xff]
        %v591 = vld [vmem:[%s272 + $0x270] sm:$0xff]
        %v592 = vld [vmem:[%s272 + $0x278] sm:$0xff]
        %v593 = vld [vmem:[%s272 + $0x280] sm:$0xff]
        %v594 = vld [vmem:[%s272 + $0x288] sm:$0xff]
        %v595 = vld [vmem:[%s272 + $0x290] sm:$0xff]
        %v596 = vld [vmem:[%s272 + $0x298] sm:$0xff]
        %v597 = vld [vmem:[%s272 + $0x2a0] sm:$0xff]
        %v598 = vld [vmem:[%s272 + $0x2a8] sm:$0xff]
        %v599 = vld [vmem:[%s272 + $0x2b0] sm:$0xff]
        %v600 = vld [vmem:[%s272 + $0x2b8] sm:$0xff]
        %v601 = vld [vmem:[%s272 + $0x2c0] sm:$0xff]
        %v602 = vld [vmem:[%s272 + $0x2c8] sm:$0xff]
        %v603 = vld [vmem:[%s272 + $0x2d0] sm:$0xff]
        %v604 = vld [vmem:[%s272 + $0x2d8] sm:$0xff]
        %v605 = vld [vmem:[%s272 + $0x2e0] sm:$0xff]
        %v606 = vld [vmem:[%s272 + $0x2e8] sm:$0xff]
        %v607 = vld [vmem:[%s272 + $0x2f0] sm:$0xff]
        %v608 = vld [vmem:[%s272 + $0x2f8] sm:$0xff]
        %v609 = vld [vmem:[%s272 + $0x300] sm:$0xff]
        %v610 = vld [vmem:[%s272 + $0x308] sm:$0xff]
        %v611 = vld [vmem:[%s272 + $0x310] sm:$0xff]
        %v612 = vld [vmem:[%s272 + $0x318] sm:$0xff]
        %v613 = vld [vmem:[%s272 + $0x320] sm:$0xff]
        %v614 = vld [vmem:[%s272 + $0x328] sm:$0xff]
        %v615 = vld [vmem:[%s272 + $0x330] sm:$0xff]
        %v616 = vld [vmem:[%s272 + $0x338] sm:$0xff]
        %v617 = vld [vmem:[%s272 + $0x340] sm:$0xff]
        %v618 = vld [vmem:[%s272 + $0x348] sm:$0xff]
        %v619 = vld [vmem:[%s272 + $0x350] sm:$0xff]
        %v620 = vld [vmem:[%s272 + $0x358] sm:$0xff]
        %v621 = vld [vmem:[%s272 + $0x360] sm:$0xff]
        %v622 = vld [vmem:[%s272 + $0x368] sm:$0xff]
        %v623 = vld [vmem:[%s272 + $0x370] sm:$0xff]
        %v624 = vld [vmem:[%s272 + $0x378] sm:$0xff]
        %v625 = vld [vmem:[%s272 + $0x380] sm:$0xff]
        %v626 = vld [vmem:[%s272 + $0x388] sm:$0xff]
        %v627 = vld [vmem:[%s272 + $0x390] sm:$0xff]
        %v628 = vld [vmem:[%s272 + $0x398] sm:$0xff]
        %v629 = vld [vmem:[%s272 + $0x3a0] sm:$0xff]
        %v630 = vld [vmem:[%s272 + $0x3a8] sm:$0xff]
        %v631 = vld [vmem:[%s272 + $0x3b0] sm:$0xff]
        %v632 = vld [vmem:[%s272 + $0x3b8] sm:$0xff]
        %v633 = vld [vmem:[%s272 + $0x3c0] sm:$0xff]
        %v634 = vld [vmem:[%s272 + $0x3c8] sm:$0xff]
        %v635 = vld [vmem:[%s272 + $0x3d0] sm:$0xff]
        %v636 = vld [vmem:[%s272 + $0x3d8] sm:$0xff]
        %v637 = vld [vmem:[%s272 + $0x3e0] sm:$0xff]
        %v638 = vld [vmem:[%s272 + $0x3e8] sm:$0xff]
        %v639 = vld [vmem:[%s272 + $0x3f0] sm:$0xff]
        %v640 = vld [vmem:[%s272 + $0x3f8] sm:$0xff]
        %v641 = vld [vmem:[%s272 + $0x400] sm:$0xff]
        %v642 = vld [vmem:[%s272 + $0x408] sm:$0xff]
        %v643 = vld [vmem:[%s272 + $0x410] sm:$0xff]
        %v644 = vld [vmem:[%s272 + $0x418] sm:$0xff]
        %v645 = vld [vmem:[%s272 + $0x420] sm:$0xff]
        %v646 = vld [vmem:[%s272 + $0x428] sm:$0xff]
        %v647 = vld [vmem:[%s272 + $0x430] sm:$0xff]
        %v648 = vld [vmem:[%s272 + $0x438] sm:$0xff]
        %v649 = vld [vmem:[%s272 + $0x440] sm:$0xff]
        %v650 = vld [vmem:[%s272 + $0x448] sm:$0xff]
        %v651 = vld [vmem:[%s272 + $0x450] sm:$0xff]
        %v652 = vld [vmem:[%s272 + $0x458] sm:$0xff]
        %v653 = vld [vmem:[%s272 + $0x460] sm:$0xff]
        %v654 = vld [vmem:[%s272 + $0x468] sm:$0xff]
        %v655 = vld [vmem:[%s272 + $0x470] sm:$0xff]
        %v656 = vld [vmem:[%s272 + $0x478] sm:$0xff]
        %v657 = vld [vmem:[%s272 + $0x480] sm:$0xff]
        %v658 = vld [vmem:[%s272 + $0x488] sm:$0xff]
        %v659 = vld [vmem:[%s272 + $0x490] sm:$0xff]
        %v660 = vld [vmem:[%s272 + $0x498] sm:$0xff]
        %v661 = vld [vmem:[%s272 + $0x4a0] sm:$0xff]
        %v662 = vld [vmem:[%s272 + $0x4a8] sm:$0xff]
        %v663 = vld [vmem:[%s272 + $0x4b0] sm:$0xff]
        %v664 = vld [vmem:[%s272 + $0x4b8] sm:$0xff]
        %v665 = vld [vmem:[%s272 + $0x4c0] sm:$0xff]
        %v666 = vld [vmem:[%s272 + $0x4c8] sm:$0xff]
        %v667 = vld [vmem:[%s272 + $0x4d0] sm:$0xff]
        %v668 = vld [vmem:[%s272 + $0x4d8] sm:$0xff]
        %v669 = vld [vmem:[%s272 + $0x4e0] sm:$0xff]
        %v670 = vld [vmem:[%s272 + $0x4e8] sm:$0xff]
        %v671 = vld [vmem:[%s272 + $0x4f0] sm:$0xff]
        %v672 = vld [vmem:[%s272 + $0x4f8] sm:$0xff]
        %v673 = vld [vmem:[%s272 + $0x500] sm:$0xff]
        %v674 = vld [vmem:[%s272 + $0x508] sm:$0xff]
        %v675 = vld [vmem:[%s272 + $0x510] sm:$0xff]
        %v676 = vld [vmem:[%s272 + $0x518] sm:$0xff]
        %v677 = vld [vmem:[%s272 + $0x520] sm:$0xff]
        %v678 = vld [vmem:[%s272 + $0x528] sm:$0xff]
        %v679 = vld [vmem:[%s272 + $0x530] sm:$0xff]
        %v680 = vld [vmem:[%s272 + $0x538] sm:$0xff]
        %v681 = vld [vmem:[%s272 + $0x540] sm:$0xff]
        %v682 = vld [vmem:[%s272 + $0x548] sm:$0xff]
        %v683 = vld [vmem:[%s272 + $0x550] sm:$0xff]
        %v684 = vld [vmem:[%s272 + $0x558] sm:$0xff]
        %v685 = vld [vmem:[%s272 + $0x560] sm:$0xff]
        %v686 = vld [vmem:[%s272 + $0x568] sm:$0xff]
        %v687 = vld [vmem:[%s272 + $0x570] sm:$0xff]
        %v688 = vld [vmem:[%s272 + $0x578] sm:$0xff]
        %v689 = vld [vmem:[%s272 + $0x580] sm:$0xff]
        %v690 = vld [vmem:[%s272 + $0x588] sm:$0xff]
        %v691 = vld [vmem:[%s272 + $0x590] sm:$0xff]
        %v692 = vld [vmem:[%s272 + $0x598] sm:$0xff]
        %v693 = vld [vmem:[%s272 + $0x5a0] sm:$0xff]
        %v694 = vld [vmem:[%s272 + $0x5a8] sm:$0xff]
        %v695 = vld [vmem:[%s272 + $0x5b0] sm:$0xff]
        %v696 = vld [vmem:[%s272 + $0x5b8] sm:$0xff]
        %v697 = vld [vmem:[%s272 + $0x5c0] sm:$0xff]
        %v698 = vld [vmem:[%s272 + $0x5c8] sm:$0xff]
        %v699 = vld [vmem:[%s272 + $0x5d0] sm:$0xff]
        %v700 = vld [vmem:[%s272 + $0x5d8] sm:$0xff]
        %v701 = vld [vmem:[%s272 + $0x5e0] sm:$0xff]
        %v702 = vld [vmem:[%s272 + $0x5e8] sm:$0xff]
        %v703 = vld [vmem:[%s272 + $0x5f0] sm:$0xff]
        %v704 = vld [vmem:[%s272 + $0x5f8] sm:$0xff]
        %v705 = vld [vmem:[%s272 + $0x600] sm:$0xff]
        %v706 = vld [vmem:[%s272 + $0x608] sm:$0xff]
        %v707 = vld [vmem:[%s272 + $0x610] sm:$0xff]
        %v708 = vld [vmem:[%s272 + $0x618] sm:$0xff]
        %v709 = vld [vmem:[%s272 + $0x620] sm:$0xff]
        %v710 = vld [vmem:[%s272 + $0x628] sm:$0xff]
        %v711 = vld [vmem:[%s272 + $0x630] sm:$0xff]
        %v712 = vld [vmem:[%s272 + $0x638] sm:$0xff]
        %v713 = vld [vmem:[%s272 + $0x640] sm:$0xff]
        %v714 = vld [vmem:[%s272 + $0x648] sm:$0xff]
        %v715 = vld [vmem:[%s272 + $0x650] sm:$0xff]
        %v716 = vld [vmem:[%s272 + $0x658] sm:$0xff]
        %v717 = vld [vmem:[%s272 + $0x660] sm:$0xff]
        %v718 = vld [vmem:[%s272 + $0x668] sm:$0xff]
        %v719 = vld [vmem:[%s272 + $0x670] sm:$0xff]
        %v720 = vld [vmem:[%s272 + $0x678] sm:$0xff]
        %v721 = vld [vmem:[%s272 + $0x680] sm:$0xff]
        %v722 = vld [vmem:[%s272 + $0x688] sm:$0xff]
        %v723 = vld [vmem:[%s272 + $0x690] sm:$0xff]
        %v724 = vld [vmem:[%s272 + $0x698] sm:$0xff]
        %v725 = vld [vmem:[%s272 + $0x6a0] sm:$0xff]
        %v726 = vld [vmem:[%s272 + $0x6a8] sm:$0xff]
        %v727 = vld [vmem:[%s272 + $0x6b0] sm:$0xff]
        %v728 = vld [vmem:[%s272 + $0x6b8] sm:$0xff]
        %v729 = vld [vmem:[%s272 + $0x6c0] sm:$0xff]
        %v730 = vld [vmem:[%s272 + $0x6c8] sm:$0xff]
        %v731 = vld [vmem:[%s272 + $0x6d0] sm:$0xff]
        %v732 = vld [vmem:[%s272 + $0x6d8] sm:$0xff]
        %v733 = vld [vmem:[%s272 + $0x6e0] sm:$0xff]
        %v734 = vld [vmem:[%s272 + $0x6e8] sm:$0xff]
        %v735 = vld [vmem:[%s272 + $0x6f0] sm:$0xff]
        %v736 = vld [vmem:[%s272 + $0x6f8] sm:$0xff]
        %v737 = vld [vmem:[%s272 + $0x700] sm:$0xff]
        %v738 = vld [vmem:[%s272 + $0x708] sm:$0xff]
        %v739 = vld [vmem:[%s272 + $0x710] sm:$0xff]
        %v740 = vld [vmem:[%s272 + $0x718] sm:$0xff]
        %v741 = vld [vmem:[%s272 + $0x720] sm:$0xff]
        %v742 = vld [vmem:[%s272 + $0x728] sm:$0xff]
        %v743 = vld [vmem:[%s272 + $0x730] sm:$0xff]
        %v744 = vld [vmem:[%s272 + $0x738] sm:$0xff]
        %v745 = vld [vmem:[%s272 + $0x740] sm:$0xff]
        %v746 = vld [vmem:[%s272 + $0x748] sm:$0xff]
        %v747 = vld [vmem:[%s272 + $0x750] sm:$0xff]
        %v748 = vld [vmem:[%s272 + $0x758] sm:$0xff]
        %v749 = vld [vmem:[%s272 + $0x760] sm:$0xff]
        %v750 = vld [vmem:[%s272 + $0x768] sm:$0xff]
        %v751 = vld [vmem:[%s272 + $0x770] sm:$0xff]
        %v752 = vld [vmem:[%s272 + $0x778] sm:$0xff]
        %v753 = vld [vmem:[%s272 + $0x780] sm:$0xff]
        %v754 = vld [vmem:[%s272 + $0x788] sm:$0xff]
        %v755 = vld [vmem:[%s272 + $0x790] sm:$0xff]
        %v756 = vld [vmem:[%s272 + $0x798] sm:$0xff]
        %v757 = vld [vmem:[%s272 + $0x7a0] sm:$0xff]
        %v758 = vld [vmem:[%s272 + $0x7a8] sm:$0xff]
        %v759 = vld [vmem:[%s272 + $0x7b0] sm:$0xff]
        %v760 = vld [vmem:[%s272 + $0x7b8] sm:$0xff]
        %v761 = vld [vmem:[%s272 + $0x7c0] sm:$0xff]
        %v762 = vld [vmem:[%s272 + $0x7c8] sm:$0xff]
        %v763 = vld [vmem:[%s272 + $0x7d0] sm:$0xff]
        %v764 = vld [vmem:[%s272 + $0x7d8] sm:$0xff]
        %v765 = vld [vmem:[%s272 + $0x7e0] sm:$0xff]
        %v766 = vld [vmem:[%s272 + $0x7e8] sm:$0xff]
        %v767 = vld [vmem:[%s272 + $0x7f0] sm:$0xff]
        %v768 = vld [vmem:[%s272 + $0x7f8] sm:$0xff]
        %v769 = vld [vmem:[%s272 + $0x800] sm:$0xff]
        %v770 = vld [vmem:[%s272 + $0x808] sm:$0xff]
        %v771 = vld [vmem:[%s272 + $0x810] sm:$0xff]
        %v772 = vld [vmem:[%s272 + $0x818] sm:$0xff]
        %v773 = vld [vmem:[%s272 + $0x820] sm:$0xff]
        %v774 = vld [vmem:[%s272 + $0x828] sm:$0xff]
        %v775 = vld [vmem:[%s272 + $0x830] sm:$0xff]
        %v776 = vld [vmem:[%s272 + $0x838] sm:$0xff]
        %v777 = vld [vmem:[%s272 + $0x840] sm:$0xff]
        %v778 = vld [vmem:[%s272 + $0x848] sm:$0xff]
        %v779 = vld [vmem:[%s272 + $0x850] sm:$0xff]
        %v780 = vld [vmem:[%s272 + $0x858] sm:$0xff]
        %v781 = vld [vmem:[%s272 + $0x860] sm:$0xff]
        %v782 = vld [vmem:[%s272 + $0x868] sm:$0xff]
        %v783 = vld [vmem:[%s272 + $0x870] sm:$0xff]
        %v784 = vld [vmem:[%s272 + $0x878] sm:$0xff]
        %v785 = vld [vmem:[%s272 + $0x880] sm:$0xff]
        %v786 = vld [vmem:[%s272 + $0x888] sm:$0xff]
        %v787 = vld [vmem:[%s272 + $0x890] sm:$0xff]
        %v788 = vld [vmem:[%s272 + $0x898] sm:$0xff]
        %v789 = vld [vmem:[%s272 + $0x8a0] sm:$0xff]
        %v790 = vld [vmem:[%s272 + $0x8a8] sm:$0xff]
        %v791 = vld [vmem:[%s272 + $0x8b0] sm:$0xff]
        %v792 = vld [vmem:[%s272 + $0x8b8] sm:$0xff]
        %v793 = vld [vmem:[%s272 + $0x8c0] sm:$0xff]
        %v794 = vld [vmem:[%s272 + $0x8c8] sm:$0xff]
        %v795 = vld [vmem:[%s272 + $0x8d0] sm:$0xff]
        %v796 = vld [vmem:[%s272 + $0x8d8] sm:$0xff]
        %v797 = vld [vmem:[%s272 + $0x8e0] sm:$0xff]
        %v798 = vld [vmem:[%s272 + $0x8e8] sm:$0xff]
        %v799 = vld [vmem:[%s272 + $0x8f0] sm:$0xff]
        %v800 = vld [vmem:[%s272 + $0x8f8] sm:$0xff]
        %v801 = vld [vmem:[%s272 + $0x900] sm:$0xff]
        %v802 = vld [vmem:[%s272 + $0x908] sm:$0xff]
        %v803 = vld [vmem:[%s272 + $0x910] sm:$0xff]
        %v804 = vld [vmem:[%s272 + $0x918] sm:$0xff]
        %v805 = vld [vmem:[%s272 + $0x920] sm:$0xff]
        %v806 = vld [vmem:[%s272 + $0x928] sm:$0xff]
        %v807 = vld [vmem:[%s272 + $0x930] sm:$0xff]
        %v808 = vld [vmem:[%s272 + $0x938] sm:$0xff]
        %v809 = vld [vmem:[%s272 + $0x940] sm:$0xff]
        %v810 = vld [vmem:[%s272 + $0x948] sm:$0xff]
        %v811 = vld [vmem:[%s272 + $0x950] sm:$0xff]
        %v812 = vld [vmem:[%s272 + $0x958] sm:$0xff]
        %v813 = vld [vmem:[%s272 + $0x960] sm:$0xff]
        %v814 = vld [vmem:[%s272 + $0x968] sm:$0xff]
        %v815 = vld [vmem:[%s272 + $0x970] sm:$0xff]
        %v816 = vld [vmem:[%s272 + $0x978] sm:$0xff]
        %v817 = vld [vmem:[%s272 + $0x980] sm:$0xff]
        %v818 = vld [vmem:[%s272 + $0x988] sm:$0xff]
        %v819 = vld [vmem:[%s272 + $0x990] sm:$0xff]
        %v820 = vld [vmem:[%s272 + $0x998] sm:$0xff]
        %v821 = vld [vmem:[%s272 + $0x9a0] sm:$0xff]
        %v822 = vld [vmem:[%s272 + $0x9a8] sm:$0xff]
        %v823 = vld [vmem:[%s272 + $0x9b0] sm:$0xff]
        %v824 = vld [vmem:[%s272 + $0x9b8] sm:$0xff]
        %v825 = vld [vmem:[%s272 + $0x9c0] sm:$0xff]
        %v826 = vld [vmem:[%s272 + $0x9c8] sm:$0xff]
        %v827 = vld [vmem:[%s272 + $0x9d0] sm:$0xff]
        %v828 = vld [vmem:[%s272 + $0x9d8] sm:$0xff]
        %v829 = vld [vmem:[%s272 + $0x9e0] sm:$0xff]
        %v830 = vld [vmem:[%s272 + $0x9e8] sm:$0xff]
        %v831 = vld [vmem:[%s272 + $0x9f0] sm:$0xff]
        %v832 = vld [vmem:[%s272 + $0x9f8] sm:$0xff]
        %v833 = vld [vmem:[%s272 + $0xa00] sm:$0xff]
        %v834 = vld [vmem:[%s272 + $0xa08] sm:$0xff]
        %v835 = vld [vmem:[%s272 + $0xa10] sm:$0xff]
        %v836 = vld [vmem:[%s272 + $0xa18] sm:$0xff]
        %v837 = vld [vmem:[%s272 + $0xa20] sm:$0xff]
        %v838 = vld [vmem:[%s272 + $0xa28] sm:$0xff]
        %v839 = vld [vmem:[%s272 + $0xa30] sm:$0xff]
        %v840 = vld [vmem:[%s272 + $0xa38] sm:$0xff]
        %v841 = vld [vmem:[%s272 + $0xa40] sm:$0xff]
        %v842 = vld [vmem:[%s272 + $0xa48] sm:$0xff]
        %v843 = vld [vmem:[%s272 + $0xa50] sm:$0xff]
        %v844 = vld [vmem:[%s272 + $0xa58] sm:$0xff]
        %v845 = vld [vmem:[%s272 + $0xa60] sm:$0xff]
        %v846 = vld [vmem:[%s272 + $0xa68] sm:$0xff]
        %v847 = vld [vmem:[%s272 + $0xa70] sm:$0xff]
        %v848 = vld [vmem:[%s272 + $0xa78] sm:$0xff]
        %v849 = vld [vmem:[%s272 + $0xa80] sm:$0xff]
        %v850 = vld [vmem:[%s272 + $0xa88] sm:$0xff]
        %v851 = vld [vmem:[%s272 + $0xa90] sm:$0xff]
        %v852 = vld [vmem:[%s272 + $0xa98] sm:$0xff]
        %v853 = vld [vmem:[%s272 + $0xaa0] sm:$0xff]
        %v854 = vld [vmem:[%s272 + $0xaa8] sm:$0xff]
        %v855 = vld [vmem:[%s272 + $0xab0] sm:$0xff]
        %v856 = vld [vmem:[%s272 + $0xab8] sm:$0xff]
        %v857 = vld [vmem:[%s272 + $0xac0] sm:$0xff]
        %v858 = vld [vmem:[%s272 + $0xac8] sm:$0xff]
        %v859 = vld [vmem:[%s272 + $0xad0] sm:$0xff]
        %v860 = vld [vmem:[%s272 + $0xad8] sm:$0xff]
        %v861 = vld [vmem:[%s272 + $0xae0] sm:$0xff]
        %v862 = vld [vmem:[%s272 + $0xae8] sm:$0xff]
        %v863 = vld [vmem:[%s272 + $0xaf0] sm:$0xff]
        %v864 = vld [vmem:[%s272 + $0xaf8] sm:$0xff]
        %v865 = vld [vmem:[%s272 + $0xb00] sm:$0xff]
        %v866 = vld [vmem:[%s272 + $0xb08] sm:$0xff]
        %v867 = vld [vmem:[%s272 + $0xb10] sm:$0xff]
        %v868 = vld [vmem:[%s272 + $0xb18] sm:$0xff]
        %v869 = vld [vmem:[%s272 + $0xb20] sm:$0xff]
        %v870 = vld [vmem:[%s272 + $0xb28] sm:$0xff]
        %v871 = vld [vmem:[%s272 + $0xb30] sm:$0xff]
        %v872 = vld [vmem:[%s272 + $0xb38] sm:$0xff]
        %v873 = vld [vmem:[%s272 + $0xb40] sm:$0xff]
        %v874 = vld [vmem:[%s272 + $0xb48] sm:$0xff]
        %v875 = vld [vmem:[%s272 + $0xb50] sm:$0xff]
        %v876 = vld [vmem:[%s272 + $0xb58] sm:$0xff]
        %v877 = vld [vmem:[%s272 + $0xb60] sm:$0xff]
        %v878 = vld [vmem:[%s272 + $0xb68] sm:$0xff]
        %v879 = vld [vmem:[%s272 + $0xb70] sm:$0xff]
        %v880 = vld [vmem:[%s272 + $0xb78] sm:$0xff]
        %v881 = vld [vmem:[%s272 + $0xb80] sm:$0xff]
        %v882 = vld [vmem:[%s272 + $0xb88] sm:$0xff]
        %v883 = vld [vmem:[%s272 + $0xb90] sm:$0xff]
        %v884 = vld [vmem:[%s272 + $0xb98] sm:$0xff]
        %v885 = vld [vmem:[%s272 + $0xba0] sm:$0xff]
        %v886 = vld [vmem:[%s272 + $0xba8] sm:$0xff]
        %v887 = vld [vmem:[%s272 + $0xbb0] sm:$0xff]
        %v888 = vld [vmem:[%s272 + $0xbb8] sm:$0xff]
        %v889 = vld [vmem:[%s272 + $0xbc0] sm:$0xff]
        %v890 = vld [vmem:[%s272 + $0xbc8] sm:$0xff]
        %v891 = vld [vmem:[%s272 + $0xbd0] sm:$0xff]
        %v892 = vld [vmem:[%s272 + $0xbd8] sm:$0xff]
        %v893 = vld [vmem:[%s272 + $0xbe0] sm:$0xff]
        %v894 = vld [vmem:[%s272 + $0xbe8] sm:$0xff]
        %v895 = vld [vmem:[%s272 + $0xbf0] sm:$0xff]
        %v896 = vld [vmem:[%s272 + $0xbf8] sm:$0xff]
        %v897 = vld [vmem:[%s272 + $0xc00] sm:$0xff]
        %v898 = vld [vmem:[%s272 + $0xc08] sm:$0xff]
        %v899 = vld [vmem:[%s272 + $0xc10] sm:$0xff]
        %v900 = vld [vmem:[%s272 + $0xc18] sm:$0xff]
        %v901 = vld [vmem:[%s272 + $0xc20] sm:$0xff]
        %v902 = vld [vmem:[%s272 + $0xc28] sm:$0xff]
        %v903 = vld [vmem:[%s272 + $0xc30] sm:$0xff]
        %v904 = vld [vmem:[%s272 + $0xc38] sm:$0xff]
        %v905 = vld [vmem:[%s272 + $0xc40] sm:$0xff]
        %v906 = vld [vmem:[%s272 + $0xc48] sm:$0xff]
        %v907 = vld [vmem:[%s272 + $0xc50] sm:$0xff]
        %v908 = vld [vmem:[%s272 + $0xc58] sm:$0xff]
        %v909 = vld [vmem:[%s272 + $0xc60] sm:$0xff]
        %v910 = vld [vmem:[%s272 + $0xc68] sm:$0xff]
        %v911 = vld [vmem:[%s272 + $0xc70] sm:$0xff]
        %v912 = vld [vmem:[%s272 + $0xc78] sm:$0xff]
        %v913 = vld [vmem:[%s272 + $0xc80] sm:$0xff]
        %v914 = vld [vmem:[%s272 + $0xc88] sm:$0xff]
        %v915 = vld [vmem:[%s272 + $0xc90] sm:$0xff]
        %v916 = vld [vmem:[%s272 + $0xc98] sm:$0xff]
        %v917 = vld [vmem:[%s272 + $0xca0] sm:$0xff]
        %v918 = vld [vmem:[%s272 + $0xca8] sm:$0xff]
        %v919 = vld [vmem:[%s272 + $0xcb0] sm:$0xff]
        %v920 = vld [vmem:[%s272 + $0xcb8] sm:$0xff]
        %v921 = vld [vmem:[%s272 + $0xcc0] sm:$0xff]
        %v922 = vld [vmem:[%s272 + $0xcc8] sm:$0xff]
        %v923 = vld [vmem:[%s272 + $0xcd0] sm:$0xff]
        %v924 = vld [vmem:[%s272 + $0xcd8] sm:$0xff]
        %v925 = vld [vmem:[%s272 + $0xce0] sm:$0xff]
        %v926 = vld [vmem:[%s272 + $0xce8] sm:$0xff]
        %v927 = vld [vmem:[%s272 + $0xcf0] sm:$0xff]
        %v928 = vld [vmem:[%s272 + $0xcf8] sm:$0xff]
        %v929 = vld [vmem:[%s272 + $0xd00] sm:$0xff]
        %v930 = vld [vmem:[%s272 + $0xd08] sm:$0xff]
        %v931 = vld [vmem:[%s272 + $0xd10] sm:$0xff]
        %v932 = vld [vmem:[%s272 + $0xd18] sm:$0xff]
        %v933 = vld [vmem:[%s272 + $0xd20] sm:$0xff]
        %v934 = vld [vmem:[%s272 + $0xd28] sm:$0xff]
        %v935 = vld [vmem:[%s272 + $0xd30] sm:$0xff]
        %v936 = vld [vmem:[%s272 + $0xd38] sm:$0xff]
        %v937 = vld [vmem:[%s272 + $0xd40] sm:$0xff]
        %v938 = vld [vmem:[%s272 + $0xd48] sm:$0xff]
        %v939 = vld [vmem:[%s272 + $0xd50] sm:$0xff]
        %v940 = vld [vmem:[%s272 + $0xd58] sm:$0xff]
        %v941 = vld [vmem:[%s272 + $0xd60] sm:$0xff]
        %v942 = vld [vmem:[%s272 + $0xd68] sm:$0xff]
        %v943 = vld [vmem:[%s272 + $0xd70] sm:$0xff]
        %v944 = vld [vmem:[%s272 + $0xd78] sm:$0xff]
        %v945 = vld [vmem:[%s272 + $0xd80] sm:$0xff]
        %v946 = vld [vmem:[%s272 + $0xd88] sm:$0xff]
        %v947 = vld [vmem:[%s272 + $0xd90] sm:$0xff]
        %v948 = vld [vmem:[%s272 + $0xd98] sm:$0xff]
        %v949 = vld [vmem:[%s272 + $0xda0] sm:$0xff]
        %v950 = vld [vmem:[%s272 + $0xda8] sm:$0xff]
        %v951 = vld [vmem:[%s272 + $0xdb0] sm:$0xff]
        %v952 = vld [vmem:[%s272 + $0xdb8] sm:$0xff]
        %v953 = vld [vmem:[%s272 + $0xdc0] sm:$0xff]
        %v954 = vld [vmem:[%s272 + $0xdc8] sm:$0xff]
        %v955 = vld [vmem:[%s272 + $0xdd0] sm:$0xff]
        %v956 = vld [vmem:[%s272 + $0xdd8] sm:$0xff]
        %v957 = vld [vmem:[%s272 + $0xde0] sm:$0xff]
        %v958 = vld [vmem:[%s272 + $0xde8] sm:$0xff]
        %v959 = vld [vmem:[%s272 + $0xdf0] sm:$0xff]
        %v960 = vld [vmem:[%s272 + $0xdf8] sm:$0xff]
        %v961 = vld [vmem:[%s272 + $0xe00] sm:$0xff]
        %v962 = vld [vmem:[%s272 + $0xe08] sm:$0xff]
        %v963 = vld [vmem:[%s272 + $0xe10] sm:$0xff]
        %v964 = vld [vmem:[%s272 + $0xe18] sm:$0xff]
        %v965 = vld [vmem:[%s272 + $0xe20] sm:$0xff]
        %v966 = vld [vmem:[%s272 + $0xe28] sm:$0xff]
        %v967 = vld [vmem:[%s272 + $0xe30] sm:$0xff]
        %v968 = vld [vmem:[%s272 + $0xe38] sm:$0xff]
        %v969 = vld [vmem:[%s272 + $0xe40] sm:$0xff]
        %v970 = vld [vmem:[%s272 + $0xe48] sm:$0xff]
        %v971 = vld [vmem:[%s272 + $0xe50] sm:$0xff]
        %v972 = vld [vmem:[%s272 + $0xe58] sm:$0xff]
        %v973 = vld [vmem:[%s272 + $0xe60] sm:$0xff]
        %v974 = vld [vmem:[%s272 + $0xe68] sm:$0xff]
        %v975 = vld [vmem:[%s272 + $0xe70] sm:$0xff]
        %v976 = vld [vmem:[%s272 + $0xe78] sm:$0xff]
        %v977 = vld [vmem:[%s272 + $0xe80] sm:$0xff]
        %v978 = vld [vmem:[%s272 + $0xe88] sm:$0xff]
        %v979 = vld [vmem:[%s272 + $0xe90] sm:$0xff]
        %v980 = vld [vmem:[%s272 + $0xe98] sm:$0xff]
        %v981 = vld [vmem:[%s272 + $0xea0] sm:$0xff]
        %v982 = vld [vmem:[%s272 + $0xea8] sm:$0xff]
        %v983 = vld [vmem:[%s272 + $0xeb0] sm:$0xff]
        %v984 = vld [vmem:[%s272 + $0xeb8] sm:$0xff]
        %v985 = vld [vmem:[%s272 + $0xec0] sm:$0xff]
        %v986 = vld [vmem:[%s272 + $0xec8] sm:$0xff]
        %v987 = vld [vmem:[%s272 + $0xed0] sm:$0xff]
        %v988 = vld [vmem:[%s272 + $0xed8] sm:$0xff]
        %v989 = vld [vmem:[%s272 + $0xee0] sm:$0xff]
        %v990 = vld [vmem:[%s272 + $0xee8] sm:$0xff]
        %v991 = vld [vmem:[%s272 + $0xef0] sm:$0xff]
        %v992 = vld [vmem:[%s272 + $0xef8] sm:$0xff]
        %v993 = vld [vmem:[%s272 + $0xf00] sm:$0xff]
        %v994 = vld [vmem:[%s272 + $0xf08] sm:$0xff]
        %v995 = vld [vmem:[%s272 + $0xf10] sm:$0xff]
        %v996 = vld [vmem:[%s272 + $0xf18] sm:$0xff]
        %v997 = vld [vmem:[%s272 + $0xf20] sm:$0xff]
        %v998 = vld [vmem:[%s272 + $0xf28] sm:$0xff]
        %v999 = vld [vmem:[%s272 + $0xf30] sm:$0xff]
        %v1000 = vld [vmem:[%s272 + $0xf38] sm:$0xff]
        %v1001 = vld [vmem:[%s272 + $0xf40] sm:$0xff]
        %v1002 = vld [vmem:[%s272 + $0xf48] sm:$0xff]
        %v1003 = vld [vmem:[%s272 + $0xf50] sm:$0xff]
        %v1004 = vld [vmem:[%s272 + $0xf58] sm:$0xff]
        %v1005 = vld [vmem:[%s272 + $0xf60] sm:$0xff]
        %v1006 = vld [vmem:[%s272 + $0xf68] sm:$0xff]
        %v1007 = vld [vmem:[%s272 + $0xf70] sm:$0xff]
        %v1008 = vld [vmem:[%s272 + $0xf78] sm:$0xff]
        %v1009 = vld [vmem:[%s272 + $0xf80] sm:$0xff]
        %v1010 = vld [vmem:[%s272 + $0xf88] sm:$0xff]
        %v1011 = vld [vmem:[%s272 + $0xf90] sm:$0xff]
        %v1012 = vld [vmem:[%s272 + $0xf98] sm:$0xff]
        %v1013 = vld [vmem:[%s272 + $0xfa0] sm:$0xff]
        %v1014 = vld [vmem:[%s272 + $0xfa8] sm:$0xff]
        %v1015 = vld [vmem:[%s272 + $0xfb0] sm:$0xff]
        %v1016 = vld [vmem:[%s272 + $0xfb8] sm:$0xff]
        %v1017 = vld [vmem:[%s272 + $0xfc0] sm:$0xff]
        %v1018 = vld [vmem:[%s272 + $0xfc8] sm:$0xff]
        %v1019 = vld [vmem:[%s272 + $0xfd0] sm:$0xff]
        %v1020 = vld [vmem:[%s272 + $0xfd8] sm:$0xff]
        %v1021 = vld [vmem:[%s272 + $0xfe0] sm:$0xff]
        %v1022 = vld [vmem:[%s272 + $0xfe8] sm:$0xff]
        %v1023 = vld [vmem:[%s272 + $0xff0] sm:$0xff]
        %v1024 = vld [vmem:[%s272 + $0xff8] sm:$0xff]
        %v1025 = vld [vmem:[%s272 + $0x1000] sm:$0xff]
        %v1026 = vld [vmem:[%s272 + $0x1008] sm:$0xff]
        %v1027 = vld [vmem:[%s272 + $0x1010] sm:$0xff]
        %v1028 = vld [vmem:[%s272 + $0x1018] sm:$0xff]
        %v1029 = vld [vmem:[%s272 + $0x1020] sm:$0xff]
        %v1030 = vld [vmem:[%s272 + $0x1028] sm:$0xff]
        %v1031 = vld [vmem:[%s272 + $0x1030] sm:$0xff]
        %v1032 = vld [vmem:[%s272 + $0x1038] sm:$0xff]
        %v1033 = vld [vmem:[%s272 + $0x1040] sm:$0xff]
        %v1034 = vld [vmem:[%s272 + $0x1048] sm:$0xff]
        %v1035 = vld [vmem:[%s272 + $0x1050] sm:$0xff]
        %v1036 = vld [vmem:[%s272 + $0x1058] sm:$0xff]
        %v1037 = vld [vmem:[%s272 + $0x1060] sm:$0xff]
        %v1038 = vld [vmem:[%s272 + $0x1068] sm:$0xff]
        %v1039 = vld [vmem:[%s272 + $0x1070] sm:$0xff]
        %v1040 = vld [vmem:[%s272 + $0x1078] sm:$0xff]
        %v1041 = vld [vmem:[%s272 + $0x1080] sm:$0xff]
        %v1042 = vld [vmem:[%s272 + $0x1088] sm:$0xff]
        %v1043 = vld [vmem:[%s272 + $0x1090] sm:$0xff]
        %v1044 = vld [vmem:[%s272 + $0x1098] sm:$0xff]
        %v1045 = vld [vmem:[%s272 + $0x10a0] sm:$0xff]
        %v1046 = vld [vmem:[%s272 + $0x10a8] sm:$0xff]
        %v1047 = vld [vmem:[%s272 + $0x10b0] sm:$0xff]
        %v1048 = vld [vmem:[%s272 + $0x10b8] sm:$0xff]
        %v1049 = vld [vmem:[%s272 + $0x10c0] sm:$0xff]
        %v1050 = vld [vmem:[%s272 + $0x10c8] sm:$0xff]
        %v1051 = vld [vmem:[%s272 + $0x10d0] sm:$0xff]
        %v1052 = vld [vmem:[%s272 + $0x10d8] sm:$0xff]
        %v1053 = vld [vmem:[%s272 + $0x10e0] sm:$0xff]
        %v1054 = vld [vmem:[%s272 + $0x10e8] sm:$0xff]
        %v1055 = vld [vmem:[%s272 + $0x10f0] sm:$0xff]
        %v1056 = vld [vmem:[%s272 + $0x10f8] sm:$0xff]
        %v1057 = vld [vmem:[%s272 + $0x1100] sm:$0xff]
        %v1058 = vld [vmem:[%s272 + $0x1108] sm:$0xff]
        %v1059 = vld [vmem:[%s272 + $0x1110] sm:$0xff]
        %v1060 = vld [vmem:[%s272 + $0x1118] sm:$0xff]
        %v1061 = vld [vmem:[%s272 + $0x1120] sm:$0xff]
        %v1062 = vld [vmem:[%s272 + $0x1128] sm:$0xff]
        %v1063 = vld [vmem:[%s272 + $0x1130] sm:$0xff]
        %v1064 = vld [vmem:[%s272 + $0x1138] sm:$0xff]
        %v1065 = vld [vmem:[%s272 + $0x1140] sm:$0xff]
        %v1066 = vld [vmem:[%s272 + $0x1148] sm:$0xff]
        %v1067 = vld [vmem:[%s272 + $0x1150] sm:$0xff]
        %v1068 = vld [vmem:[%s272 + $0x1158] sm:$0xff]
        %v1069 = vld [vmem:[%s272 + $0x1160] sm:$0xff]
        %v1070 = vld [vmem:[%s272 + $0x1168] sm:$0xff]
        %v1071 = vld [vmem:[%s272 + $0x1170] sm:$0xff]
        %v1072 = vld [vmem:[%s272 + $0x1178] sm:$0xff]
        %v1073 = vld [vmem:[%s272 + $0x1180] sm:$0xff]
        %v1074 = vld [vmem:[%s272 + $0x1188] sm:$0xff]
        %v1075 = vld [vmem:[%s272 + $0x1190] sm:$0xff]
        %v1076 = vld [vmem:[%s272 + $0x1198] sm:$0xff]
        %v1077 = vld [vmem:[%s272 + $0x11a0] sm:$0xff]
        %v1078 = vld [vmem:[%s272 + $0x11a8] sm:$0xff]
        %v1079 = vld [vmem:[%s272 + $0x11b0] sm:$0xff]
        %v1080 = vld [vmem:[%s272 + $0x11b8] sm:$0xff]
        %v1081 = vld [vmem:[%s272 + $0x11c0] sm:$0xff]
        %v1082 = vld [vmem:[%s272 + $0x11c8] sm:$0xff]
        %v1083 = vld [vmem:[%s272 + $0x11d0] sm:$0xff]
        %v1084 = vld [vmem:[%s272 + $0x11d8] sm:$0xff]
        %v1085 = vld [vmem:[%s272 + $0x11e0] sm:$0xff]
        %v1086 = vld [vmem:[%s272 + $0x11e8] sm:$0xff]
        %v1087 = vld [vmem:[%s272 + $0x11f0] sm:$0xff]
        %v1088 = vld [vmem:[%s272 + $0x11f8] sm:$0xff]
        %v1089 = vld [vmem:[%s272 + $0x1200] sm:$0xff]
        %v1090 = vld [vmem:[%s272 + $0x1208] sm:$0xff]
        %v1091 = vld [vmem:[%s272 + $0x1210] sm:$0xff]
        %v1092 = vld [vmem:[%s272 + $0x1218] sm:$0xff]
        %v1093 = vld [vmem:[%s272 + $0x1220] sm:$0xff]
        %v1094 = vld [vmem:[%s272 + $0x1228] sm:$0xff]
        %v1095 = vld [vmem:[%s272 + $0x1230] sm:$0xff]
        %v1096 = vld [vmem:[%s272 + $0x1238] sm:$0xff]
        %v1097 = vld [vmem:[%s272 + $0x1240] sm:$0xff]
        %v1098 = vld [vmem:[%s272 + $0x1248] sm:$0xff]
        %v1099 = vld [vmem:[%s272 + $0x1250] sm:$0xff]
        %v1100 = vld [vmem:[%s272 + $0x1258] sm:$0xff]
        %v1101 = vld [vmem:[%s272 + $0x1260] sm:$0xff]
        %v1102 = vld [vmem:[%s272 + $0x1268] sm:$0xff]
        %v1103 = vld [vmem:[%s272 + $0x1270] sm:$0xff]
        %v1104 = vld [vmem:[%s272 + $0x1278] sm:$0xff]
        %v1105 = vld [vmem:[%s272 + $0x1280] sm:$0xff]
        %v1106 = vld [vmem:[%s272 + $0x1288] sm:$0xff]
        %v1107 = vld [vmem:[%s272 + $0x1290] sm:$0xff]
        %v1108 = vld [vmem:[%s272 + $0x1298] sm:$0xff]
        %v1109 = vld [vmem:[%s272 + $0x12a0] sm:$0xff]
        %v1110 = vld [vmem:[%s272 + $0x12a8] sm:$0xff]
        %v1111 = vld [vmem:[%s272 + $0x12b0] sm:$0xff]
        %v1112 = vld [vmem:[%s272 + $0x12b8] sm:$0xff]
        %v1113 = vld [vmem:[%s272 + $0x12c0] sm:$0xff]
        %v1114 = vld [vmem:[%s272 + $0x12c8] sm:$0xff]
        %v1115 = vld [vmem:[%s272 + $0x12d0] sm:$0xff]
        %v1116 = vld [vmem:[%s272 + $0x12d8] sm:$0xff]
        %v1117 = vld [vmem:[%s272 + $0x12e0] sm:$0xff]
        %v1118 = vld [vmem:[%s272 + $0x12e8] sm:$0xff]
        %v1119 = vld [vmem:[%s272 + $0x12f0] sm:$0xff]
        %v1120 = vld [vmem:[%s272 + $0x12f8] sm:$0xff]
        %v1121 = vld [vmem:[%s272 + $0x1300] sm:$0xff]
        %v1122 = vld [vmem:[%s272 + $0x1308] sm:$0xff]
        %v1123 = vld [vmem:[%s272 + $0x1310] sm:$0xff]
        %v1124 = vld [vmem:[%s272 + $0x1318] sm:$0xff]
        %v1125 = vld [vmem:[%s272 + $0x1320] sm:$0xff]
        %v1126 = vld [vmem:[%s272 + $0x1328] sm:$0xff]
        %v1127 = vld [vmem:[%s272 + $0x1330] sm:$0xff]
        %v1128 = vld [vmem:[%s272 + $0x1338] sm:$0xff]
        %v1129 = vld [vmem:[%s272 + $0x1340] sm:$0xff]
        %v1130 = vld [vmem:[%s272 + $0x1348] sm:$0xff]
        %v1131 = vld [vmem:[%s272 + $0x1350] sm:$0xff]
        %v1132 = vld [vmem:[%s272 + $0x1358] sm:$0xff]
        %v1133 = vld [vmem:[%s272 + $0x1360] sm:$0xff]
        %v1134 = vld [vmem:[%s272 + $0x1368] sm:$0xff]
        %v1135 = vld [vmem:[%s272 + $0x1370] sm:$0xff]
        %v1136 = vld [vmem:[%s272 + $0x1378] sm:$0xff]
        %v1137 = vld [vmem:[%s272 + $0x1380] sm:$0xff]
        %v1138 = vld [vmem:[%s272 + $0x1388] sm:$0xff]
        %v1139 = vld [vmem:[%s272 + $0x1390] sm:$0xff]
        %v1140 = vld [vmem:[%s272 + $0x1398] sm:$0xff]
        %v1141 = vld [vmem:[%s272 + $0x13a0] sm:$0xff]
        %v1142 = vld [vmem:[%s272 + $0x13a8] sm:$0xff]
        %v1143 = vld [vmem:[%s272 + $0x13b0] sm:$0xff]
        %v1144 = vld [vmem:[%s272 + $0x13b8] sm:$0xff]
        %v1145 = vld [vmem:[%s272 + $0x13c0] sm:$0xff]
        %v1146 = vld [vmem:[%s272 + $0x13c8] sm:$0xff]
        %v1147 = vld [vmem:[%s272 + $0x13d0] sm:$0xff]
        %v1148 = vld [vmem:[%s272 + $0x13d8] sm:$0xff]
        %v1149 = vld [vmem:[%s272 + $0x13e0] sm:$0xff]
        %v1150 = vld [vmem:[%s272 + $0x13e8] sm:$0xff]
        %v1151 = vld [vmem:[%s272 + $0x13f0] sm:$0xff]
        %v1152 = vld [vmem:[%s272 + $0x13f8] sm:$0xff]
        %v1153 = vld [vmem:[%s272 + $0x1400] sm:$0xff]
        %v1154 = vld [vmem:[%s272 + $0x1408] sm:$0xff]
        %v1155 = vld [vmem:[%s272 + $0x1410] sm:$0xff]
        %v1156 = vld [vmem:[%s272 + $0x1418] sm:$0xff]
        %v1157 = vld [vmem:[%s272 + $0x1420] sm:$0xff]
        %v1158 = vld [vmem:[%s272 + $0x1428] sm:$0xff]
        %v1159 = vld [vmem:[%s272 + $0x1430] sm:$0xff]
        %v1160 = vld [vmem:[%s272 + $0x1438] sm:$0xff]
        %v1161 = vld [vmem:[%s272 + $0x1440] sm:$0xff]
        %v1162 = vld [vmem:[%s272 + $0x1448] sm:$0xff]
        %v1163 = vld [vmem:[%s272 + $0x1450] sm:$0xff]
        %v1164 = vld [vmem:[%s272 + $0x1458] sm:$0xff]
        %v1165 = vld [vmem:[%s272 + $0x1460] sm:$0xff]
        %v1166 = vld [vmem:[%s272 + $0x1468] sm:$0xff]
        %v1167 = vld [vmem:[%s272 + $0x1470] sm:$0xff]
        %v1168 = vld [vmem:[%s272 + $0x1478] sm:$0xff]
        %v1169 = vld [vmem:[%s272 + $0x1480] sm:$0xff]
        %v1170 = vld [vmem:[%s272 + $0x1488] sm:$0xff]
        %v1171 = vld [vmem:[%s272 + $0x1490] sm:$0xff]
        %v1172 = vld [vmem:[%s272 + $0x1498] sm:$0xff]
        %v1173 = vld [vmem:[%s272 + $0x14a0] sm:$0xff]
        %v1174 = vld [vmem:[%s272 + $0x14a8] sm:$0xff]
        %v1175 = vld [vmem:[%s272 + $0x14b0] sm:$0xff]
        %v1176 = vld [vmem:[%s272 + $0x14b8] sm:$0xff]
        %v1177 = vld [vmem:[%s272 + $0x14c0] sm:$0xff]
        %v1178 = vld [vmem:[%s272 + $0x14c8] sm:$0xff]
        %v1179 = vld [vmem:[%s272 + $0x14d0] sm:$0xff]
        %v1180 = vld [vmem:[%s272 + $0x14d8] sm:$0xff]
        %v1181 = vld [vmem:[%s272 + $0x14e0] sm:$0xff]
        %v1182 = vld [vmem:[%s272 + $0x14e8] sm:$0xff]
        %v1183 = vld [vmem:[%s272 + $0x14f0] sm:$0xff]
        %v1184 = vld [vmem:[%s272 + $0x14f8] sm:$0xff]
        %v1185 = vld [vmem:[%s272 + $0x1500] sm:$0xff]
        %v1186 = vld [vmem:[%s272 + $0x1508] sm:$0xff]
        %v1187 = vld [vmem:[%s272 + $0x1510] sm:$0xff]
        %v1188 = vld [vmem:[%s272 + $0x1518] sm:$0xff]
        %v1189 = vld [vmem:[%s272 + $0x1520] sm:$0xff]
        %v1190 = vld [vmem:[%s272 + $0x1528] sm:$0xff]
        %v1191 = vld [vmem:[%s272 + $0x1530] sm:$0xff]
        %v1192 = vld [vmem:[%s272 + $0x1538] sm:$0xff]
        %v1193 = vld [vmem:[%s272 + $0x1540] sm:$0xff]
        %v1194 = vld [vmem:[%s272 + $0x1548] sm:$0xff]
        %v1195 = vld [vmem:[%s272 + $0x1550] sm:$0xff]
        %v1196 = vld [vmem:[%s272 + $0x1558] sm:$0xff]
        %v1197 = vld [vmem:[%s272 + $0x1560] sm:$0xff]
        %v1198 = vld [vmem:[%s272 + $0x1568] sm:$0xff]
        %v1199 = vld [vmem:[%s272 + $0x1570] sm:$0xff]
        %v1200 = vld [vmem:[%s272 + $0x1578] sm:$0xff]
        %v1201 = vld [vmem:[%s272 + $0x1580] sm:$0xff]
        %v1202 = vld [vmem:[%s272 + $0x1588] sm:$0xff]
        %v1203 = vld [vmem:[%s272 + $0x1590] sm:$0xff]
        %v1204 = vld [vmem:[%s272 + $0x1598] sm:$0xff]
        %v1205 = vld [vmem:[%s272 + $0x15a0] sm:$0xff]
        %v1206 = vld [vmem:[%s272 + $0x15a8] sm:$0xff]
        %v1207 = vld [vmem:[%s272 + $0x15b0] sm:$0xff]
        %v1208 = vld [vmem:[%s272 + $0x15b8] sm:$0xff]
        %v1209 = vld [vmem:[%s272 + $0x15c0] sm:$0xff]
        %v1210 = vld [vmem:[%s272 + $0x15c8] sm:$0xff]
        %v1211 = vld [vmem:[%s272 + $0x15d0] sm:$0xff]
        %v1212 = vld [vmem:[%s272 + $0x15d8] sm:$0xff]
        %v1213 = vld [vmem:[%s272 + $0x15e0] sm:$0xff]
        %v1214 = vld [vmem:[%s272 + $0x15e8] sm:$0xff]
        %v1215 = vld [vmem:[%s272 + $0x15f0] sm:$0xff]
        %v1216 = vld [vmem:[%s272 + $0x15f8] sm:$0xff]
        %v1217 = vld [vmem:[%s281] sm:$0xff]
        %v1218 = vld [vmem:[%s281 + $0x8] sm:$0xff]
        %v1219 = vld [vmem:[%s281 + $0x10] sm:$0x3f]
        %v1223 = vlaneseq
        %v1224 = vshrl.u32 %v1223, 7
        %v1225 = vsub.s32 0, %v1224
        %v1226 = vrot.slane %v1217, %v1225
        %v1227 = vlaneseq
        %v1228 = vshrl.u32 %v1227, 7
        %v1229 = vsub.s32 1, %v1228
        %v1230 = vrot.slane %v1217, %v1229
        %v1231 = vlaneseq
        %v1232 = vshrl.u32 %v1231, 7
        %v1233 = vsub.s32 2, %v1232
        %v1234 = vrot.slane %v1217, %v1233
        %v1235 = vlaneseq
        %v1236 = vshrl.u32 %v1235, 7
        %v1237 = vsub.s32 3, %v1236
        %v1238 = vrot.slane %v1217, %v1237
        %v1239 = vlaneseq
        %v1240 = vshrl.u32 %v1239, 7
        %v1241 = vsub.s32 4, %v1240
        %v1242 = vrot.slane %v1217, %v1241
        %v1243 = vlaneseq
        %v1244 = vshrl.u32 %v1243, 7
        %v1245 = vsub.s32 5, %v1244
        %v1246 = vrot.slane %v1217, %v1245
        %v1247 = vlaneseq
        %v1248 = vshrl.u32 %v1247, 7
        %v1249 = vsub.s32 6, %v1248
        %v1250 = vrot.slane %v1217, %v1249
        %v1251 = vlaneseq
        %v1252 = vshrl.u32 %v1251, 7
        %v1253 = vsub.s32 7, %v1252
        %v1254 = vrot.slane %v1217, %v1253
        %v1255 = vlaneseq
        %v1256 = vshrl.u32 %v1255, 7
        %v1257 = vsub.s32 0, %v1256
        %v1258 = vrot.slane %v1218, %v1257
        %v1259 = vlaneseq
        %v1260 = vshrl.u32 %v1259, 7
        %v1261 = vsub.s32 1, %v1260
        %v1262 = vrot.slane %v1218, %v1261
        %v1263 = vlaneseq
        %v1264 = vshrl.u32 %v1263, 7
        %v1265 = vsub.s32 2, %v1264
        %v1266 = vrot.slane %v1218, %v1265
        %v1267 = vlaneseq
        %v1268 = vshrl.u32 %v1267, 7
        %v1269 = vsub.s32 3, %v1268
        %v1270 = vrot.slane %v1218, %v1269
        %v1271 = vlaneseq
        %v1272 = vshrl.u32 %v1271, 7
        %v1273 = vsub.s32 4, %v1272
        %v1274 = vrot.slane %v1218, %v1273
        %v1275 = vlaneseq
        %v1276 = vshrl.u32 %v1275, 7
        %v1277 = vsub.s32 5, %v1276
        %v1278 = vrot.slane %v1218, %v1277
        %v1279 = vlaneseq
        %v1280 = vshrl.u32 %v1279, 7
        %v1281 = vsub.s32 6, %v1280
        %v1282 = vrot.slane %v1218, %v1281
        %v1283 = vlaneseq
        %v1284 = vshrl.u32 %v1283, 7
        %v1285 = vsub.s32 7, %v1284
        %v1286 = vrot.slane %v1218, %v1285
        %v1287 = vlaneseq
        %v1288 = vshrl.u32 %v1287, 7
        %v1289 = vsub.s32 0, %v1288
        %v1290 = vrot.slane %v1219, %v1289
        %v1291 = vlaneseq
        %v1292 = vshrl.u32 %v1291, 7
        %v1293 = vsub.s32 1, %v1292
        %v1294 = vrot.slane %v1219, %v1293
        %v1295 = vlaneseq
        %v1296 = vshrl.u32 %v1295, 7
        %v1297 = vsub.s32 2, %v1296
        %v1298 = vrot.slane %v1219, %v1297
        %v1299 = vlaneseq
        %v1300 = vshrl.u32 %v1299, 7
        %v1301 = vsub.s32 3, %v1300
        %v1302 = vrot.slane %v1219, %v1301
        %v1303 = vlaneseq
        %v1304 = vshrl.u32 %v1303, 7
        %v1305 = vsub.s32 4, %v1304
        %v1306 = vrot.slane %v1219, %v1305
        %v1307 = vlaneseq
        %v1308 = vshrl.u32 %v1307, 7
        %v1309 = vsub.s32 5, %v1308
        %v1310 = vrot.slane %v1219, %v1309
        %v2037 = vunpack.c.l.b16 %v513
        %v2038 = vunpack.c.h.b16 %v513
        %v2039 = vunpack.c.l.b16 %v514
        %v2040 = vunpack.c.h.b16 %v514
        %v2041 = vunpack.c.l.b16 %v515
        %v2042 = vunpack.c.h.b16 %v515
        %v2043 = vunpack.c.l.b16 %v516
        %v2044 = vunpack.c.h.b16 %v516
        %v2045 = vunpack.c.l.b16 %v517
        %v2046 = vunpack.c.h.b16 %v517
        %v2047 = vunpack.c.l.b16 %v518
        %v2048 = vunpack.c.h.b16 %v518
        %v2049 = vunpack.c.l.b16 %v519
        %v2050 = vunpack.c.h.b16 %v519
        %v2051 = vunpack.c.l.b16 %v520
        %v2052 = vunpack.c.h.b16 %v520
        %v2053 = vunpack.c.l.b16 %v521
        %v2054 = vunpack.c.h.b16 %v521
        %v2055 = vunpack.c.l.b16 %v522
        %v2056 = vunpack.c.h.b16 %v522
        %v2057 = vunpack.c.l.b16 %v523
        %v2058 = vunpack.c.h.b16 %v523
        %v2059 = vunpack.c.l.b16 %v524
        %v2060 = vunpack.c.h.b16 %v524
        %v2061 = vunpack.c.l.b16 %v525
        %v2062 = vunpack.c.h.b16 %v525
        %v2063 = vunpack.c.l.b16 %v526
        %v2064 = vunpack.c.h.b16 %v526
        %v2065 = vunpack.c.l.b16 %v527
        %v2066 = vunpack.c.h.b16 %v527
        %v2067 = vunpack.c.l.b16 %v528
        %v2068 = vunpack.c.h.b16 %v528
        %v2069 = vunpack.c.l.b16 %v529
        %v2070 = vunpack.c.h.b16 %v529
        %v2071 = vunpack.c.l.b16 %v530
        %v2072 = vunpack.c.h.b16 %v530
        %v2073 = vunpack.c.l.b16 %v531
        %v2074 = vunpack.c.h.b16 %v531
        %v2075 = vunpack.c.l.b16 %v532
        %v2076 = vunpack.c.h.b16 %v532
        %v2077 = vunpack.c.l.b16 %v533
        %v2078 = vunpack.c.h.b16 %v533
        %v2079 = vunpack.c.l.b16 %v534
        %v2080 = vunpack.c.h.b16 %v534
        %v2081 = vunpack.c.l.b16 %v535
        %v2082 = vunpack.c.h.b16 %v535
        %v2083 = vunpack.c.l.b16 %v536
        %v2084 = vunpack.c.h.b16 %v536
        %v2085 = vunpack.c.l.b16 %v537
        %v2086 = vunpack.c.h.b16 %v537
        %v2087 = vunpack.c.l.b16 %v538
        %v2088 = vunpack.c.h.b16 %v538
        %v2089 = vunpack.c.l.b16 %v539
        %v2090 = vunpack.c.h.b16 %v539
        %v2091 = vunpack.c.l.b16 %v540
        %v2092 = vunpack.c.h.b16 %v540
        %v2093 = vunpack.c.l.b16 %v541
        %v2094 = vunpack.c.h.b16 %v541
        %v2095 = vunpack.c.l.b16 %v542
        %v2096 = vunpack.c.h.b16 %v542
        %v2097 = vunpack.c.l.b16 %v543
        %v2098 = vunpack.c.h.b16 %v543
        %v2099 = vunpack.c.l.b16 %v544
        %v2100 = vunpack.c.h.b16 %v544
        %v2101 = vunpack.c.l.b16 %v545
        %v2102 = vunpack.c.h.b16 %v545
        %v2103 = vunpack.c.l.b16 %v546
        %v2104 = vunpack.c.h.b16 %v546
        %v2105 = vunpack.c.l.b16 %v547
        %v2106 = vunpack.c.h.b16 %v547
        %v2107 = vunpack.c.l.b16 %v548
        %v2108 = vunpack.c.h.b16 %v548
        %v2109 = vunpack.c.l.b16 %v549
        %v2110 = vunpack.c.h.b16 %v549
        %v2111 = vunpack.c.l.b16 %v550
        %v2112 = vunpack.c.h.b16 %v550
        %v2113 = vunpack.c.l.b16 %v551
        %v2114 = vunpack.c.h.b16 %v551
        %v2115 = vunpack.c.l.b16 %v552
        %v2116 = vunpack.c.h.b16 %v552
        %v2117 = vunpack.c.l.b16 %v553
        %v2118 = vunpack.c.h.b16 %v553
        %v2119 = vunpack.c.l.b16 %v554
        %v2120 = vunpack.c.h.b16 %v554
        %v2121 = vunpack.c.l.b16 %v555
        %v2122 = vunpack.c.h.b16 %v555
        %v2123 = vunpack.c.l.b16 %v556
        %v2124 = vunpack.c.h.b16 %v556
        %v2125 = vunpack.c.l.b16 %v557
        %v2126 = vunpack.c.h.b16 %v557
        %v2127 = vunpack.c.l.b16 %v558
        %v2128 = vunpack.c.h.b16 %v558
        %v2129 = vunpack.c.l.b16 %v559
        %v2130 = vunpack.c.h.b16 %v559
        %v2131 = vunpack.c.l.b16 %v560
        %v2132 = vunpack.c.h.b16 %v560
        %v2133 = vunpack.c.l.b16 %v561
        %v2134 = vunpack.c.h.b16 %v561
        %v2135 = vunpack.c.l.b16 %v562
        %v2136 = vunpack.c.h.b16 %v562
        %v2137 = vunpack.c.l.b16 %v563
        %v2138 = vunpack.c.h.b16 %v563
        %v2139 = vunpack.c.l.b16 %v564
        %v2140 = vunpack.c.h.b16 %v564
        %v2141 = vunpack.c.l.b16 %v565
        %v2142 = vunpack.c.h.b16 %v565
        %v2143 = vunpack.c.l.b16 %v566
        %v2144 = vunpack.c.h.b16 %v566
        %v2145 = vunpack.c.l.b16 %v567
        %v2146 = vunpack.c.h.b16 %v567
        %v2147 = vunpack.c.l.b16 %v568
        %v2148 = vunpack.c.h.b16 %v568
        %v2149 = vunpack.c.l.b16 %v569
        %v2150 = vunpack.c.h.b16 %v569
        %v2151 = vunpack.c.l.b16 %v570
        %v2152 = vunpack.c.h.b16 %v570
        %v2153 = vunpack.c.l.b16 %v571
        %v2154 = vunpack.c.h.b16 %v571
        %v2155 = vunpack.c.l.b16 %v572
        %v2156 = vunpack.c.h.b16 %v572
        %v2157 = vunpack.c.l.b16 %v573
        %v2158 = vunpack.c.h.b16 %v573
        %v2159 = vunpack.c.l.b16 %v574
        %v2160 = vunpack.c.h.b16 %v574
        %v2161 = vunpack.c.l.b16 %v575
        %v2162 = vunpack.c.h.b16 %v575
        %v2163 = vunpack.c.l.b16 %v576
        %v2164 = vunpack.c.h.b16 %v576
        %v2165 = vunpack.c.l.b16 %v577
        %v2166 = vunpack.c.h.b16 %v577
        %v2167 = vunpack.c.l.b16 %v578
        %v2168 = vunpack.c.h.b16 %v578
        %v2169 = vunpack.c.l.b16 %v579
        %v2170 = vunpack.c.h.b16 %v579
        %v2171 = vunpack.c.l.b16 %v580
        %v2172 = vunpack.c.h.b16 %v580
        %v2173 = vunpack.c.l.b16 %v581
        %v2174 = vunpack.c.h.b16 %v581
        %v2175 = vunpack.c.l.b16 %v582
        %v2176 = vunpack.c.h.b16 %v582
        %v2177 = vunpack.c.l.b16 %v583
        %v2178 = vunpack.c.h.b16 %v583
        %v2179 = vunpack.c.l.b16 %v584
        %v2180 = vunpack.c.h.b16 %v584
        %v2181 = vunpack.c.l.b16 %v585
        %v2182 = vunpack.c.h.b16 %v585
        %v2183 = vunpack.c.l.b16 %v586
        %v2184 = vunpack.c.h.b16 %v586
        %v2185 = vunpack.c.l.b16 %v587
        %v2186 = vunpack.c.h.b16 %v587
        %v2187 = vunpack.c.l.b16 %v588
        %v2188 = vunpack.c.h.b16 %v588
        %v2189 = vunpack.c.l.b16 %v589
        %v2190 = vunpack.c.h.b16 %v589
        %v2191 = vunpack.c.l.b16 %v590
        %v2192 = vunpack.c.h.b16 %v590
        %v2193 = vunpack.c.l.b16 %v591
        %v2194 = vunpack.c.h.b16 %v591
        %v2195 = vunpack.c.l.b16 %v592
        %v2196 = vunpack.c.h.b16 %v592
        %v2197 = vunpack.c.l.b16 %v593
        %v2198 = vunpack.c.h.b16 %v593
        %v2199 = vunpack.c.l.b16 %v594
        %v2200 = vunpack.c.h.b16 %v594
        %v2201 = vunpack.c.l.b16 %v595
        %v2202 = vunpack.c.h.b16 %v595
        %v2203 = vunpack.c.l.b16 %v596
        %v2204 = vunpack.c.h.b16 %v596
        %v2205 = vunpack.c.l.b16 %v597
        %v2206 = vunpack.c.h.b16 %v597
        %v2207 = vunpack.c.l.b16 %v598
        %v2208 = vunpack.c.h.b16 %v598
        %v2209 = vunpack.c.l.b16 %v599
        %v2210 = vunpack.c.h.b16 %v599
        %v2211 = vunpack.c.l.b16 %v600
        %v2212 = vunpack.c.h.b16 %v600
        %v2213 = vunpack.c.l.b16 %v601
        %v2214 = vunpack.c.h.b16 %v601
        %v2215 = vunpack.c.l.b16 %v602
        %v2216 = vunpack.c.h.b16 %v602
        %v2217 = vunpack.c.l.b16 %v603
        %v2218 = vunpack.c.h.b16 %v603
        %v2219 = vunpack.c.l.b16 %v604
        %v2220 = vunpack.c.h.b16 %v604
        %v2221 = vunpack.c.l.b16 %v605
        %v2222 = vunpack.c.h.b16 %v605
        %v2223 = vunpack.c.l.b16 %v606
        %v2224 = vunpack.c.h.b16 %v606
        %v2225 = vunpack.c.l.b16 %v607
        %v2226 = vunpack.c.h.b16 %v607
        %v2227 = vunpack.c.l.b16 %v608
        %v2228 = vunpack.c.h.b16 %v608
        %v2229 = vunpack.c.l.b16 %v609
        %v2230 = vunpack.c.h.b16 %v609
        %v2231 = vunpack.c.l.b16 %v610
        %v2232 = vunpack.c.h.b16 %v610
        %v2233 = vunpack.c.l.b16 %v611
        %v2234 = vunpack.c.h.b16 %v611
        %v2235 = vunpack.c.l.b16 %v612
        %v2236 = vunpack.c.h.b16 %v612
        %v2237 = vunpack.c.l.b16 %v613
        %v2238 = vunpack.c.h.b16 %v613
        %v2239 = vunpack.c.l.b16 %v614
        %v2240 = vunpack.c.h.b16 %v614
        %v2241 = vunpack.c.l.b16 %v615
        %v2242 = vunpack.c.h.b16 %v615
        %v2243 = vunpack.c.l.b16 %v616
        %v2244 = vunpack.c.h.b16 %v616
        %v2245 = vunpack.c.l.b16 %v617
        %v2246 = vunpack.c.h.b16 %v617
        %v2247 = vunpack.c.l.b16 %v618
        %v2248 = vunpack.c.h.b16 %v618
        %v2249 = vunpack.c.l.b16 %v619
        %v2250 = vunpack.c.h.b16 %v619
        %v2251 = vunpack.c.l.b16 %v620
        %v2252 = vunpack.c.h.b16 %v620
        %v2253 = vunpack.c.l.b16 %v621
        %v2254 = vunpack.c.h.b16 %v621
        %v2255 = vunpack.c.l.b16 %v622
        %v2256 = vunpack.c.h.b16 %v622
        %v2257 = vunpack.c.l.b16 %v623
        %v2258 = vunpack.c.h.b16 %v623
        %v2259 = vunpack.c.l.b16 %v624
        %v2260 = vunpack.c.h.b16 %v624
        %v2261 = vunpack.c.l.b16 %v625
        %v2262 = vunpack.c.h.b16 %v625
        %v2263 = vunpack.c.l.b16 %v626
        %v2264 = vunpack.c.h.b16 %v626
        %v2265 = vunpack.c.l.b16 %v627
        %v2266 = vunpack.c.h.b16 %v627
        %v2267 = vunpack.c.l.b16 %v628
        %v2268 = vunpack.c.h.b16 %v628
        %v2269 = vunpack.c.l.b16 %v629
        %v2270 = vunpack.c.h.b16 %v629
        %v2271 = vunpack.c.l.b16 %v630
        %v2272 = vunpack.c.h.b16 %v630
        %v2273 = vunpack.c.l.b16 %v631
        %v2274 = vunpack.c.h.b16 %v631
        %v2275 = vunpack.c.l.b16 %v632
        %v2276 = vunpack.c.h.b16 %v632
        %v2277 = vunpack.c.l.b16 %v633
        %v2278 = vunpack.c.h.b16 %v633
        %v2279 = vunpack.c.l.b16 %v634
        %v2280 = vunpack.c.h.b16 %v634
        %v2281 = vunpack.c.l.b16 %v635
        %v2282 = vunpack.c.h.b16 %v635
        %v2283 = vunpack.c.l.b16 %v636
        %v2284 = vunpack.c.h.b16 %v636
        %v2285 = vunpack.c.l.b16 %v637
        %v2286 = vunpack.c.h.b16 %v637
        %v2287 = vunpack.c.l.b16 %v638
        %v2288 = vunpack.c.h.b16 %v638
        %v2289 = vunpack.c.l.b16 %v639
        %v2290 = vunpack.c.h.b16 %v639
        %v2291 = vunpack.c.l.b16 %v640
        %v2292 = vunpack.c.h.b16 %v640
        %v2293 = vunpack.c.l.b16 %v641
        %v2294 = vunpack.c.h.b16 %v641
        %v2295 = vunpack.c.l.b16 %v642
        %v2296 = vunpack.c.h.b16 %v642
        %v2297 = vunpack.c.l.b16 %v643
        %v2298 = vunpack.c.h.b16 %v643
        %v2299 = vunpack.c.l.b16 %v644
        %v2300 = vunpack.c.h.b16 %v644
        %v2301 = vunpack.c.l.b16 %v645
        %v2302 = vunpack.c.h.b16 %v645
        %v2303 = vunpack.c.l.b16 %v646
        %v2304 = vunpack.c.h.b16 %v646
        %v2305 = vunpack.c.l.b16 %v647
        %v2306 = vunpack.c.h.b16 %v647
        %v2307 = vunpack.c.l.b16 %v648
        %v2308 = vunpack.c.h.b16 %v648
        %v2309 = vunpack.c.l.b16 %v649
        %v2310 = vunpack.c.h.b16 %v649
        %v2311 = vunpack.c.l.b16 %v650
        %v2312 = vunpack.c.h.b16 %v650
        %v2313 = vunpack.c.l.b16 %v651
        %v2314 = vunpack.c.h.b16 %v651
        %v2315 = vunpack.c.l.b16 %v652
        %v2316 = vunpack.c.h.b16 %v652
        %v2317 = vunpack.c.l.b16 %v653
        %v2318 = vunpack.c.h.b16 %v653
        %v2319 = vunpack.c.l.b16 %v654
        %v2320 = vunpack.c.h.b16 %v654
        %v2321 = vunpack.c.l.b16 %v655
        %v2322 = vunpack.c.h.b16 %v655
        %v2323 = vunpack.c.l.b16 %v656
        %v2324 = vunpack.c.h.b16 %v656
        %v2325 = vunpack.c.l.b16 %v657
        %v2326 = vunpack.c.h.b16 %v657
        %v2327 = vunpack.c.l.b16 %v658
        %v2328 = vunpack.c.h.b16 %v658
        %v2329 = vunpack.c.l.b16 %v659
        %v2330 = vunpack.c.h.b16 %v659
        %v2331 = vunpack.c.l.b16 %v660
        %v2332 = vunpack.c.h.b16 %v660
        %v2333 = vunpack.c.l.b16 %v661
        %v2334 = vunpack.c.h.b16 %v661
        %v2335 = vunpack.c.l.b16 %v662
        %v2336 = vunpack.c.h.b16 %v662
        %v2337 = vunpack.c.l.b16 %v663
        %v2338 = vunpack.c.h.b16 %v663
        %v2339 = vunpack.c.l.b16 %v664
        %v2340 = vunpack.c.h.b16 %v664
        %v2341 = vunpack.c.l.b16 %v665
        %v2342 = vunpack.c.h.b16 %v665
        %v2343 = vunpack.c.l.b16 %v666
        %v2344 = vunpack.c.h.b16 %v666
        %v2345 = vunpack.c.l.b16 %v667
        %v2346 = vunpack.c.h.b16 %v667
        %v2347 = vunpack.c.l.b16 %v668
        %v2348 = vunpack.c.h.b16 %v668
        %v2349 = vunpack.c.l.b16 %v669
        %v2350 = vunpack.c.h.b16 %v669
        %v2351 = vunpack.c.l.b16 %v670
        %v2352 = vunpack.c.h.b16 %v670
        %v2353 = vunpack.c.l.b16 %v671
        %v2354 = vunpack.c.h.b16 %v671
        %v2355 = vunpack.c.l.b16 %v672
        %v2356 = vunpack.c.h.b16 %v672
        %v2357 = vunpack.c.l.b16 %v673
        %v2358 = vunpack.c.h.b16 %v673
        %v2359 = vunpack.c.l.b16 %v674
        %v2360 = vunpack.c.h.b16 %v674
        %v2361 = vunpack.c.l.b16 %v675
        %v2362 = vunpack.c.h.b16 %v675
        %v2363 = vunpack.c.l.b16 %v676
        %v2364 = vunpack.c.h.b16 %v676
        %v2365 = vunpack.c.l.b16 %v677
        %v2366 = vunpack.c.h.b16 %v677
        %v2367 = vunpack.c.l.b16 %v678
        %v2368 = vunpack.c.h.b16 %v678
        %v2369 = vunpack.c.l.b16 %v679
        %v2370 = vunpack.c.h.b16 %v679
        %v2371 = vunpack.c.l.b16 %v680
        %v2372 = vunpack.c.h.b16 %v680
        %v2373 = vunpack.c.l.b16 %v681
        %v2374 = vunpack.c.h.b16 %v681
        %v2375 = vunpack.c.l.b16 %v682
        %v2376 = vunpack.c.h.b16 %v682
        %v2377 = vunpack.c.l.b16 %v683
        %v2378 = vunpack.c.h.b16 %v683
        %v2379 = vunpack.c.l.b16 %v684
        %v2380 = vunpack.c.h.b16 %v684
        %v2381 = vunpack.c.l.b16 %v685
        %v2382 = vunpack.c.h.b16 %v685
        %v2383 = vunpack.c.l.b16 %v686
        %v2384 = vunpack.c.h.b16 %v686
        %v2385 = vunpack.c.l.b16 %v687
        %v2386 = vunpack.c.h.b16 %v687
        %v2387 = vunpack.c.l.b16 %v688
        %v2388 = vunpack.c.h.b16 %v688
        %v2389 = vunpack.c.l.b16 %v689
        %v2390 = vunpack.c.h.b16 %v689
        %v2391 = vunpack.c.l.b16 %v690
        %v2392 = vunpack.c.h.b16 %v690
        %v2393 = vunpack.c.l.b16 %v691
        %v2394 = vunpack.c.h.b16 %v691
        %v2395 = vunpack.c.l.b16 %v692
        %v2396 = vunpack.c.h.b16 %v692
        %v2397 = vunpack.c.l.b16 %v693
        %v2398 = vunpack.c.h.b16 %v693
        %v2399 = vunpack.c.l.b16 %v694
        %v2400 = vunpack.c.h.b16 %v694
        %v2401 = vunpack.c.l.b16 %v695
        %v2402 = vunpack.c.h.b16 %v695
        %v2403 = vunpack.c.l.b16 %v696
        %v2404 = vunpack.c.h.b16 %v696
        %v2405 = vunpack.c.l.b16 %v697
        %v2406 = vunpack.c.h.b16 %v697
        %v2407 = vunpack.c.l.b16 %v698
        %v2408 = vunpack.c.h.b16 %v698
        %v2409 = vunpack.c.l.b16 %v699
        %v2410 = vunpack.c.h.b16 %v699
        %v2411 = vunpack.c.l.b16 %v700
        %v2412 = vunpack.c.h.b16 %v700
        %v2413 = vunpack.c.l.b16 %v701
        %v2414 = vunpack.c.h.b16 %v701
        %v2415 = vunpack.c.l.b16 %v702
        %v2416 = vunpack.c.h.b16 %v702
        %v2417 = vunpack.c.l.b16 %v703
        %v2418 = vunpack.c.h.b16 %v703
        %v2419 = vunpack.c.l.b16 %v704
        %v2420 = vunpack.c.h.b16 %v704
        %v2421 = vunpack.c.l.b16 %v705
        %v2422 = vunpack.c.h.b16 %v705
        %v2423 = vunpack.c.l.b16 %v706
        %v2424 = vunpack.c.h.b16 %v706
        %v2425 = vunpack.c.l.b16 %v707
        %v2426 = vunpack.c.h.b16 %v707
        %v2427 = vunpack.c.l.b16 %v708
        %v2428 = vunpack.c.h.b16 %v708
        %v2429 = vunpack.c.l.b16 %v709
        %v2430 = vunpack.c.h.b16 %v709
        %v2431 = vunpack.c.l.b16 %v710
        %v2432 = vunpack.c.h.b16 %v710
        %v2433 = vunpack.c.l.b16 %v711
        %v2434 = vunpack.c.h.b16 %v711
        %v2435 = vunpack.c.l.b16 %v712
        %v2436 = vunpack.c.h.b16 %v712
        %v2437 = vunpack.c.l.b16 %v713
        %v2438 = vunpack.c.h.b16 %v713
        %v2439 = vunpack.c.l.b16 %v714
        %v2440 = vunpack.c.h.b16 %v714
        %v2441 = vunpack.c.l.b16 %v715
        %v2442 = vunpack.c.h.b16 %v715
        %v2443 = vunpack.c.l.b16 %v716
        %v2444 = vunpack.c.h.b16 %v716
        %v2445 = vunpack.c.l.b16 %v717
        %v2446 = vunpack.c.h.b16 %v717
        %v2447 = vunpack.c.l.b16 %v718
        %v2448 = vunpack.c.h.b16 %v718
        %v2449 = vunpack.c.l.b16 %v719
        %v2450 = vunpack.c.h.b16 %v719
        %v2451 = vunpack.c.l.b16 %v720
        %v2452 = vunpack.c.h.b16 %v720
        %v2453 = vunpack.c.l.b16 %v721
        %v2454 = vunpack.c.h.b16 %v721
        %v2455 = vunpack.c.l.b16 %v722
        %v2456 = vunpack.c.h.b16 %v722
        %v2457 = vunpack.c.l.b16 %v723
        %v2458 = vunpack.c.h.b16 %v723
        %v2459 = vunpack.c.l.b16 %v724
        %v2460 = vunpack.c.h.b16 %v724
        %v2461 = vunpack.c.l.b16 %v725
        %v2462 = vunpack.c.h.b16 %v725
        %v2463 = vunpack.c.l.b16 %v726
        %v2464 = vunpack.c.h.b16 %v726
        %v2465 = vunpack.c.l.b16 %v727
        %v2466 = vunpack.c.h.b16 %v727
        %v2467 = vunpack.c.l.b16 %v728
        %v2468 = vunpack.c.h.b16 %v728
        %v2469 = vunpack.c.l.b16 %v729
        %v2470 = vunpack.c.h.b16 %v729
        %v2471 = vunpack.c.l.b16 %v730
        %v2472 = vunpack.c.h.b16 %v730
        %v2473 = vunpack.c.l.b16 %v731
        %v2474 = vunpack.c.h.b16 %v731
        %v2475 = vunpack.c.l.b16 %v732
        %v2476 = vunpack.c.h.b16 %v732
        %v2477 = vunpack.c.l.b16 %v733
        %v2478 = vunpack.c.h.b16 %v733
        %v2479 = vunpack.c.l.b16 %v734
        %v2480 = vunpack.c.h.b16 %v734
        %v2481 = vunpack.c.l.b16 %v735
        %v2482 = vunpack.c.h.b16 %v735
        %v2483 = vunpack.c.l.b16 %v736
        %v2484 = vunpack.c.h.b16 %v736
        %v2485 = vunpack.c.l.b16 %v737
        %v2486 = vunpack.c.h.b16 %v737
        %v2487 = vunpack.c.l.b16 %v738
        %v2488 = vunpack.c.h.b16 %v738
        %v2489 = vunpack.c.l.b16 %v739
        %v2490 = vunpack.c.h.b16 %v739
        %v2491 = vunpack.c.l.b16 %v740
        %v2492 = vunpack.c.h.b16 %v740
        %v2493 = vunpack.c.l.b16 %v741
        %v2494 = vunpack.c.h.b16 %v741
        %v2495 = vunpack.c.l.b16 %v742
        %v2496 = vunpack.c.h.b16 %v742
        %v2497 = vunpack.c.l.b16 %v743
        %v2498 = vunpack.c.h.b16 %v743
        %v2499 = vunpack.c.l.b16 %v744
        %v2500 = vunpack.c.h.b16 %v744
        %v2501 = vunpack.c.l.b16 %v745
        %v2502 = vunpack.c.h.b16 %v745
        %v2503 = vunpack.c.l.b16 %v746
        %v2504 = vunpack.c.h.b16 %v746
        %v2505 = vunpack.c.l.b16 %v747
        %v2506 = vunpack.c.h.b16 %v747
        %v2507 = vunpack.c.l.b16 %v748
        %v2508 = vunpack.c.h.b16 %v748
        %v2509 = vunpack.c.l.b16 %v749
        %v2510 = vunpack.c.h.b16 %v749
        %v2511 = vunpack.c.l.b16 %v750
        %v2512 = vunpack.c.h.b16 %v750
        %v2513 = vunpack.c.l.b16 %v751
        %v2514 = vunpack.c.h.b16 %v751
        %v2515 = vunpack.c.l.b16 %v752
        %v2516 = vunpack.c.h.b16 %v752
        %v2517 = vunpack.c.l.b16 %v753
        %v2518 = vunpack.c.h.b16 %v753
        %v2519 = vunpack.c.l.b16 %v754
        %v2520 = vunpack.c.h.b16 %v754
        %v2521 = vunpack.c.l.b16 %v755
        %v2522 = vunpack.c.h.b16 %v755
        %v2523 = vunpack.c.l.b16 %v756
        %v2524 = vunpack.c.h.b16 %v756
        %v2525 = vunpack.c.l.b16 %v757
        %v2526 = vunpack.c.h.b16 %v757
        %v2527 = vunpack.c.l.b16 %v758
        %v2528 = vunpack.c.h.b16 %v758
        %v2529 = vunpack.c.l.b16 %v759
        %v2530 = vunpack.c.h.b16 %v759
        %v2531 = vunpack.c.l.b16 %v760
        %v2532 = vunpack.c.h.b16 %v760
        %v2533 = vunpack.c.l.b16 %v761
        %v2534 = vunpack.c.h.b16 %v761
        %v2535 = vunpack.c.l.b16 %v762
        %v2536 = vunpack.c.h.b16 %v762
        %v2537 = vunpack.c.l.b16 %v763
        %v2538 = vunpack.c.h.b16 %v763
        %v2539 = vunpack.c.l.b16 %v764
        %v2540 = vunpack.c.h.b16 %v764
        %v2541 = vunpack.c.l.b16 %v765
        %v2542 = vunpack.c.h.b16 %v765
        %v2543 = vunpack.c.l.b16 %v766
        %v2544 = vunpack.c.h.b16 %v766
        %v2545 = vunpack.c.l.b16 %v767
        %v2546 = vunpack.c.h.b16 %v767
        %v2547 = vunpack.c.l.b16 %v768
        %v2548 = vunpack.c.h.b16 %v768
        %v2549 = vunpack.c.l.b16 %v769
        %v2550 = vunpack.c.h.b16 %v769
        %v2551 = vunpack.c.l.b16 %v770
        %v2552 = vunpack.c.h.b16 %v770
        %v2553 = vunpack.c.l.b16 %v771
        %v2554 = vunpack.c.h.b16 %v771
        %v2555 = vunpack.c.l.b16 %v772
        %v2556 = vunpack.c.h.b16 %v772
        %v2557 = vunpack.c.l.b16 %v773
        %v2558 = vunpack.c.h.b16 %v773
        %v2559 = vunpack.c.l.b16 %v774
        %v2560 = vunpack.c.h.b16 %v774
        %v2561 = vunpack.c.l.b16 %v775
        %v2562 = vunpack.c.h.b16 %v775
        %v2563 = vunpack.c.l.b16 %v776
        %v2564 = vunpack.c.h.b16 %v776
        %v2565 = vunpack.c.l.b16 %v777
        %v2566 = vunpack.c.h.b16 %v777
        %v2567 = vunpack.c.l.b16 %v778
        %v2568 = vunpack.c.h.b16 %v778
        %v2569 = vunpack.c.l.b16 %v779
        %v2570 = vunpack.c.h.b16 %v779
        %v2571 = vunpack.c.l.b16 %v780
        %v2572 = vunpack.c.h.b16 %v780
        %v2573 = vunpack.c.l.b16 %v781
        %v2574 = vunpack.c.h.b16 %v781
        %v2575 = vunpack.c.l.b16 %v782
        %v2576 = vunpack.c.h.b16 %v782
        %v2577 = vunpack.c.l.b16 %v783
        %v2578 = vunpack.c.h.b16 %v783
        %v2579 = vunpack.c.l.b16 %v784
        %v2580 = vunpack.c.h.b16 %v784
        %v2581 = vunpack.c.l.b16 %v785
        %v2582 = vunpack.c.h.b16 %v785
        %v2583 = vunpack.c.l.b16 %v786
        %v2584 = vunpack.c.h.b16 %v786
        %v2585 = vunpack.c.l.b16 %v787
        %v2586 = vunpack.c.h.b16 %v787
        %v2587 = vunpack.c.l.b16 %v788
        %v2588 = vunpack.c.h.b16 %v788
        %v2589 = vunpack.c.l.b16 %v789
        %v2590 = vunpack.c.h.b16 %v789
        %v2591 = vunpack.c.l.b16 %v790
        %v2592 = vunpack.c.h.b16 %v790
        %v2593 = vunpack.c.l.b16 %v791
        %v2594 = vunpack.c.h.b16 %v791
        %v2595 = vunpack.c.l.b16 %v792
        %v2596 = vunpack.c.h.b16 %v792
        %v2597 = vunpack.c.l.b16 %v793
        %v2598 = vunpack.c.h.b16 %v793
        %v2599 = vunpack.c.l.b16 %v794
        %v2600 = vunpack.c.h.b16 %v794
        %v2601 = vunpack.c.l.b16 %v795
        %v2602 = vunpack.c.h.b16 %v795
        %v2603 = vunpack.c.l.b16 %v796
        %v2604 = vunpack.c.h.b16 %v796
        %v2605 = vunpack.c.l.b16 %v797
        %v2606 = vunpack.c.h.b16 %v797
        %v2607 = vunpack.c.l.b16 %v798
        %v2608 = vunpack.c.h.b16 %v798
        %v2609 = vunpack.c.l.b16 %v799
        %v2610 = vunpack.c.h.b16 %v799
        %v2611 = vunpack.c.l.b16 %v800
        %v2612 = vunpack.c.h.b16 %v800
        %v2613 = vunpack.c.l.b16 %v801
        %v2614 = vunpack.c.h.b16 %v801
        %v2615 = vunpack.c.l.b16 %v802
        %v2616 = vunpack.c.h.b16 %v802
        %v2617 = vunpack.c.l.b16 %v803
        %v2618 = vunpack.c.h.b16 %v803
        %v2619 = vunpack.c.l.b16 %v804
        %v2620 = vunpack.c.h.b16 %v804
        %v2621 = vunpack.c.l.b16 %v805
        %v2622 = vunpack.c.h.b16 %v805
        %v2623 = vunpack.c.l.b16 %v806
        %v2624 = vunpack.c.h.b16 %v806
        %v2625 = vunpack.c.l.b16 %v807
        %v2626 = vunpack.c.h.b16 %v807
        %v2627 = vunpack.c.l.b16 %v808
        %v2628 = vunpack.c.h.b16 %v808
        %v2629 = vunpack.c.l.b16 %v809
        %v2630 = vunpack.c.h.b16 %v809
        %v2631 = vunpack.c.l.b16 %v810
        %v2632 = vunpack.c.h.b16 %v810
        %v2633 = vunpack.c.l.b16 %v811
        %v2634 = vunpack.c.h.b16 %v811
        %v2635 = vunpack.c.l.b16 %v812
        %v2636 = vunpack.c.h.b16 %v812
        %v2637 = vunpack.c.l.b16 %v813
        %v2638 = vunpack.c.h.b16 %v813
        %v2639 = vunpack.c.l.b16 %v814
        %v2640 = vunpack.c.h.b16 %v814
        %v2641 = vunpack.c.l.b16 %v815
        %v2642 = vunpack.c.h.b16 %v815
        %v2643 = vunpack.c.l.b16 %v816
        %v2644 = vunpack.c.h.b16 %v816
        %v2645 = vunpack.c.l.b16 %v817
        %v2646 = vunpack.c.h.b16 %v817
        %v2647 = vunpack.c.l.b16 %v818
        %v2648 = vunpack.c.h.b16 %v818
        %v2649 = vunpack.c.l.b16 %v819
        %v2650 = vunpack.c.h.b16 %v819
        %v2651 = vunpack.c.l.b16 %v820
        %v2652 = vunpack.c.h.b16 %v820
        %v2653 = vunpack.c.l.b16 %v821
        %v2654 = vunpack.c.h.b16 %v821
        %v2655 = vunpack.c.l.b16 %v822
        %v2656 = vunpack.c.h.b16 %v822
        %v2657 = vunpack.c.l.b16 %v823
        %v2658 = vunpack.c.h.b16 %v823
        %v2659 = vunpack.c.l.b16 %v824
        %v2660 = vunpack.c.h.b16 %v824
        %v2661 = vunpack.c.l.b16 %v825
        %v2662 = vunpack.c.h.b16 %v825
        %v2663 = vunpack.c.l.b16 %v826
        %v2664 = vunpack.c.h.b16 %v826
        %v2665 = vunpack.c.l.b16 %v827
        %v2666 = vunpack.c.h.b16 %v827
        %v2667 = vunpack.c.l.b16 %v828
        %v2668 = vunpack.c.h.b16 %v828
        %v2669 = vunpack.c.l.b16 %v829
        %v2670 = vunpack.c.h.b16 %v829
        %v2671 = vunpack.c.l.b16 %v830
        %v2672 = vunpack.c.h.b16 %v830
        %v2673 = vunpack.c.l.b16 %v831
        %v2674 = vunpack.c.h.b16 %v831
        %v2675 = vunpack.c.l.b16 %v832
        %v2676 = vunpack.c.h.b16 %v832
        %v2677 = vunpack.c.l.b16 %v833
        %v2678 = vunpack.c.h.b16 %v833
        %v2679 = vunpack.c.l.b16 %v834
        %v2680 = vunpack.c.h.b16 %v834
        %v2681 = vunpack.c.l.b16 %v835
        %v2682 = vunpack.c.h.b16 %v835
        %v2683 = vunpack.c.l.b16 %v836
        %v2684 = vunpack.c.h.b16 %v836
        %v2685 = vunpack.c.l.b16 %v837
        %v2686 = vunpack.c.h.b16 %v837
        %v2687 = vunpack.c.l.b16 %v838
        %v2688 = vunpack.c.h.b16 %v838
        %v2689 = vunpack.c.l.b16 %v839
        %v2690 = vunpack.c.h.b16 %v839
        %v2691 = vunpack.c.l.b16 %v840
        %v2692 = vunpack.c.h.b16 %v840
        %v2693 = vunpack.c.l.b16 %v841
        %v2694 = vunpack.c.h.b16 %v841
        %v2695 = vunpack.c.l.b16 %v842
        %v2696 = vunpack.c.h.b16 %v842
        %v2697 = vunpack.c.l.b16 %v843
        %v2698 = vunpack.c.h.b16 %v843
        %v2699 = vunpack.c.l.b16 %v844
        %v2700 = vunpack.c.h.b16 %v844
        %v2701 = vunpack.c.l.b16 %v845
        %v2702 = vunpack.c.h.b16 %v845
        %v2703 = vunpack.c.l.b16 %v846
        %v2704 = vunpack.c.h.b16 %v846
        %v2705 = vunpack.c.l.b16 %v847
        %v2706 = vunpack.c.h.b16 %v847
        %v2707 = vunpack.c.l.b16 %v848
        %v2708 = vunpack.c.h.b16 %v848
        %v2709 = vunpack.c.l.b16 %v849
        %v2710 = vunpack.c.h.b16 %v849
        %v2711 = vunpack.c.l.b16 %v850
        %v2712 = vunpack.c.h.b16 %v850
        %v2713 = vunpack.c.l.b16 %v851
        %v2714 = vunpack.c.h.b16 %v851
        %v2715 = vunpack.c.l.b16 %v852
        %v2716 = vunpack.c.h.b16 %v852
        %v2717 = vunpack.c.l.b16 %v853
        %v2718 = vunpack.c.h.b16 %v853
        %v2719 = vunpack.c.l.b16 %v854
        %v2720 = vunpack.c.h.b16 %v854
        %v2721 = vunpack.c.l.b16 %v855
        %v2722 = vunpack.c.h.b16 %v855
        %v2723 = vunpack.c.l.b16 %v856
        %v2724 = vunpack.c.h.b16 %v856
        %v2725 = vunpack.c.l.b16 %v857
        %v2726 = vunpack.c.h.b16 %v857
        %v2727 = vunpack.c.l.b16 %v858
        %v2728 = vunpack.c.h.b16 %v858
        %v2729 = vunpack.c.l.b16 %v859
        %v2730 = vunpack.c.h.b16 %v859
        %v2731 = vunpack.c.l.b16 %v860
        %v2732 = vunpack.c.h.b16 %v860
        %v2733 = vunpack.c.l.b16 %v861
        %v2734 = vunpack.c.h.b16 %v861
        %v2735 = vunpack.c.l.b16 %v862
        %v2736 = vunpack.c.h.b16 %v862
        %v2737 = vunpack.c.l.b16 %v863
        %v2738 = vunpack.c.h.b16 %v863
        %v2739 = vunpack.c.l.b16 %v864
        %v2740 = vunpack.c.h.b16 %v864
        %v2741 = vunpack.c.l.b16 %v865
        %v2742 = vunpack.c.h.b16 %v865
        %v2743 = vunpack.c.l.b16 %v866
        %v2744 = vunpack.c.h.b16 %v866
        %v2745 = vunpack.c.l.b16 %v867
        %v2746 = vunpack.c.h.b16 %v867
        %v2747 = vunpack.c.l.b16 %v868
        %v2748 = vunpack.c.h.b16 %v868
        %v2749 = vunpack.c.l.b16 %v869
        %v2750 = vunpack.c.h.b16 %v869
        %v2751 = vunpack.c.l.b16 %v870
        %v2752 = vunpack.c.h.b16 %v870
        %v2753 = vunpack.c.l.b16 %v871
        %v2754 = vunpack.c.h.b16 %v871
        %v2755 = vunpack.c.l.b16 %v872
        %v2756 = vunpack.c.h.b16 %v872
        %v2757 = vunpack.c.l.b16 %v873
        %v2758 = vunpack.c.h.b16 %v873
        %v2759 = vunpack.c.l.b16 %v874
        %v2760 = vunpack.c.h.b16 %v874
        %v2761 = vunpack.c.l.b16 %v875
        %v2762 = vunpack.c.h.b16 %v875
        %v2763 = vunpack.c.l.b16 %v876
        %v2764 = vunpack.c.h.b16 %v876
        %v2765 = vunpack.c.l.b16 %v877
        %v2766 = vunpack.c.h.b16 %v877
        %v2767 = vunpack.c.l.b16 %v878
        %v2768 = vunpack.c.h.b16 %v878
        %v2769 = vunpack.c.l.b16 %v879
        %v2770 = vunpack.c.h.b16 %v879
        %v2771 = vunpack.c.l.b16 %v880
        %v2772 = vunpack.c.h.b16 %v880
        %v2773 = vunpack.c.l.b16 %v881
        %v2774 = vunpack.c.h.b16 %v881
        %v2775 = vunpack.c.l.b16 %v882
        %v2776 = vunpack.c.h.b16 %v882
        %v2777 = vunpack.c.l.b16 %v883
        %v2778 = vunpack.c.h.b16 %v883
        %v2779 = vunpack.c.l.b16 %v884
        %v2780 = vunpack.c.h.b16 %v884
        %v2781 = vunpack.c.l.b16 %v885
        %v2782 = vunpack.c.h.b16 %v885
        %v2783 = vunpack.c.l.b16 %v886
        %v2784 = vunpack.c.h.b16 %v886
        %v2785 = vunpack.c.l.b16 %v887
        %v2786 = vunpack.c.h.b16 %v887
        %v2787 = vunpack.c.l.b16 %v888
        %v2788 = vunpack.c.h.b16 %v888
        %v2789 = vunpack.c.l.b16 %v889
        %v2790 = vunpack.c.h.b16 %v889
        %v2791 = vunpack.c.l.b16 %v890
        %v2792 = vunpack.c.h.b16 %v890
        %v2793 = vunpack.c.l.b16 %v891
        %v2794 = vunpack.c.h.b16 %v891
        %v2795 = vunpack.c.l.b16 %v892
        %v2796 = vunpack.c.h.b16 %v892
        %v2797 = vunpack.c.l.b16 %v893
        %v2798 = vunpack.c.h.b16 %v893
        %v2799 = vunpack.c.l.b16 %v894
        %v2800 = vunpack.c.h.b16 %v894
        %v2801 = vunpack.c.l.b16 %v895
        %v2802 = vunpack.c.h.b16 %v895
        %v2803 = vunpack.c.l.b16 %v896
        %v2804 = vunpack.c.h.b16 %v896
        %v2805 = vunpack.c.l.b16 %v897
        %v2806 = vunpack.c.h.b16 %v897
        %v2807 = vunpack.c.l.b16 %v898
        %v2808 = vunpack.c.h.b16 %v898
        %v2809 = vunpack.c.l.b16 %v899
        %v2810 = vunpack.c.h.b16 %v899
        %v2811 = vunpack.c.l.b16 %v900
        %v2812 = vunpack.c.h.b16 %v900
        %v2813 = vunpack.c.l.b16 %v901
        %v2814 = vunpack.c.h.b16 %v901
        %v2815 = vunpack.c.l.b16 %v902
        %v2816 = vunpack.c.h.b16 %v902
        %v2817 = vunpack.c.l.b16 %v903
        %v2818 = vunpack.c.h.b16 %v903
        %v2819 = vunpack.c.l.b16 %v904
        %v2820 = vunpack.c.h.b16 %v904
        %v2821 = vunpack.c.l.b16 %v905
        %v2822 = vunpack.c.h.b16 %v905
        %v2823 = vunpack.c.l.b16 %v906
        %v2824 = vunpack.c.h.b16 %v906
        %v2825 = vunpack.c.l.b16 %v907
        %v2826 = vunpack.c.h.b16 %v907
        %v2827 = vunpack.c.l.b16 %v908
        %v2828 = vunpack.c.h.b16 %v908
        %v2829 = vunpack.c.l.b16 %v909
        %v2830 = vunpack.c.h.b16 %v909
        %v2831 = vunpack.c.l.b16 %v910
        %v2832 = vunpack.c.h.b16 %v910
        %v2833 = vunpack.c.l.b16 %v911
        %v2834 = vunpack.c.h.b16 %v911
        %v2835 = vunpack.c.l.b16 %v912
        %v2836 = vunpack.c.h.b16 %v912
        %v2837 = vunpack.c.l.b16 %v913
        %v2838 = vunpack.c.h.b16 %v913
        %v2839 = vunpack.c.l.b16 %v914
        %v2840 = vunpack.c.h.b16 %v914
        %v2841 = vunpack.c.l.b16 %v915
        %v2842 = vunpack.c.h.b16 %v915
        %v2843 = vunpack.c.l.b16 %v916
        %v2844 = vunpack.c.h.b16 %v916
        %v2845 = vunpack.c.l.b16 %v917
        %v2846 = vunpack.c.h.b16 %v917
        %v2847 = vunpack.c.l.b16 %v918
        %v2848 = vunpack.c.h.b16 %v918
        %v2849 = vunpack.c.l.b16 %v919
        %v2850 = vunpack.c.h.b16 %v919
        %v2851 = vunpack.c.l.b16 %v920
        %v2852 = vunpack.c.h.b16 %v920
        %v2853 = vunpack.c.l.b16 %v921
        %v2854 = vunpack.c.h.b16 %v921
        %v2855 = vunpack.c.l.b16 %v922
        %v2856 = vunpack.c.h.b16 %v922
        %v2857 = vunpack.c.l.b16 %v923
        %v2858 = vunpack.c.h.b16 %v923
        %v2859 = vunpack.c.l.b16 %v924
        %v2860 = vunpack.c.h.b16 %v924
        %v2861 = vunpack.c.l.b16 %v925
        %v2862 = vunpack.c.h.b16 %v925
        %v2863 = vunpack.c.l.b16 %v926
        %v2864 = vunpack.c.h.b16 %v926
        %v2865 = vunpack.c.l.b16 %v927
        %v2866 = vunpack.c.h.b16 %v927
        %v2867 = vunpack.c.l.b16 %v928
        %v2868 = vunpack.c.h.b16 %v928
        %v2869 = vunpack.c.l.b16 %v929
        %v2870 = vunpack.c.h.b16 %v929
        %v2871 = vunpack.c.l.b16 %v930
        %v2872 = vunpack.c.h.b16 %v930
        %v2873 = vunpack.c.l.b16 %v931
        %v2874 = vunpack.c.h.b16 %v931
        %v2875 = vunpack.c.l.b16 %v932
        %v2876 = vunpack.c.h.b16 %v932
        %v2877 = vunpack.c.l.b16 %v933
        %v2878 = vunpack.c.h.b16 %v933
        %v2879 = vunpack.c.l.b16 %v934
        %v2880 = vunpack.c.h.b16 %v934
        %v2881 = vunpack.c.l.b16 %v935
        %v2882 = vunpack.c.h.b16 %v935
        %v2883 = vunpack.c.l.b16 %v936
        %v2884 = vunpack.c.h.b16 %v936
        %v2885 = vunpack.c.l.b16 %v937
        %v2886 = vunpack.c.h.b16 %v937
        %v2887 = vunpack.c.l.b16 %v938
        %v2888 = vunpack.c.h.b16 %v938
        %v2889 = vunpack.c.l.b16 %v939
        %v2890 = vunpack.c.h.b16 %v939
        %v2891 = vunpack.c.l.b16 %v940
        %v2892 = vunpack.c.h.b16 %v940
        %v2893 = vunpack.c.l.b16 %v941
        %v2894 = vunpack.c.h.b16 %v941
        %v2895 = vunpack.c.l.b16 %v942
        %v2896 = vunpack.c.h.b16 %v942
        %v2897 = vunpack.c.l.b16 %v943
        %v2898 = vunpack.c.h.b16 %v943
        %v2899 = vunpack.c.l.b16 %v944
        %v2900 = vunpack.c.h.b16 %v944
        %v2901 = vunpack.c.l.b16 %v945
        %v2902 = vunpack.c.h.b16 %v945
        %v2903 = vunpack.c.l.b16 %v946
        %v2904 = vunpack.c.h.b16 %v946
        %v2905 = vunpack.c.l.b16 %v947
        %v2906 = vunpack.c.h.b16 %v947
        %v2907 = vunpack.c.l.b16 %v948
        %v2908 = vunpack.c.h.b16 %v948
        %v2909 = vunpack.c.l.b16 %v949
        %v2910 = vunpack.c.h.b16 %v949
        %v2911 = vunpack.c.l.b16 %v950
        %v2912 = vunpack.c.h.b16 %v950
        %v2913 = vunpack.c.l.b16 %v951
        %v2914 = vunpack.c.h.b16 %v951
        %v2915 = vunpack.c.l.b16 %v952
        %v2916 = vunpack.c.h.b16 %v952
        %v2917 = vunpack.c.l.b16 %v953
        %v2918 = vunpack.c.h.b16 %v953
        %v2919 = vunpack.c.l.b16 %v954
        %v2920 = vunpack.c.h.b16 %v954
        %v2921 = vunpack.c.l.b16 %v955
        %v2922 = vunpack.c.h.b16 %v955
        %v2923 = vunpack.c.l.b16 %v956
        %v2924 = vunpack.c.h.b16 %v956
        %v2925 = vunpack.c.l.b16 %v957
        %v2926 = vunpack.c.h.b16 %v957
        %v2927 = vunpack.c.l.b16 %v958
        %v2928 = vunpack.c.h.b16 %v958
        %v2929 = vunpack.c.l.b16 %v959
        %v2930 = vunpack.c.h.b16 %v959
        %v2931 = vunpack.c.l.b16 %v960
        %v2932 = vunpack.c.h.b16 %v960
        %v2933 = vunpack.c.l.b16 %v961
        %v2934 = vunpack.c.h.b16 %v961
        %v2935 = vunpack.c.l.b16 %v962
        %v2936 = vunpack.c.h.b16 %v962
        %v2937 = vunpack.c.l.b16 %v963
        %v2938 = vunpack.c.h.b16 %v963
        %v2939 = vunpack.c.l.b16 %v964
        %v2940 = vunpack.c.h.b16 %v964
        %v2941 = vunpack.c.l.b16 %v965
        %v2942 = vunpack.c.h.b16 %v965
        %v2943 = vunpack.c.l.b16 %v966
        %v2944 = vunpack.c.h.b16 %v966
        %v2945 = vunpack.c.l.b16 %v967
        %v2946 = vunpack.c.h.b16 %v967
        %v2947 = vunpack.c.l.b16 %v968
        %v2948 = vunpack.c.h.b16 %v968
        %v2949 = vunpack.c.l.b16 %v969
        %v2950 = vunpack.c.h.b16 %v969
        %v2951 = vunpack.c.l.b16 %v970
        %v2952 = vunpack.c.h.b16 %v970
        %v2953 = vunpack.c.l.b16 %v971
        %v2954 = vunpack.c.h.b16 %v971
        %v2955 = vunpack.c.l.b16 %v972
        %v2956 = vunpack.c.h.b16 %v972
        %v2957 = vunpack.c.l.b16 %v973
        %v2958 = vunpack.c.h.b16 %v973
        %v2959 = vunpack.c.l.b16 %v974
        %v2960 = vunpack.c.h.b16 %v974
        %v2961 = vunpack.c.l.b16 %v975
        %v2962 = vunpack.c.h.b16 %v975
        %v2963 = vunpack.c.l.b16 %v976
        %v2964 = vunpack.c.h.b16 %v976
        %v2965 = vunpack.c.l.b16 %v977
        %v2966 = vunpack.c.h.b16 %v977
        %v2967 = vunpack.c.l.b16 %v978
        %v2968 = vunpack.c.h.b16 %v978
        %v2969 = vunpack.c.l.b16 %v979
        %v2970 = vunpack.c.h.b16 %v979
        %v2971 = vunpack.c.l.b16 %v980
        %v2972 = vunpack.c.h.b16 %v980
        %v2973 = vunpack.c.l.b16 %v981
        %v2974 = vunpack.c.h.b16 %v981
        %v2975 = vunpack.c.l.b16 %v982
        %v2976 = vunpack.c.h.b16 %v982
        %v2977 = vunpack.c.l.b16 %v983
        %v2978 = vunpack.c.h.b16 %v983
        %v2979 = vunpack.c.l.b16 %v984
        %v2980 = vunpack.c.h.b16 %v984
        %v2981 = vunpack.c.l.b16 %v985
        %v2982 = vunpack.c.h.b16 %v985
        %v2983 = vunpack.c.l.b16 %v986
        %v2984 = vunpack.c.h.b16 %v986
        %v2985 = vunpack.c.l.b16 %v987
        %v2986 = vunpack.c.h.b16 %v987
        %v2987 = vunpack.c.l.b16 %v988
        %v2988 = vunpack.c.h.b16 %v988
        %v2989 = vunpack.c.l.b16 %v989
        %v2990 = vunpack.c.h.b16 %v989
        %v2991 = vunpack.c.l.b16 %v990
        %v2992 = vunpack.c.h.b16 %v990
        %v2993 = vunpack.c.l.b16 %v991
        %v2994 = vunpack.c.h.b16 %v991
        %v2995 = vunpack.c.l.b16 %v992
        %v2996 = vunpack.c.h.b16 %v992
        %v2997 = vunpack.c.l.b16 %v993
        %v2998 = vunpack.c.h.b16 %v993
        %v2999 = vunpack.c.l.b16 %v994
        %v3000 = vunpack.c.h.b16 %v994
        %v3001 = vunpack.c.l.b16 %v995
        %v3002 = vunpack.c.h.b16 %v995
        %v3003 = vunpack.c.l.b16 %v996
        %v3004 = vunpack.c.h.b16 %v996
        %v3005 = vunpack.c.l.b16 %v997
        %v3006 = vunpack.c.h.b16 %v997
        %v3007 = vunpack.c.l.b16 %v998
        %v3008 = vunpack.c.h.b16 %v998
        %v3009 = vunpack.c.l.b16 %v999
        %v3010 = vunpack.c.h.b16 %v999
        %v3011 = vunpack.c.l.b16 %v1000
        %v3012 = vunpack.c.h.b16 %v1000
        %v3013 = vunpack.c.l.b16 %v1001
        %v3014 = vunpack.c.h.b16 %v1001
        %v3015 = vunpack.c.l.b16 %v1002
        %v3016 = vunpack.c.h.b16 %v1002
        %v3017 = vunpack.c.l.b16 %v1003
        %v3018 = vunpack.c.h.b16 %v1003
        %v3019 = vunpack.c.l.b16 %v1004
        %v3020 = vunpack.c.h.b16 %v1004
        %v3021 = vunpack.c.l.b16 %v1005
        %v3022 = vunpack.c.h.b16 %v1005
        %v3023 = vunpack.c.l.b16 %v1006
        %v3024 = vunpack.c.h.b16 %v1006
        %v3025 = vunpack.c.l.b16 %v1007
        %v3026 = vunpack.c.h.b16 %v1007
        %v3027 = vunpack.c.l.b16 %v1008
        %v3028 = vunpack.c.h.b16 %v1008
        %v3029 = vunpack.c.l.b16 %v1009
        %v3030 = vunpack.c.h.b16 %v1009
        %v3031 = vunpack.c.l.b16 %v1010
        %v3032 = vunpack.c.h.b16 %v1010
        %v3033 = vunpack.c.l.b16 %v1011
        %v3034 = vunpack.c.h.b16 %v1011
        %v3035 = vunpack.c.l.b16 %v1012
        %v3036 = vunpack.c.h.b16 %v1012
        %v3037 = vunpack.c.l.b16 %v1013
        %v3038 = vunpack.c.h.b16 %v1013
        %v3039 = vunpack.c.l.b16 %v1014
        %v3040 = vunpack.c.h.b16 %v1014
        %v3041 = vunpack.c.l.b16 %v1015
        %v3042 = vunpack.c.h.b16 %v1015
        %v3043 = vunpack.c.l.b16 %v1016
        %v3044 = vunpack.c.h.b16 %v1016
        %v3045 = vunpack.c.l.b16 %v1017
        %v3046 = vunpack.c.h.b16 %v1017
        %v3047 = vunpack.c.l.b16 %v1018
        %v3048 = vunpack.c.h.b16 %v1018
        %v3049 = vunpack.c.l.b16 %v1019
        %v3050 = vunpack.c.h.b16 %v1019
        %v3051 = vunpack.c.l.b16 %v1020
        %v3052 = vunpack.c.h.b16 %v1020
        %v3053 = vunpack.c.l.b16 %v1021
        %v3054 = vunpack.c.h.b16 %v1021
        %v3055 = vunpack.c.l.b16 %v1022
        %v3056 = vunpack.c.h.b16 %v1022
        %v3057 = vunpack.c.l.b16 %v1023
        %v3058 = vunpack.c.h.b16 %v1023
        %v3059 = vunpack.c.l.b16 %v1024
        %v3060 = vunpack.c.h.b16 %v1024
        %v3061 = vunpack.c.l.b16 %v1025
        %v3062 = vunpack.c.h.b16 %v1025
        %v3063 = vunpack.c.l.b16 %v1026
        %v3064 = vunpack.c.h.b16 %v1026
        %v3065 = vunpack.c.l.b16 %v1027
        %v3066 = vunpack.c.h.b16 %v1027
        %v3067 = vunpack.c.l.b16 %v1028
        %v3068 = vunpack.c.h.b16 %v1028
        %v3069 = vunpack.c.l.b16 %v1029
        %v3070 = vunpack.c.h.b16 %v1029
        %v3071 = vunpack.c.l.b16 %v1030
        %v3072 = vunpack.c.h.b16 %v1030
        %v3073 = vunpack.c.l.b16 %v1031
        %v3074 = vunpack.c.h.b16 %v1031
        %v3075 = vunpack.c.l.b16 %v1032
        %v3076 = vunpack.c.h.b16 %v1032
        %v3077 = vunpack.c.l.b16 %v1033
        %v3078 = vunpack.c.h.b16 %v1033
        %v3079 = vunpack.c.l.b16 %v1034
        %v3080 = vunpack.c.h.b16 %v1034
        %v3081 = vunpack.c.l.b16 %v1035
        %v3082 = vunpack.c.h.b16 %v1035
        %v3083 = vunpack.c.l.b16 %v1036
        %v3084 = vunpack.c.h.b16 %v1036
        %v3085 = vunpack.c.l.b16 %v1037
        %v3086 = vunpack.c.h.b16 %v1037
        %v3087 = vunpack.c.l.b16 %v1038
        %v3088 = vunpack.c.h.b16 %v1038
        %v3089 = vunpack.c.l.b16 %v1039
        %v3090 = vunpack.c.h.b16 %v1039
        %v3091 = vunpack.c.l.b16 %v1040
        %v3092 = vunpack.c.h.b16 %v1040
        %v3093 = vunpack.c.l.b16 %v1041
        %v3094 = vunpack.c.h.b16 %v1041
        %v3095 = vunpack.c.l.b16 %v1042
        %v3096 = vunpack.c.h.b16 %v1042
        %v3097 = vunpack.c.l.b16 %v1043
        %v3098 = vunpack.c.h.b16 %v1043
        %v3099 = vunpack.c.l.b16 %v1044
        %v3100 = vunpack.c.h.b16 %v1044
        %v3101 = vunpack.c.l.b16 %v1045
        %v3102 = vunpack.c.h.b16 %v1045
        %v3103 = vunpack.c.l.b16 %v1046
        %v3104 = vunpack.c.h.b16 %v1046
        %v3105 = vunpack.c.l.b16 %v1047
        %v3106 = vunpack.c.h.b16 %v1047
        %v3107 = vunpack.c.l.b16 %v1048
        %v3108 = vunpack.c.h.b16 %v1048
        %v3109 = vunpack.c.l.b16 %v1049
        %v3110 = vunpack.c.h.b16 %v1049
        %v3111 = vunpack.c.l.b16 %v1050
        %v3112 = vunpack.c.h.b16 %v1050
        %v3113 = vunpack.c.l.b16 %v1051
        %v3114 = vunpack.c.h.b16 %v1051
        %v3115 = vunpack.c.l.b16 %v1052
        %v3116 = vunpack.c.h.b16 %v1052
        %v3117 = vunpack.c.l.b16 %v1053
        %v3118 = vunpack.c.h.b16 %v1053
        %v3119 = vunpack.c.l.b16 %v1054
        %v3120 = vunpack.c.h.b16 %v1054
        %v3121 = vunpack.c.l.b16 %v1055
        %v3122 = vunpack.c.h.b16 %v1055
        %v3123 = vunpack.c.l.b16 %v1056
        %v3124 = vunpack.c.h.b16 %v1056
        %v3125 = vunpack.c.l.b16 %v1057
        %v3126 = vunpack.c.h.b16 %v1057
        %v3127 = vunpack.c.l.b16 %v1058
        %v3128 = vunpack.c.h.b16 %v1058
        %v3129 = vunpack.c.l.b16 %v1059
        %v3130 = vunpack.c.h.b16 %v1059
        %v3131 = vunpack.c.l.b16 %v1060
        %v3132 = vunpack.c.h.b16 %v1060
        %v3133 = vunpack.c.l.b16 %v1061
        %v3134 = vunpack.c.h.b16 %v1061
        %v3135 = vunpack.c.l.b16 %v1062
        %v3136 = vunpack.c.h.b16 %v1062
        %v3137 = vunpack.c.l.b16 %v1063
        %v3138 = vunpack.c.h.b16 %v1063
        %v3139 = vunpack.c.l.b16 %v1064
        %v3140 = vunpack.c.h.b16 %v1064
        %v3141 = vunpack.c.l.b16 %v1065
        %v3142 = vunpack.c.h.b16 %v1065
        %v3143 = vunpack.c.l.b16 %v1066
        %v3144 = vunpack.c.h.b16 %v1066
        %v3145 = vunpack.c.l.b16 %v1067
        %v3146 = vunpack.c.h.b16 %v1067
        %v3147 = vunpack.c.l.b16 %v1068
        %v3148 = vunpack.c.h.b16 %v1068
        %v3149 = vunpack.c.l.b16 %v1069
        %v3150 = vunpack.c.h.b16 %v1069
        %v3151 = vunpack.c.l.b16 %v1070
        %v3152 = vunpack.c.h.b16 %v1070
        %v3153 = vunpack.c.l.b16 %v1071
        %v3154 = vunpack.c.h.b16 %v1071
        %v3155 = vunpack.c.l.b16 %v1072
        %v3156 = vunpack.c.h.b16 %v1072
        %v3157 = vunpack.c.l.b16 %v1073
        %v3158 = vunpack.c.h.b16 %v1073
        %v3159 = vunpack.c.l.b16 %v1074
        %v3160 = vunpack.c.h.b16 %v1074
        %v3161 = vunpack.c.l.b16 %v1075
        %v3162 = vunpack.c.h.b16 %v1075
        %v3163 = vunpack.c.l.b16 %v1076
        %v3164 = vunpack.c.h.b16 %v1076
        %v3165 = vunpack.c.l.b16 %v1077
        %v3166 = vunpack.c.h.b16 %v1077
        %v3167 = vunpack.c.l.b16 %v1078
        %v3168 = vunpack.c.h.b16 %v1078
        %v3169 = vunpack.c.l.b16 %v1079
        %v3170 = vunpack.c.h.b16 %v1079
        %v3171 = vunpack.c.l.b16 %v1080
        %v3172 = vunpack.c.h.b16 %v1080
        %v3173 = vunpack.c.l.b16 %v1081
        %v3174 = vunpack.c.h.b16 %v1081
        %v3175 = vunpack.c.l.b16 %v1082
        %v3176 = vunpack.c.h.b16 %v1082
        %v3177 = vunpack.c.l.b16 %v1083
        %v3178 = vunpack.c.h.b16 %v1083
        %v3179 = vunpack.c.l.b16 %v1084
        %v3180 = vunpack.c.h.b16 %v1084
        %v3181 = vunpack.c.l.b16 %v1085
        %v3182 = vunpack.c.h.b16 %v1085
        %v3183 = vunpack.c.l.b16 %v1086
        %v3184 = vunpack.c.h.b16 %v1086
        %v3185 = vunpack.c.l.b16 %v1087
        %v3186 = vunpack.c.h.b16 %v1087
        %v3187 = vunpack.c.l.b16 %v1088
        %v3188 = vunpack.c.h.b16 %v1088
        %v3189 = vunpack.c.l.b16 %v1089
        %v3190 = vunpack.c.h.b16 %v1089
        %v3191 = vunpack.c.l.b16 %v1090
        %v3192 = vunpack.c.h.b16 %v1090
        %v3193 = vunpack.c.l.b16 %v1091
        %v3194 = vunpack.c.h.b16 %v1091
        %v3195 = vunpack.c.l.b16 %v1092
        %v3196 = vunpack.c.h.b16 %v1092
        %v3197 = vunpack.c.l.b16 %v1093
        %v3198 = vunpack.c.h.b16 %v1093
        %v3199 = vunpack.c.l.b16 %v1094
        %v3200 = vunpack.c.h.b16 %v1094
        %v3201 = vunpack.c.l.b16 %v1095
        %v3202 = vunpack.c.h.b16 %v1095
        %v3203 = vunpack.c.l.b16 %v1096
        %v3204 = vunpack.c.h.b16 %v1096
        %v3205 = vunpack.c.l.b16 %v1097
        %v3206 = vunpack.c.h.b16 %v1097
        %v3207 = vunpack.c.l.b16 %v1098
        %v3208 = vunpack.c.h.b16 %v1098
        %v3209 = vunpack.c.l.b16 %v1099
        %v3210 = vunpack.c.h.b16 %v1099
        %v3211 = vunpack.c.l.b16 %v1100
        %v3212 = vunpack.c.h.b16 %v1100
        %v3213 = vunpack.c.l.b16 %v1101
        %v3214 = vunpack.c.h.b16 %v1101
        %v3215 = vunpack.c.l.b16 %v1102
        %v3216 = vunpack.c.h.b16 %v1102
        %v3217 = vunpack.c.l.b16 %v1103
        %v3218 = vunpack.c.h.b16 %v1103
        %v3219 = vunpack.c.l.b16 %v1104
        %v3220 = vunpack.c.h.b16 %v1104
        %v3221 = vunpack.c.l.b16 %v1105
        %v3222 = vunpack.c.h.b16 %v1105
        %v3223 = vunpack.c.l.b16 %v1106
        %v3224 = vunpack.c.h.b16 %v1106
        %v3225 = vunpack.c.l.b16 %v1107
        %v3226 = vunpack.c.h.b16 %v1107
        %v3227 = vunpack.c.l.b16 %v1108
        %v3228 = vunpack.c.h.b16 %v1108
        %v3229 = vunpack.c.l.b16 %v1109
        %v3230 = vunpack.c.h.b16 %v1109
        %v3231 = vunpack.c.l.b16 %v1110
        %v3232 = vunpack.c.h.b16 %v1110
        %v3233 = vunpack.c.l.b16 %v1111
        %v3234 = vunpack.c.h.b16 %v1111
        %v3235 = vunpack.c.l.b16 %v1112
        %v3236 = vunpack.c.h.b16 %v1112
        %v3237 = vunpack.c.l.b16 %v1113
        %v3238 = vunpack.c.h.b16 %v1113
        %v3239 = vunpack.c.l.b16 %v1114
        %v3240 = vunpack.c.h.b16 %v1114
        %v3241 = vunpack.c.l.b16 %v1115
        %v3242 = vunpack.c.h.b16 %v1115
        %v3243 = vunpack.c.l.b16 %v1116
        %v3244 = vunpack.c.h.b16 %v1116
        %v3245 = vunpack.c.l.b16 %v1117
        %v3246 = vunpack.c.h.b16 %v1117
        %v3247 = vunpack.c.l.b16 %v1118
        %v3248 = vunpack.c.h.b16 %v1118
        %v3249 = vunpack.c.l.b16 %v1119
        %v3250 = vunpack.c.h.b16 %v1119
        %v3251 = vunpack.c.l.b16 %v1120
        %v3252 = vunpack.c.h.b16 %v1120
        %v3253 = vunpack.c.l.b16 %v1121
        %v3254 = vunpack.c.h.b16 %v1121
        %v3255 = vunpack.c.l.b16 %v1122
        %v3256 = vunpack.c.h.b16 %v1122
        %v3257 = vunpack.c.l.b16 %v1123
        %v3258 = vunpack.c.h.b16 %v1123
        %v3259 = vunpack.c.l.b16 %v1124
        %v3260 = vunpack.c.h.b16 %v1124
        %v3261 = vunpack.c.l.b16 %v1125
        %v3262 = vunpack.c.h.b16 %v1125
        %v3263 = vunpack.c.l.b16 %v1126
        %v3264 = vunpack.c.h.b16 %v1126
        %v3265 = vunpack.c.l.b16 %v1127
        %v3266 = vunpack.c.h.b16 %v1127
        %v3267 = vunpack.c.l.b16 %v1128
        %v3268 = vunpack.c.h.b16 %v1128
        %v3269 = vunpack.c.l.b16 %v1129
        %v3270 = vunpack.c.h.b16 %v1129
        %v3271 = vunpack.c.l.b16 %v1130
        %v3272 = vunpack.c.h.b16 %v1130
        %v3273 = vunpack.c.l.b16 %v1131
        %v3274 = vunpack.c.h.b16 %v1131
        %v3275 = vunpack.c.l.b16 %v1132
        %v3276 = vunpack.c.h.b16 %v1132
        %v3277 = vunpack.c.l.b16 %v1133
        %v3278 = vunpack.c.h.b16 %v1133
        %v3279 = vunpack.c.l.b16 %v1134
        %v3280 = vunpack.c.h.b16 %v1134
        %v3281 = vunpack.c.l.b16 %v1135
        %v3282 = vunpack.c.h.b16 %v1135
        %v3283 = vunpack.c.l.b16 %v1136
        %v3284 = vunpack.c.h.b16 %v1136
        %v3285 = vunpack.c.l.b16 %v1137
        %v3286 = vunpack.c.h.b16 %v1137
        %v3287 = vunpack.c.l.b16 %v1138
        %v3288 = vunpack.c.h.b16 %v1138
        %v3289 = vunpack.c.l.b16 %v1139
        %v3290 = vunpack.c.h.b16 %v1139
        %v3291 = vunpack.c.l.b16 %v1140
        %v3292 = vunpack.c.h.b16 %v1140
        %v3293 = vunpack.c.l.b16 %v1141
        %v3294 = vunpack.c.h.b16 %v1141
        %v3295 = vunpack.c.l.b16 %v1142
        %v3296 = vunpack.c.h.b16 %v1142
        %v3297 = vunpack.c.l.b16 %v1143
        %v3298 = vunpack.c.h.b16 %v1143
        %v3299 = vunpack.c.l.b16 %v1144
        %v3300 = vunpack.c.h.b16 %v1144
        %v3301 = vunpack.c.l.b16 %v1145
        %v3302 = vunpack.c.h.b16 %v1145
        %v3303 = vunpack.c.l.b16 %v1146
        %v3304 = vunpack.c.h.b16 %v1146
        %v3305 = vunpack.c.l.b16 %v1147
        %v3306 = vunpack.c.h.b16 %v1147
        %v3307 = vunpack.c.l.b16 %v1148
        %v3308 = vunpack.c.h.b16 %v1148
        %v3309 = vunpack.c.l.b16 %v1149
        %v3310 = vunpack.c.h.b16 %v1149
        %v3311 = vunpack.c.l.b16 %v1150
        %v3312 = vunpack.c.h.b16 %v1150
        %v3313 = vunpack.c.l.b16 %v1151
        %v3314 = vunpack.c.h.b16 %v1151
        %v3315 = vunpack.c.l.b16 %v1152
        %v3316 = vunpack.c.h.b16 %v1152
        %v3317 = vunpack.c.l.b16 %v1153
        %v3318 = vunpack.c.h.b16 %v1153
        %v3319 = vunpack.c.l.b16 %v1154
        %v3320 = vunpack.c.h.b16 %v1154
        %v3321 = vunpack.c.l.b16 %v1155
        %v3322 = vunpack.c.h.b16 %v1155
        %v3323 = vunpack.c.l.b16 %v1156
        %v3324 = vunpack.c.h.b16 %v1156
        %v3325 = vunpack.c.l.b16 %v1157
        %v3326 = vunpack.c.h.b16 %v1157
        %v3327 = vunpack.c.l.b16 %v1158
        %v3328 = vunpack.c.h.b16 %v1158
        %v3329 = vunpack.c.l.b16 %v1159
        %v3330 = vunpack.c.h.b16 %v1159
        %v3331 = vunpack.c.l.b16 %v1160
        %v3332 = vunpack.c.h.b16 %v1160
        %v3333 = vunpack.c.l.b16 %v1161
        %v3334 = vunpack.c.h.b16 %v1161
        %v3335 = vunpack.c.l.b16 %v1162
        %v3336 = vunpack.c.h.b16 %v1162
        %v3337 = vunpack.c.l.b16 %v1163
        %v3338 = vunpack.c.h.b16 %v1163
        %v3339 = vunpack.c.l.b16 %v1164
        %v3340 = vunpack.c.h.b16 %v1164
        %v3341 = vunpack.c.l.b16 %v1165
        %v3342 = vunpack.c.h.b16 %v1165
        %v3343 = vunpack.c.l.b16 %v1166
        %v3344 = vunpack.c.h.b16 %v1166
        %v3345 = vunpack.c.l.b16 %v1167
        %v3346 = vunpack.c.h.b16 %v1167
        %v3347 = vunpack.c.l.b16 %v1168
        %v3348 = vunpack.c.h.b16 %v1168
        %v3349 = vunpack.c.l.b16 %v1169
        %v3350 = vunpack.c.h.b16 %v1169
        %v3351 = vunpack.c.l.b16 %v1170
        %v3352 = vunpack.c.h.b16 %v1170
        %v3353 = vunpack.c.l.b16 %v1171
        %v3354 = vunpack.c.h.b16 %v1171
        %v3355 = vunpack.c.l.b16 %v1172
        %v3356 = vunpack.c.h.b16 %v1172
        %v3357 = vunpack.c.l.b16 %v1173
        %v3358 = vunpack.c.h.b16 %v1173
        %v3359 = vunpack.c.l.b16 %v1174
        %v3360 = vunpack.c.h.b16 %v1174
        %v3361 = vunpack.c.l.b16 %v1175
        %v3362 = vunpack.c.h.b16 %v1175
        %v3363 = vunpack.c.l.b16 %v1176
        %v3364 = vunpack.c.h.b16 %v1176
        %v3365 = vunpack.c.l.b16 %v1177
        %v3366 = vunpack.c.h.b16 %v1177
        %v3367 = vunpack.c.l.b16 %v1178
        %v3368 = vunpack.c.h.b16 %v1178
        %v3369 = vunpack.c.l.b16 %v1179
        %v3370 = vunpack.c.h.b16 %v1179
        %v3371 = vunpack.c.l.b16 %v1180
        %v3372 = vunpack.c.h.b16 %v1180
        %v3373 = vunpack.c.l.b16 %v1181
        %v3374 = vunpack.c.h.b16 %v1181
        %v3375 = vunpack.c.l.b16 %v1182
        %v3376 = vunpack.c.h.b16 %v1182
        %v3377 = vunpack.c.l.b16 %v1183
        %v3378 = vunpack.c.h.b16 %v1183
        %v3379 = vunpack.c.l.b16 %v1184
        %v3380 = vunpack.c.h.b16 %v1184
        %v3381 = vunpack.c.l.b16 %v1185
        %v3382 = vunpack.c.h.b16 %v1185
        %v3383 = vunpack.c.l.b16 %v1186
        %v3384 = vunpack.c.h.b16 %v1186
        %v3385 = vunpack.c.l.b16 %v1187
        %v3386 = vunpack.c.h.b16 %v1187
        %v3387 = vunpack.c.l.b16 %v1188
        %v3388 = vunpack.c.h.b16 %v1188
        %v3389 = vunpack.c.l.b16 %v1189
        %v3390 = vunpack.c.h.b16 %v1189
        %v3391 = vunpack.c.l.b16 %v1190
        %v3392 = vunpack.c.h.b16 %v1190
        %v3393 = vunpack.c.l.b16 %v1191
        %v3394 = vunpack.c.h.b16 %v1191
        %v3395 = vunpack.c.l.b16 %v1192
        %v3396 = vunpack.c.h.b16 %v1192
        %v3397 = vunpack.c.l.b16 %v1193
        %v3398 = vunpack.c.h.b16 %v1193
        %v3399 = vunpack.c.l.b16 %v1194
        %v3400 = vunpack.c.h.b16 %v1194
        %v3401 = vunpack.c.l.b16 %v1195
        %v3402 = vunpack.c.h.b16 %v1195
        %v3403 = vunpack.c.l.b16 %v1196
        %v3404 = vunpack.c.h.b16 %v1196
        %v3405 = vunpack.c.l.b16 %v1197
        %v3406 = vunpack.c.h.b16 %v1197
        %v3407 = vunpack.c.l.b16 %v1198
        %v3408 = vunpack.c.h.b16 %v1198
        %v3409 = vunpack.c.l.b16 %v1199
        %v3410 = vunpack.c.h.b16 %v1199
        %v3411 = vunpack.c.l.b16 %v1200
        %v3412 = vunpack.c.h.b16 %v1200
        %v3413 = vunpack.c.l.b16 %v1201
        %v3414 = vunpack.c.h.b16 %v1201
        %v3415 = vunpack.c.l.b16 %v1202
        %v3416 = vunpack.c.h.b16 %v1202
        %v3417 = vunpack.c.l.b16 %v1203
        %v3418 = vunpack.c.h.b16 %v1203
        %v3419 = vunpack.c.l.b16 %v1204
        %v3420 = vunpack.c.h.b16 %v1204
        %v3421 = vunpack.c.l.b16 %v1205
        %v3422 = vunpack.c.h.b16 %v1205
        %v3423 = vunpack.c.l.b16 %v1206
        %v3424 = vunpack.c.h.b16 %v1206
        %v3425 = vunpack.c.l.b16 %v1207
        %v3426 = vunpack.c.h.b16 %v1207
        %v3427 = vunpack.c.l.b16 %v1208
        %v3428 = vunpack.c.h.b16 %v1208
        %v3429 = vunpack.c.l.b16 %v1209
        %v3430 = vunpack.c.h.b16 %v1209
        %v3431 = vunpack.c.l.b16 %v1210
        %v3432 = vunpack.c.h.b16 %v1210
        %v3433 = vunpack.c.l.b16 %v1211
        %v3434 = vunpack.c.h.b16 %v1211
        %v3435 = vunpack.c.l.b16 %v1212
        %v3436 = vunpack.c.h.b16 %v1212
        %v3437 = vunpack.c.l.b16 %v1213
        %v3438 = vunpack.c.h.b16 %v1213
        %v3439 = vunpack.c.l.b16 %v1214
        %v3440 = vunpack.c.h.b16 %v1214
        %v3441 = vunpack.c.l.b16 %v1215
        %v3442 = vunpack.c.h.b16 %v1215
        %v3443 = vunpack.c.l.b16 %v1216
        %v3444 = vunpack.c.h.b16 %v1216
        %v3445 = vpack.c.b16 %v2059, %v2037
        %v3446 = vpack.c.b16 %v2060, %v2038
        %v3447 = vpack.c.b16 %v2061, %v2039
        %v3448 = vpack.c.b16 %v2062, %v2040
        %v3449 = vpack.c.b16 %v2063, %v2041
        %v3450 = vpack.c.b16 %v2064, %v2042
        %v3451 = vpack.c.b16 %v2065, %v2043
        %v3452 = vpack.c.b16 %v2066, %v2044
        %v3453 = vpack.c.b16 %v2067, %v2045
        %v3454 = vpack.c.b16 %v2068, %v2046
        %v3455 = vpack.c.b16 %v2069, %v2047
        %v3456 = vpack.c.b16 %v2070, %v2048
        %v3457 = vpack.c.b16 %v2071, %v2049
        %v3458 = vpack.c.b16 %v2072, %v2050
        %v3459 = vpack.c.b16 %v2073, %v2051
        %v3460 = vpack.c.b16 %v2074, %v2052
        %v3461 = vpack.c.b16 %v2075, %v2053
        %v3462 = vpack.c.b16 %v2076, %v2054
        %v3463 = vpack.c.b16 %v2077, %v2055
        %v3464 = vpack.c.b16 %v2078, %v2056
        %v3465 = vpack.c.b16 %v2079, %v2057
        %v3466 = vpack.c.b16 %v2080, %v2058
        %v3467 = vpack.c.b16 %v2103, %v2081
        %v3468 = vpack.c.b16 %v2104, %v2082
        %v3469 = vpack.c.b16 %v2105, %v2083
        %v3470 = vpack.c.b16 %v2106, %v2084
        %v3471 = vpack.c.b16 %v2107, %v2085
        %v3472 = vpack.c.b16 %v2108, %v2086
        %v3473 = vpack.c.b16 %v2109, %v2087
        %v3474 = vpack.c.b16 %v2110, %v2088
        %v3475 = vpack.c.b16 %v2111, %v2089
        %v3476 = vpack.c.b16 %v2112, %v2090
        %v3477 = vpack.c.b16 %v2113, %v2091
        %v3478 = vpack.c.b16 %v2114, %v2092
        %v3479 = vpack.c.b16 %v2115, %v2093
        %v3480 = vpack.c.b16 %v2116, %v2094
        %v3481 = vpack.c.b16 %v2117, %v2095
        %v3482 = vpack.c.b16 %v2118, %v2096
        %v3483 = vpack.c.b16 %v2119, %v2097
        %v3484 = vpack.c.b16 %v2120, %v2098
        %v3485 = vpack.c.b16 %v2121, %v2099
        %v3486 = vpack.c.b16 %v2122, %v2100
        %v3487 = vpack.c.b16 %v2123, %v2101
        %v3488 = vpack.c.b16 %v2124, %v2102
        %v3489 = vpack.c.b16 %v2147, %v2125
        %v3490 = vpack.c.b16 %v2148, %v2126
        %v3491 = vpack.c.b16 %v2149, %v2127
        %v3492 = vpack.c.b16 %v2150, %v2128
        %v3493 = vpack.c.b16 %v2151, %v2129
        %v3494 = vpack.c.b16 %v2152, %v2130
        %v3495 = vpack.c.b16 %v2153, %v2131
        %v3496 = vpack.c.b16 %v2154, %v2132
        %v3497 = vpack.c.b16 %v2155, %v2133
        %v3498 = vpack.c.b16 %v2156, %v2134
        %v3499 = vpack.c.b16 %v2157, %v2135
        %v3500 = vpack.c.b16 %v2158, %v2136
        %v3501 = vpack.c.b16 %v2159, %v2137
        %v3502 = vpack.c.b16 %v2160, %v2138
        %v3503 = vpack.c.b16 %v2161, %v2139
        %v3504 = vpack.c.b16 %v2162, %v2140
        %v3505 = vpack.c.b16 %v2163, %v2141
        %v3506 = vpack.c.b16 %v2164, %v2142
        %v3507 = vpack.c.b16 %v2165, %v2143
        %v3508 = vpack.c.b16 %v2166, %v2144
        %v3509 = vpack.c.b16 %v2167, %v2145
        %v3510 = vpack.c.b16 %v2168, %v2146
        %v3511 = vpack.c.b16 %v2191, %v2169
        %v3512 = vpack.c.b16 %v2192, %v2170
        %v3513 = vpack.c.b16 %v2193, %v2171
        %v3514 = vpack.c.b16 %v2194, %v2172
        %v3515 = vpack.c.b16 %v2195, %v2173
        %v3516 = vpack.c.b16 %v2196, %v2174
        %v3517 = vpack.c.b16 %v2197, %v2175
        %v3518 = vpack.c.b16 %v2198, %v2176
        %v3519 = vpack.c.b16 %v2199, %v2177
        %v3520 = vpack.c.b16 %v2200, %v2178
        %v3521 = vpack.c.b16 %v2201, %v2179
        %v3522 = vpack.c.b16 %v2202, %v2180
        %v3523 = vpack.c.b16 %v2203, %v2181
        %v3524 = vpack.c.b16 %v2204, %v2182
        %v3525 = vpack.c.b16 %v2205, %v2183
        %v3526 = vpack.c.b16 %v2206, %v2184
        %v3527 = vpack.c.b16 %v2207, %v2185
        %v3528 = vpack.c.b16 %v2208, %v2186
        %v3529 = vpack.c.b16 %v2209, %v2187
        %v3530 = vpack.c.b16 %v2210, %v2188
        %v3531 = vpack.c.b16 %v2211, %v2189
        %v3532 = vpack.c.b16 %v2212, %v2190
        %v3533 = vpack.c.b16 %v2235, %v2213
        %v3534 = vpack.c.b16 %v2236, %v2214
        %v3535 = vpack.c.b16 %v2237, %v2215
        %v3536 = vpack.c.b16 %v2238, %v2216
        %v3537 = vpack.c.b16 %v2239, %v2217
        %v3538 = vpack.c.b16 %v2240, %v2218
        %v3539 = vpack.c.b16 %v2241, %v2219
        %v3540 = vpack.c.b16 %v2242, %v2220
        %v3541 = vpack.c.b16 %v2243, %v2221
        %v3542 = vpack.c.b16 %v2244, %v2222
        %v3543 = vpack.c.b16 %v2245, %v2223
        %v3544 = vpack.c.b16 %v2246, %v2224
        %v3545 = vpack.c.b16 %v2247, %v2225
        %v3546 = vpack.c.b16 %v2248, %v2226
        %v3547 = vpack.c.b16 %v2249, %v2227
        %v3548 = vpack.c.b16 %v2250, %v2228
        %v3549 = vpack.c.b16 %v2251, %v2229
        %v3550 = vpack.c.b16 %v2252, %v2230
        %v3551 = vpack.c.b16 %v2253, %v2231
        %v3552 = vpack.c.b16 %v2254, %v2232
        %v3553 = vpack.c.b16 %v2255, %v2233
        %v3554 = vpack.c.b16 %v2256, %v2234
        %v3555 = vpack.c.b16 %v2279, %v2257
        %v3556 = vpack.c.b16 %v2280, %v2258
        %v3557 = vpack.c.b16 %v2281, %v2259
        %v3558 = vpack.c.b16 %v2282, %v2260
        %v3559 = vpack.c.b16 %v2283, %v2261
        %v3560 = vpack.c.b16 %v2284, %v2262
        %v3561 = vpack.c.b16 %v2285, %v2263
        %v3562 = vpack.c.b16 %v2286, %v2264
        %v3563 = vpack.c.b16 %v2287, %v2265
        %v3564 = vpack.c.b16 %v2288, %v2266
        %v3565 = vpack.c.b16 %v2289, %v2267
        %v3566 = vpack.c.b16 %v2290, %v2268
        %v3567 = vpack.c.b16 %v2291, %v2269
        %v3568 = vpack.c.b16 %v2292, %v2270
        %v3569 = vpack.c.b16 %v2293, %v2271
        %v3570 = vpack.c.b16 %v2294, %v2272
        %v3571 = vpack.c.b16 %v2295, %v2273
        %v3572 = vpack.c.b16 %v2296, %v2274
        %v3573 = vpack.c.b16 %v2297, %v2275
        %v3574 = vpack.c.b16 %v2298, %v2276
        %v3575 = vpack.c.b16 %v2299, %v2277
        %v3576 = vpack.c.b16 %v2300, %v2278
        %v3577 = vpack.c.b16 %v2323, %v2301
        %v3578 = vpack.c.b16 %v2324, %v2302
        %v3579 = vpack.c.b16 %v2325, %v2303
        %v3580 = vpack.c.b16 %v2326, %v2304
        %v3581 = vpack.c.b16 %v2327, %v2305
        %v3582 = vpack.c.b16 %v2328, %v2306
        %v3583 = vpack.c.b16 %v2329, %v2307
        %v3584 = vpack.c.b16 %v2330, %v2308
        %v3585 = vpack.c.b16 %v2331, %v2309
        %v3586 = vpack.c.b16 %v2332, %v2310
        %v3587 = vpack.c.b16 %v2333, %v2311
        %v3588 = vpack.c.b16 %v2334, %v2312
        %v3589 = vpack.c.b16 %v2335, %v2313
        %v3590 = vpack.c.b16 %v2336, %v2314
        %v3591 = vpack.c.b16 %v2337, %v2315
        %v3592 = vpack.c.b16 %v2338, %v2316
        %v3593 = vpack.c.b16 %v2339, %v2317
        %v3594 = vpack.c.b16 %v2340, %v2318
        %v3595 = vpack.c.b16 %v2341, %v2319
        %v3596 = vpack.c.b16 %v2342, %v2320
        %v3597 = vpack.c.b16 %v2343, %v2321
        %v3598 = vpack.c.b16 %v2344, %v2322
        %v3599 = vpack.c.b16 %v2367, %v2345
        %v3600 = vpack.c.b16 %v2368, %v2346
        %v3601 = vpack.c.b16 %v2369, %v2347
        %v3602 = vpack.c.b16 %v2370, %v2348
        %v3603 = vpack.c.b16 %v2371, %v2349
        %v3604 = vpack.c.b16 %v2372, %v2350
        %v3605 = vpack.c.b16 %v2373, %v2351
        %v3606 = vpack.c.b16 %v2374, %v2352
        %v3607 = vpack.c.b16 %v2375, %v2353
        %v3608 = vpack.c.b16 %v2376, %v2354
        %v3609 = vpack.c.b16 %v2377, %v2355
        %v3610 = vpack.c.b16 %v2378, %v2356
        %v3611 = vpack.c.b16 %v2379, %v2357
        %v3612 = vpack.c.b16 %v2380, %v2358
        %v3613 = vpack.c.b16 %v2381, %v2359
        %v3614 = vpack.c.b16 %v2382, %v2360
        %v3615 = vpack.c.b16 %v2383, %v2361
        %v3616 = vpack.c.b16 %v2384, %v2362
        %v3617 = vpack.c.b16 %v2385, %v2363
        %v3618 = vpack.c.b16 %v2386, %v2364
        %v3619 = vpack.c.b16 %v2387, %v2365
        %v3620 = vpack.c.b16 %v2388, %v2366
        %v3621 = vpack.c.b16 %v2411, %v2389
        %v3622 = vpack.c.b16 %v2412, %v2390
        %v3623 = vpack.c.b16 %v2413, %v2391
        %v3624 = vpack.c.b16 %v2414, %v2392
        %v3625 = vpack.c.b16 %v2415, %v2393
        %v3626 = vpack.c.b16 %v2416, %v2394
        %v3627 = vpack.c.b16 %v2417, %v2395
        %v3628 = vpack.c.b16 %v2418, %v2396
        %v3629 = vpack.c.b16 %v2419, %v2397
        %v3630 = vpack.c.b16 %v2420, %v2398
        %v3631 = vpack.c.b16 %v2421, %v2399
        %v3632 = vpack.c.b16 %v2422, %v2400
        %v3633 = vpack.c.b16 %v2423, %v2401
        %v3634 = vpack.c.b16 %v2424, %v2402
        %v3635 = vpack.c.b16 %v2425, %v2403
        %v3636 = vpack.c.b16 %v2426, %v2404
        %v3637 = vpack.c.b16 %v2427, %v2405
        %v3638 = vpack.c.b16 %v2428, %v2406
        %v3639 = vpack.c.b16 %v2429, %v2407
        %v3640 = vpack.c.b16 %v2430, %v2408
        %v3641 = vpack.c.b16 %v2431, %v2409
        %v3642 = vpack.c.b16 %v2432, %v2410
        %v3643 = vpack.c.b16 %v2455, %v2433
        %v3644 = vpack.c.b16 %v2456, %v2434
        %v3645 = vpack.c.b16 %v2457, %v2435
        %v3646 = vpack.c.b16 %v2458, %v2436
        %v3647 = vpack.c.b16 %v2459, %v2437
        %v3648 = vpack.c.b16 %v2460, %v2438
        %v3649 = vpack.c.b16 %v2461, %v2439
        %v3650 = vpack.c.b16 %v2462, %v2440
        %v3651 = vpack.c.b16 %v2463, %v2441
        %v3652 = vpack.c.b16 %v2464, %v2442
        %v3653 = vpack.c.b16 %v2465, %v2443
        %v3654 = vpack.c.b16 %v2466, %v2444
        %v3655 = vpack.c.b16 %v2467, %v2445
        %v3656 = vpack.c.b16 %v2468, %v2446
        %v3657 = vpack.c.b16 %v2469, %v2447
        %v3658 = vpack.c.b16 %v2470, %v2448
        %v3659 = vpack.c.b16 %v2471, %v2449
        %v3660 = vpack.c.b16 %v2472, %v2450
        %v3661 = vpack.c.b16 %v2473, %v2451
        %v3662 = vpack.c.b16 %v2474, %v2452
        %v3663 = vpack.c.b16 %v2475, %v2453
        %v3664 = vpack.c.b16 %v2476, %v2454
        %v3665 = vpack.c.b16 %v2499, %v2477
        %v3666 = vpack.c.b16 %v2500, %v2478
        %v3667 = vpack.c.b16 %v2501, %v2479
        %v3668 = vpack.c.b16 %v2502, %v2480
        %v3669 = vpack.c.b16 %v2503, %v2481
        %v3670 = vpack.c.b16 %v2504, %v2482
        %v3671 = vpack.c.b16 %v2505, %v2483
        %v3672 = vpack.c.b16 %v2506, %v2484
        %v3673 = vpack.c.b16 %v2507, %v2485
        %v3674 = vpack.c.b16 %v2508, %v2486
        %v3675 = vpack.c.b16 %v2509, %v2487
        %v3676 = vpack.c.b16 %v2510, %v2488
        %v3677 = vpack.c.b16 %v2511, %v2489
        %v3678 = vpack.c.b16 %v2512, %v2490
        %v3679 = vpack.c.b16 %v2513, %v2491
        %v3680 = vpack.c.b16 %v2514, %v2492
        %v3681 = vpack.c.b16 %v2515, %v2493
        %v3682 = vpack.c.b16 %v2516, %v2494
        %v3683 = vpack.c.b16 %v2517, %v2495
        %v3684 = vpack.c.b16 %v2518, %v2496
        %v3685 = vpack.c.b16 %v2519, %v2497
        %v3686 = vpack.c.b16 %v2520, %v2498
        %v3687 = vpack.c.b16 %v2543, %v2521
        %v3688 = vpack.c.b16 %v2544, %v2522
        %v3689 = vpack.c.b16 %v2545, %v2523
        %v3690 = vpack.c.b16 %v2546, %v2524
        %v3691 = vpack.c.b16 %v2547, %v2525
        %v3692 = vpack.c.b16 %v2548, %v2526
        %v3693 = vpack.c.b16 %v2549, %v2527
        %v3694 = vpack.c.b16 %v2550, %v2528
        %v3695 = vpack.c.b16 %v2551, %v2529
        %v3696 = vpack.c.b16 %v2552, %v2530
        %v3697 = vpack.c.b16 %v2553, %v2531
        %v3698 = vpack.c.b16 %v2554, %v2532
        %v3699 = vpack.c.b16 %v2555, %v2533
        %v3700 = vpack.c.b16 %v2556, %v2534
        %v3701 = vpack.c.b16 %v2557, %v2535
        %v3702 = vpack.c.b16 %v2558, %v2536
        %v3703 = vpack.c.b16 %v2559, %v2537
        %v3704 = vpack.c.b16 %v2560, %v2538
        %v3705 = vpack.c.b16 %v2561, %v2539
        %v3706 = vpack.c.b16 %v2562, %v2540
        %v3707 = vpack.c.b16 %v2563, %v2541
        %v3708 = vpack.c.b16 %v2564, %v2542
        %v3709 = vpack.c.b16 %v2587, %v2565
        %v3710 = vpack.c.b16 %v2588, %v2566
        %v3711 = vpack.c.b16 %v2589, %v2567
        %v3712 = vpack.c.b16 %v2590, %v2568
        %v3713 = vpack.c.b16 %v2591, %v2569
        %v3714 = vpack.c.b16 %v2592, %v2570
        %v3715 = vpack.c.b16 %v2593, %v2571
        %v3716 = vpack.c.b16 %v2594, %v2572
        %v3717 = vpack.c.b16 %v2595, %v2573
        %v3718 = vpack.c.b16 %v2596, %v2574
        %v3719 = vpack.c.b16 %v2597, %v2575
        %v3720 = vpack.c.b16 %v2598, %v2576
        %v3721 = vpack.c.b16 %v2599, %v2577
        %v3722 = vpack.c.b16 %v2600, %v2578
        %v3723 = vpack.c.b16 %v2601, %v2579
        %v3724 = vpack.c.b16 %v2602, %v2580
        %v3725 = vpack.c.b16 %v2603, %v2581
        %v3726 = vpack.c.b16 %v2604, %v2582
        %v3727 = vpack.c.b16 %v2605, %v2583
        %v3728 = vpack.c.b16 %v2606, %v2584
        %v3729 = vpack.c.b16 %v2607, %v2585
        %v3730 = vpack.c.b16 %v2608, %v2586
        %v3731 = vpack.c.b16 %v2631, %v2609
        %v3732 = vpack.c.b16 %v2632, %v2610
        %v3733 = vpack.c.b16 %v2633, %v2611
        %v3734 = vpack.c.b16 %v2634, %v2612
        %v3735 = vpack.c.b16 %v2635, %v2613
        %v3736 = vpack.c.b16 %v2636, %v2614
        %v3737 = vpack.c.b16 %v2637, %v2615
        %v3738 = vpack.c.b16 %v2638, %v2616
        %v3739 = vpack.c.b16 %v2639, %v2617
        %v3740 = vpack.c.b16 %v2640, %v2618
        %v3741 = vpack.c.b16 %v2641, %v2619
        %v3742 = vpack.c.b16 %v2642, %v2620
        %v3743 = vpack.c.b16 %v2643, %v2621
        %v3744 = vpack.c.b16 %v2644, %v2622
        %v3745 = vpack.c.b16 %v2645, %v2623
        %v3746 = vpack.c.b16 %v2646, %v2624
        %v3747 = vpack.c.b16 %v2647, %v2625
        %v3748 = vpack.c.b16 %v2648, %v2626
        %v3749 = vpack.c.b16 %v2649, %v2627
        %v3750 = vpack.c.b16 %v2650, %v2628
        %v3751 = vpack.c.b16 %v2651, %v2629
        %v3752 = vpack.c.b16 %v2652, %v2630
        %v3753 = vpack.c.b16 %v2675, %v2653
        %v3754 = vpack.c.b16 %v2676, %v2654
        %v3755 = vpack.c.b16 %v2677, %v2655
        %v3756 = vpack.c.b16 %v2678, %v2656
        %v3757 = vpack.c.b16 %v2679, %v2657
        %v3758 = vpack.c.b16 %v2680, %v2658
        %v3759 = vpack.c.b16 %v2681, %v2659
        %v3760 = vpack.c.b16 %v2682, %v2660
        %v3761 = vpack.c.b16 %v2683, %v2661
        %v3762 = vpack.c.b16 %v2684, %v2662
        %v3763 = vpack.c.b16 %v2685, %v2663
        %v3764 = vpack.c.b16 %v2686, %v2664
        %v3765 = vpack.c.b16 %v2687, %v2665
        %v3766 = vpack.c.b16 %v2688, %v2666
        %v3767 = vpack.c.b16 %v2689, %v2667
        %v3768 = vpack.c.b16 %v2690, %v2668
        %v3769 = vpack.c.b16 %v2691, %v2669
        %v3770 = vpack.c.b16 %v2692, %v2670
        %v3771 = vpack.c.b16 %v2693, %v2671
        %v3772 = vpack.c.b16 %v2694, %v2672
        %v3773 = vpack.c.b16 %v2695, %v2673
        %v3774 = vpack.c.b16 %v2696, %v2674
        %v3775 = vpack.c.b16 %v2719, %v2697
        %v3776 = vpack.c.b16 %v2720, %v2698
        %v3777 = vpack.c.b16 %v2721, %v2699
        %v3778 = vpack.c.b16 %v2722, %v2700
        %v3779 = vpack.c.b16 %v2723, %v2701
        %v3780 = vpack.c.b16 %v2724, %v2702
        %v3781 = vpack.c.b16 %v2725, %v2703
        %v3782 = vpack.c.b16 %v2726, %v2704
        %v3783 = vpack.c.b16 %v2727, %v2705
        %v3784 = vpack.c.b16 %v2728, %v2706
        %v3785 = vpack.c.b16 %v2729, %v2707
        %v3786 = vpack.c.b16 %v2730, %v2708
        %v3787 = vpack.c.b16 %v2731, %v2709
        %v3788 = vpack.c.b16 %v2732, %v2710
        %v3789 = vpack.c.b16 %v2733, %v2711
        %v3790 = vpack.c.b16 %v2734, %v2712
        %v3791 = vpack.c.b16 %v2735, %v2713
        %v3792 = vpack.c.b16 %v2736, %v2714
        %v3793 = vpack.c.b16 %v2737, %v2715
        %v3794 = vpack.c.b16 %v2738, %v2716
        %v3795 = vpack.c.b16 %v2739, %v2717
        %v3796 = vpack.c.b16 %v2740, %v2718
        %v3797 = vpack.c.b16 %v2763, %v2741
        %v3798 = vpack.c.b16 %v2764, %v2742
        %v3799 = vpack.c.b16 %v2765, %v2743
        %v3800 = vpack.c.b16 %v2766, %v2744
        %v3801 = vpack.c.b16 %v2767, %v2745
        %v3802 = vpack.c.b16 %v2768, %v2746
        %v3803 = vpack.c.b16 %v2769, %v2747
        %v3804 = vpack.c.b16 %v2770, %v2748
        %v3805 = vpack.c.b16 %v2771, %v2749
        %v3806 = vpack.c.b16 %v2772, %v2750
        %v3807 = vpack.c.b16 %v2773, %v2751
        %v3808 = vpack.c.b16 %v2774, %v2752
        %v3809 = vpack.c.b16 %v2775, %v2753
        %v3810 = vpack.c.b16 %v2776, %v2754
        %v3811 = vpack.c.b16 %v2777, %v2755
        %v3812 = vpack.c.b16 %v2778, %v2756
        %v3813 = vpack.c.b16 %v2779, %v2757
        %v3814 = vpack.c.b16 %v2780, %v2758
        %v3815 = vpack.c.b16 %v2781, %v2759
        %v3816 = vpack.c.b16 %v2782, %v2760
        %v3817 = vpack.c.b16 %v2783, %v2761
        %v3818 = vpack.c.b16 %v2784, %v2762
        %v3819 = vpack.c.b16 %v2807, %v2785
        %v3820 = vpack.c.b16 %v2808, %v2786
        %v3821 = vpack.c.b16 %v2809, %v2787
        %v3822 = vpack.c.b16 %v2810, %v2788
        %v3823 = vpack.c.b16 %v2811, %v2789
        %v3824 = vpack.c.b16 %v2812, %v2790
        %v3825 = vpack.c.b16 %v2813, %v2791
        %v3826 = vpack.c.b16 %v2814, %v2792
        %v3827 = vpack.c.b16 %v2815, %v2793
        %v3828 = vpack.c.b16 %v2816, %v2794
        %v3829 = vpack.c.b16 %v2817, %v2795
        %v3830 = vpack.c.b16 %v2818, %v2796
        %v3831 = vpack.c.b16 %v2819, %v2797
        %v3832 = vpack.c.b16 %v2820, %v2798
        %v3833 = vpack.c.b16 %v2821, %v2799
        %v3834 = vpack.c.b16 %v2822, %v2800
        %v3835 = vpack.c.b16 %v2823, %v2801
        %v3836 = vpack.c.b16 %v2824, %v2802
        %v3837 = vpack.c.b16 %v2825, %v2803
        %v3838 = vpack.c.b16 %v2826, %v2804
        %v3839 = vpack.c.b16 %v2827, %v2805
        %v3840 = vpack.c.b16 %v2828, %v2806
        %v3841 = vpack.c.b16 %v2851, %v2829
        %v3842 = vpack.c.b16 %v2852, %v2830
        %v3843 = vpack.c.b16 %v2853, %v2831
        %v3844 = vpack.c.b16 %v2854, %v2832
        %v3845 = vpack.c.b16 %v2855, %v2833
        %v3846 = vpack.c.b16 %v2856, %v2834
        %v3847 = vpack.c.b16 %v2857, %v2835
        %v3848 = vpack.c.b16 %v2858, %v2836
        %v3849 = vpack.c.b16 %v2859, %v2837
        %v3850 = vpack.c.b16 %v2860, %v2838
        %v3851 = vpack.c.b16 %v2861, %v2839
        %v3852 = vpack.c.b16 %v2862, %v2840
        %v3853 = vpack.c.b16 %v2863, %v2841
        %v3854 = vpack.c.b16 %v2864, %v2842
        %v3855 = vpack.c.b16 %v2865, %v2843
        %v3856 = vpack.c.b16 %v2866, %v2844
        %v3857 = vpack.c.b16 %v2867, %v2845
        %v3858 = vpack.c.b16 %v2868, %v2846
        %v3859 = vpack.c.b16 %v2869, %v2847
        %v3860 = vpack.c.b16 %v2870, %v2848
        %v3861 = vpack.c.b16 %v2871, %v2849
        %v3862 = vpack.c.b16 %v2872, %v2850
        %v3863 = vpack.c.b16 %v2895, %v2873
        %v3864 = vpack.c.b16 %v2896, %v2874
        %v3865 = vpack.c.b16 %v2897, %v2875
        %v3866 = vpack.c.b16 %v2898, %v2876
        %v3867 = vpack.c.b16 %v2899, %v2877
        %v3868 = vpack.c.b16 %v2900, %v2878
        %v3869 = vpack.c.b16 %v2901, %v2879
        %v3870 = vpack.c.b16 %v2902, %v2880
        %v3871 = vpack.c.b16 %v2903, %v2881
        %v3872 = vpack.c.b16 %v2904, %v2882
        %v3873 = vpack.c.b16 %v2905, %v2883
        %v3874 = vpack.c.b16 %v2906, %v2884
        %v3875 = vpack.c.b16 %v2907, %v2885
        %v3876 = vpack.c.b16 %v2908, %v2886
        %v3877 = vpack.c.b16 %v2909, %v2887
        %v3878 = vpack.c.b16 %v2910, %v2888
        %v3879 = vpack.c.b16 %v2911, %v2889
        %v3880 = vpack.c.b16 %v2912, %v2890
        %v3881 = vpack.c.b16 %v2913, %v2891
        %v3882 = vpack.c.b16 %v2914, %v2892
        %v3883 = vpack.c.b16 %v2915, %v2893
        %v3884 = vpack.c.b16 %v2916, %v2894
        %v3885 = vpack.c.b16 %v2939, %v2917
        %v3886 = vpack.c.b16 %v2940, %v2918
        %v3887 = vpack.c.b16 %v2941, %v2919
        %v3888 = vpack.c.b16 %v2942, %v2920
        %v3889 = vpack.c.b16 %v2943, %v2921
        %v3890 = vpack.c.b16 %v2944, %v2922
        %v3891 = vpack.c.b16 %v2945, %v2923
        %v3892 = vpack.c.b16 %v2946, %v2924
        %v3893 = vpack.c.b16 %v2947, %v2925
        %v3894 = vpack.c.b16 %v2948, %v2926
        %v3895 = vpack.c.b16 %v2949, %v2927
        %v3896 = vpack.c.b16 %v2950, %v2928
        %v3897 = vpack.c.b16 %v2951, %v2929
        %v3898 = vpack.c.b16 %v2952, %v2930
        %v3899 = vpack.c.b16 %v2953, %v2931
        %v3900 = vpack.c.b16 %v2954, %v2932
        %v3901 = vpack.c.b16 %v2955, %v2933
        %v3902 = vpack.c.b16 %v2956, %v2934
        %v3903 = vpack.c.b16 %v2957, %v2935
        %v3904 = vpack.c.b16 %v2958, %v2936
        %v3905 = vpack.c.b16 %v2959, %v2937
        %v3906 = vpack.c.b16 %v2960, %v2938
        %v3907 = vpack.c.b16 %v2983, %v2961
        %v3908 = vpack.c.b16 %v2984, %v2962
        %v3909 = vpack.c.b16 %v2985, %v2963
        %v3910 = vpack.c.b16 %v2986, %v2964
        %v3911 = vpack.c.b16 %v2987, %v2965
        %v3912 = vpack.c.b16 %v2988, %v2966
        %v3913 = vpack.c.b16 %v2989, %v2967
        %v3914 = vpack.c.b16 %v2990, %v2968
        %v3915 = vpack.c.b16 %v2991, %v2969
        %v3916 = vpack.c.b16 %v2992, %v2970
        %v3917 = vpack.c.b16 %v2993, %v2971
        %v3918 = vpack.c.b16 %v2994, %v2972
        %v3919 = vpack.c.b16 %v2995, %v2973
        %v3920 = vpack.c.b16 %v2996, %v2974
        %v3921 = vpack.c.b16 %v2997, %v2975
        %v3922 = vpack.c.b16 %v2998, %v2976
        %v3923 = vpack.c.b16 %v2999, %v2977
        %v3924 = vpack.c.b16 %v3000, %v2978
        %v3925 = vpack.c.b16 %v3001, %v2979
        %v3926 = vpack.c.b16 %v3002, %v2980
        %v3927 = vpack.c.b16 %v3003, %v2981
        %v3928 = vpack.c.b16 %v3004, %v2982
        %v3929 = vpack.c.b16 %v3027, %v3005
        %v3930 = vpack.c.b16 %v3028, %v3006
        %v3931 = vpack.c.b16 %v3029, %v3007
        %v3932 = vpack.c.b16 %v3030, %v3008
        %v3933 = vpack.c.b16 %v3031, %v3009
        %v3934 = vpack.c.b16 %v3032, %v3010
        %v3935 = vpack.c.b16 %v3033, %v3011
        %v3936 = vpack.c.b16 %v3034, %v3012
        %v3937 = vpack.c.b16 %v3035, %v3013
        %v3938 = vpack.c.b16 %v3036, %v3014
        %v3939 = vpack.c.b16 %v3037, %v3015
        %v3940 = vpack.c.b16 %v3038, %v3016
        %v3941 = vpack.c.b16 %v3039, %v3017
        %v3942 = vpack.c.b16 %v3040, %v3018
        %v3943 = vpack.c.b16 %v3041, %v3019
        %v3944 = vpack.c.b16 %v3042, %v3020
        %v3945 = vpack.c.b16 %v3043, %v3021
        %v3946 = vpack.c.b16 %v3044, %v3022
        %v3947 = vpack.c.b16 %v3045, %v3023
        %v3948 = vpack.c.b16 %v3046, %v3024
        %v3949 = vpack.c.b16 %v3047, %v3025
        %v3950 = vpack.c.b16 %v3048, %v3026
        %v3951 = vpack.c.b16 %v3071, %v3049
        %v3952 = vpack.c.b16 %v3072, %v3050
        %v3953 = vpack.c.b16 %v3073, %v3051
        %v3954 = vpack.c.b16 %v3074, %v3052
        %v3955 = vpack.c.b16 %v3075, %v3053
        %v3956 = vpack.c.b16 %v3076, %v3054
        %v3957 = vpack.c.b16 %v3077, %v3055
        %v3958 = vpack.c.b16 %v3078, %v3056
        %v3959 = vpack.c.b16 %v3079, %v3057
        %v3960 = vpack.c.b16 %v3080, %v3058
        %v3961 = vpack.c.b16 %v3081, %v3059
        %v3962 = vpack.c.b16 %v3082, %v3060
        %v3963 = vpack.c.b16 %v3083, %v3061
        %v3964 = vpack.c.b16 %v3084, %v3062
        %v3965 = vpack.c.b16 %v3085, %v3063
        %v3966 = vpack.c.b16 %v3086, %v3064
        %v3967 = vpack.c.b16 %v3087, %v3065
        %v3968 = vpack.c.b16 %v3088, %v3066
        %v3969 = vpack.c.b16 %v3089, %v3067
        %v3970 = vpack.c.b16 %v3090, %v3068
        %v3971 = vpack.c.b16 %v3091, %v3069
        %v3972 = vpack.c.b16 %v3092, %v3070
        %v3973 = vpack.c.b16 %v3115, %v3093
        %v3974 = vpack.c.b16 %v3116, %v3094
        %v3975 = vpack.c.b16 %v3117, %v3095
        %v3976 = vpack.c.b16 %v3118, %v3096
        %v3977 = vpack.c.b16 %v3119, %v3097
        %v3978 = vpack.c.b16 %v3120, %v3098
        %v3979 = vpack.c.b16 %v3121, %v3099
        %v3980 = vpack.c.b16 %v3122, %v3100
        %v3981 = vpack.c.b16 %v3123, %v3101
        %v3982 = vpack.c.b16 %v3124, %v3102
        %v3983 = vpack.c.b16 %v3125, %v3103
        %v3984 = vpack.c.b16 %v3126, %v3104
        %v3985 = vpack.c.b16 %v3127, %v3105
        %v3986 = vpack.c.b16 %v3128, %v3106
        %v3987 = vpack.c.b16 %v3129, %v3107
        %v3988 = vpack.c.b16 %v3130, %v3108
        %v3989 = vpack.c.b16 %v3131, %v3109
        %v3990 = vpack.c.b16 %v3132, %v3110
        %v3991 = vpack.c.b16 %v3133, %v3111
        %v3992 = vpack.c.b16 %v3134, %v3112
        %v3993 = vpack.c.b16 %v3135, %v3113
        %v3994 = vpack.c.b16 %v3136, %v3114
        %v3995 = vpack.c.b16 %v3159, %v3137
        %v3996 = vpack.c.b16 %v3160, %v3138
        %v3997 = vpack.c.b16 %v3161, %v3139
        %v3998 = vpack.c.b16 %v3162, %v3140
        %v3999 = vpack.c.b16 %v3163, %v3141
        %v4000 = vpack.c.b16 %v3164, %v3142
        %v4001 = vpack.c.b16 %v3165, %v3143
        %v4002 = vpack.c.b16 %v3166, %v3144
        %v4003 = vpack.c.b16 %v3167, %v3145
        %v4004 = vpack.c.b16 %v3168, %v3146
        %v4005 = vpack.c.b16 %v3169, %v3147
        %v4006 = vpack.c.b16 %v3170, %v3148
        %v4007 = vpack.c.b16 %v3171, %v3149
        %v4008 = vpack.c.b16 %v3172, %v3150
        %v4009 = vpack.c.b16 %v3173, %v3151
        %v4010 = vpack.c.b16 %v3174, %v3152
        %v4011 = vpack.c.b16 %v3175, %v3153
        %v4012 = vpack.c.b16 %v3176, %v3154
        %v4013 = vpack.c.b16 %v3177, %v3155
        %v4014 = vpack.c.b16 %v3178, %v3156
        %v4015 = vpack.c.b16 %v3179, %v3157
        %v4016 = vpack.c.b16 %v3180, %v3158
        %v4017 = vpack.c.b16 %v3203, %v3181
        %v4018 = vpack.c.b16 %v3204, %v3182
        %v4019 = vpack.c.b16 %v3205, %v3183
        %v4020 = vpack.c.b16 %v3206, %v3184
        %v4021 = vpack.c.b16 %v3207, %v3185
        %v4022 = vpack.c.b16 %v3208, %v3186
        %v4023 = vpack.c.b16 %v3209, %v3187
        %v4024 = vpack.c.b16 %v3210, %v3188
        %v4025 = vpack.c.b16 %v3211, %v3189
        %v4026 = vpack.c.b16 %v3212, %v3190
        %v4027 = vpack.c.b16 %v3213, %v3191
        %v4028 = vpack.c.b16 %v3214, %v3192
        %v4029 = vpack.c.b16 %v3215, %v3193
        %v4030 = vpack.c.b16 %v3216, %v3194
        %v4031 = vpack.c.b16 %v3217, %v3195
        %v4032 = vpack.c.b16 %v3218, %v3196
        %v4033 = vpack.c.b16 %v3219, %v3197
        %v4034 = vpack.c.b16 %v3220, %v3198
        %v4035 = vpack.c.b16 %v3221, %v3199
        %v4036 = vpack.c.b16 %v3222, %v3200
        %v4037 = vpack.c.b16 %v3223, %v3201
        %v4038 = vpack.c.b16 %v3224, %v3202
        %v4039 = vpack.c.b16 %v3247, %v3225
        %v4040 = vpack.c.b16 %v3248, %v3226
        %v4041 = vpack.c.b16 %v3249, %v3227
        %v4042 = vpack.c.b16 %v3250, %v3228
        %v4043 = vpack.c.b16 %v3251, %v3229
        %v4044 = vpack.c.b16 %v3252, %v3230
        %v4045 = vpack.c.b16 %v3253, %v3231
        %v4046 = vpack.c.b16 %v3254, %v3232
        %v4047 = vpack.c.b16 %v3255, %v3233
        %v4048 = vpack.c.b16 %v3256, %v3234
        %v4049 = vpack.c.b16 %v3257, %v3235
        %v4050 = vpack.c.b16 %v3258, %v3236
        %v4051 = vpack.c.b16 %v3259, %v3237
        %v4052 = vpack.c.b16 %v3260, %v3238
        %v4053 = vpack.c.b16 %v3261, %v3239
        %v4054 = vpack.c.b16 %v3262, %v3240
        %v4055 = vpack.c.b16 %v3263, %v3241
        %v4056 = vpack.c.b16 %v3264, %v3242
        %v4057 = vpack.c.b16 %v3265, %v3243
        %v4058 = vpack.c.b16 %v3266, %v3244
        %v4059 = vpack.c.b16 %v3267, %v3245
        %v4060 = vpack.c.b16 %v3268, %v3246
        %v4061 = vpack.c.b16 %v3291, %v3269
        %v4062 = vpack.c.b16 %v3292, %v3270
        %v4063 = vpack.c.b16 %v3293, %v3271
        %v4064 = vpack.c.b16 %v3294, %v3272
        %v4065 = vpack.c.b16 %v3295, %v3273
        %v4066 = vpack.c.b16 %v3296, %v3274
        %v4067 = vpack.c.b16 %v3297, %v3275
        %v4068 = vpack.c.b16 %v3298, %v3276
        %v4069 = vpack.c.b16 %v3299, %v3277
        %v4070 = vpack.c.b16 %v3300, %v3278
        %v4071 = vpack.c.b16 %v3301, %v3279
        %v4072 = vpack.c.b16 %v3302, %v3280
        %v4073 = vpack.c.b16 %v3303, %v3281
        %v4074 = vpack.c.b16 %v3304, %v3282
        %v4075 = vpack.c.b16 %v3305, %v3283
        %v4076 = vpack.c.b16 %v3306, %v3284
        %v4077 = vpack.c.b16 %v3307, %v3285
        %v4078 = vpack.c.b16 %v3308, %v3286
        %v4079 = vpack.c.b16 %v3309, %v3287
        %v4080 = vpack.c.b16 %v3310, %v3288
        %v4081 = vpack.c.b16 %v3311, %v3289
        %v4082 = vpack.c.b16 %v3312, %v3290
        %v4083 = vpack.c.b16 %v3335, %v3313
        %v4084 = vpack.c.b16 %v3336, %v3314
        %v4085 = vpack.c.b16 %v3337, %v3315
        %v4086 = vpack.c.b16 %v3338, %v3316
        %v4087 = vpack.c.b16 %v3339, %v3317
        %v4088 = vpack.c.b16 %v3340, %v3318
        %v4089 = vpack.c.b16 %v3341, %v3319
        %v4090 = vpack.c.b16 %v3342, %v3320
        %v4091 = vpack.c.b16 %v3343, %v3321
        %v4092 = vpack.c.b16 %v3344, %v3322
        %v4093 = vpack.c.b16 %v3345, %v3323
        %v4094 = vpack.c.b16 %v3346, %v3324
        %v4095 = vpack.c.b16 %v3347, %v3325
        %v4096 = vpack.c.b16 %v3348, %v3326
        %v4097 = vpack.c.b16 %v3349, %v3327
        %v4098 = vpack.c.b16 %v3350, %v3328
        %v4099 = vpack.c.b16 %v3351, %v3329
        %v4100 = vpack.c.b16 %v3352, %v3330
        %v4101 = vpack.c.b16 %v3353, %v3331
        %v4102 = vpack.c.b16 %v3354, %v3332
        %v4103 = vpack.c.b16 %v3355, %v3333
        %v4104 = vpack.c.b16 %v3356, %v3334
        %v4105 = vpack.c.b16 %v3379, %v3357
        %v4106 = vpack.c.b16 %v3380, %v3358
        %v4107 = vpack.c.b16 %v3381, %v3359
        %v4108 = vpack.c.b16 %v3382, %v3360
        %v4109 = vpack.c.b16 %v3383, %v3361
        %v4110 = vpack.c.b16 %v3384, %v3362
        %v4111 = vpack.c.b16 %v3385, %v3363
        %v4112 = vpack.c.b16 %v3386, %v3364
        %v4113 = vpack.c.b16 %v3387, %v3365
        %v4114 = vpack.c.b16 %v3388, %v3366
        %v4115 = vpack.c.b16 %v3389, %v3367
        %v4116 = vpack.c.b16 %v3390, %v3368
        %v4117 = vpack.c.b16 %v3391, %v3369
        %v4118 = vpack.c.b16 %v3392, %v3370
        %v4119 = vpack.c.b16 %v3393, %v3371
        %v4120 = vpack.c.b16 %v3394, %v3372
        %v4121 = vpack.c.b16 %v3395, %v3373
        %v4122 = vpack.c.b16 %v3396, %v3374
        %v4123 = vpack.c.b16 %v3397, %v3375
        %v4124 = vpack.c.b16 %v3398, %v3376
        %v4125 = vpack.c.b16 %v3399, %v3377
        %v4126 = vpack.c.b16 %v3400, %v3378
        %v4127 = vpack.c.b16 %v3423, %v3401
        %v4128 = vpack.c.b16 %v3424, %v3402
        %v4129 = vpack.c.b16 %v3425, %v3403
        %v4130 = vpack.c.b16 %v3426, %v3404
        %v4131 = vpack.c.b16 %v3427, %v3405
        %v4132 = vpack.c.b16 %v3428, %v3406
        %v4133 = vpack.c.b16 %v3429, %v3407
        %v4134 = vpack.c.b16 %v3430, %v3408
        %v4135 = vpack.c.b16 %v3431, %v3409
        %v4136 = vpack.c.b16 %v3432, %v3410
        %v4137 = vpack.c.b16 %v3433, %v3411
        %v4138 = vpack.c.b16 %v3434, %v3412
        %v4139 = vpack.c.b16 %v3435, %v3413
        %v4140 = vpack.c.b16 %v3436, %v3414
        %v4141 = vpack.c.b16 %v3437, %v3415
        %v4142 = vpack.c.b16 %v3438, %v3416
        %v4143 = vpack.c.b16 %v3439, %v3417
        %v4144 = vpack.c.b16 %v3440, %v3418
        %v4145 = vpack.c.b16 %v3441, %v3419
        %v4146 = vpack.c.b16 %v3442, %v3420
        %v4147 = vpack.c.b16 %v3443, %v3421
        %v4148 = vpack.c.b16 %v3444, %v3422
        %4853 = vmatprep.subr.bf16.mxu0 %v3600
        %4854 = vmatpush1.bf16.msra.mxu0 %v3599
        %4855 = vmatprep.subr.bf16.mxu0 %v3578
        %4856 = vmatpush1.bf16.msra.mxu0 %v3577
        %4857 = vmatprep.subr.bf16.mxu0 %v3556
        %4858 = vmatpush1.bf16.msra.mxu0 %v3555
        %4859 = vmatprep.subr.bf16.mxu0 %v3534
        %4860 = vmatpush1.bf16.msra.mxu0 %v3533
        %4861 = vmatprep.subr.bf16.mxu0 %v3512
        %4862 = vmatpush1.bf16.msra.mxu0 %v3511
        %4863 = vmatprep.subr.bf16.mxu0 %v3490
        %4864 = vmatpush1.bf16.msra.mxu0 %v3489
        %4865 = vmatprep.subr.bf16.mxu0 %v3468
        %4866 = vmatpush1.bf16.msra.mxu0 %v3467
        %4867 = vmatprep.subr.bf16.mxu0 %v3446
        %4868 = vmatpush1.bf16.msra.mxu0 %v3445
        %4869 = vmatprep.subr.bf16.mxu0 %v3776
        %4870 = vmatpush2.bf16.msra.mxu0 %v3775
        %4871 = vmatprep.subr.bf16.mxu0 %v3754
        %4872 = vmatpush2.bf16.msra.mxu0 %v3753
        %4873 = vmatprep.subr.bf16.mxu0 %v3732
        %4874 = vmatpush2.bf16.msra.mxu0 %v3731
        %4875 = vmatprep.subr.bf16.mxu0 %v3710
        %4876 = vmatpush2.bf16.msra.mxu0 %v3709
        %4877 = vmatprep.subr.bf16.mxu0 %v3688
        %4878 = vmatpush2.bf16.msra.mxu0 %v3687
        %4879 = vmatprep.subr.bf16.mxu0 %v3666
        %4880 = vmatpush2.bf16.msra.mxu0 %v3665
        %4881 = vmatprep.subr.bf16.mxu0 %v3644
        %4882 = vmatpush2.bf16.msra.mxu0 %v3643
        %4883 = vmatprep.subr.bf16.mxu0 %v3622
        %4884 = vmatpush2.bf16.msra.mxu0 %v3621
        %4885 = vmatprep.mubr.bf16.mxu0 %v510
        %4886 = vmatmul.mubr.bf16.gmra.mxu0 %v509
        %v4887 = vpop.f32.mrf.mxu0
        %v4888 = vadd.f32 %v1226, %v4887
        %v4889 = vpop.f32.mrf.mxu0
        %v4890 = vadd.f32 %v1230, %v4889
        %v4891 = vpop.f32.mrf.mxu0
        %v4892 = vpop.f32.mrf.mxu0
        %4893 = vdwg.mxu0
        %4894 = vmatprep.subr.bf16.mxu0 %v3952
        %4895 = vmatpush1.bf16.msra.mxu0 %v3951
        %4896 = vmatprep.subr.bf16.mxu0 %v3930
        %4897 = vmatpush1.bf16.msra.mxu0 %v3929
        %4898 = vmatprep.subr.bf16.mxu0 %v3908
        %4899 = vmatpush1.bf16.msra.mxu0 %v3907
        %4900 = vmatprep.subr.bf16.mxu0 %v3886
        %4901 = vmatpush1.bf16.msra.mxu0 %v3885
        %4902 = vmatprep.subr.bf16.mxu0 %v3864
        %4903 = vmatpush1.bf16.msra.mxu0 %v3863
        %4904 = vmatprep.subr.bf16.mxu0 %v3842
        %4905 = vmatpush1.bf16.msra.mxu0 %v3841
        %4906 = vmatprep.subr.bf16.mxu0 %v3820
        %4907 = vmatpush1.bf16.msra.mxu0 %v3819
        %4908 = vmatprep.subr.bf16.mxu0 %v3798
        %4909 = vmatpush1.bf16.msra.mxu0 %v3797
        %4910 = vmatprep.subr.bf16.mxu0 %v4128
        %4911 = vmatpush2.bf16.msra.mxu0 %v4127
        %4912 = vmatprep.subr.bf16.mxu0 %v4106
        %4913 = vmatpush2.bf16.msra.mxu0 %v4105
        %4914 = vmatprep.subr.bf16.mxu0 %v4084
        %4915 = vmatpush2.bf16.msra.mxu0 %v4083
        %4916 = vmatprep.subr.bf16.mxu0 %v4062
        %4917 = vmatpush2.bf16.msra.mxu0 %v4061
        %4918 = vmatprep.subr.bf16.mxu0 %v4040
        %4919 = vmatpush2.bf16.msra.mxu0 %v4039
        %4920 = vmatprep.subr.bf16.mxu0 %v4018
        %4921 = vmatpush2.bf16.msra.mxu0 %v4017
        %4922 = vmatprep.subr.bf16.mxu0 %v3996
        %4923 = vmatpush2.bf16.msra.mxu0 %v3995
        %4924 = vmatprep.subr.bf16.mxu0 %v3974
        %4925 = vmatpush2.bf16.msra.mxu0 %v3973
        %4926 = vmatprep.mubr.bf16.mxu0 %v512
        %4927 = vmatmul.mubr.bf16.gmra.mxu0 %v511
        %v4928 = vpop.f32.mrf.mxu0
        %v4929 = vadd.f32 %v4888, %v4928
        %v4930 = vpop.f32.mrf.mxu0
        %v4931 = vadd.f32 %v4890, %v4930
        %v4932 = vpop.f32.mrf.mxu0
        %v4933 = vpop.f32.mrf.mxu0
        %4934 = vdwg.mxu0
        %4935 = vmatprep.subr.bf16.mxu0 %v3602
        %4936 = vmatpush1.bf16.msra.mxu0 %v3601
        %4937 = vmatprep.subr.bf16.mxu0 %v3580
        %4938 = vmatpush1.bf16.msra.mxu0 %v3579
        %4939 = vmatprep.subr.bf16.mxu0 %v3558
        %4940 = vmatpush1.bf16.msra.mxu0 %v3557
        %4941 = vmatprep.subr.bf16.mxu0 %v3536
        %4942 = vmatpush1.bf16.msra.mxu0 %v3535
        %4943 = vmatprep.subr.bf16.mxu0 %v3514
        %4944 = vmatpush1.bf16.msra.mxu0 %v3513
        %4945 = vmatprep.subr.bf16.mxu0 %v3492
        %4946 = vmatpush1.bf16.msra.mxu0 %v3491
        %4947 = vmatprep.subr.bf16.mxu0 %v3470
        %4948 = vmatpush1.bf16.msra.mxu0 %v3469
        %4949 = vmatprep.subr.bf16.mxu0 %v3448
        %4950 = vmatpush1.bf16.msra.mxu0 %v3447
        %4951 = vmatprep.subr.bf16.mxu0 %v3778
        %4952 = vmatpush2.bf16.msra.mxu0 %v3777
        %4953 = vmatprep.subr.bf16.mxu0 %v3756
        %4954 = vmatpush2.bf16.msra.mxu0 %v3755
        %4955 = vmatprep.subr.bf16.mxu0 %v3734
        %4956 = vmatpush2.bf16.msra.mxu0 %v3733
        %4957 = vmatprep.subr.bf16.mxu0 %v3712
        %4958 = vmatpush2.bf16.msra.mxu0 %v3711
        %4959 = vmatprep.subr.bf16.mxu0 %v3690
        %4960 = vmatpush2.bf16.msra.mxu0 %v3689
        %4961 = vmatprep.subr.bf16.mxu0 %v3668
        %4962 = vmatpush2.bf16.msra.mxu0 %v3667
        %4963 = vmatprep.subr.bf16.mxu0 %v3646
        %4964 = vmatpush2.bf16.msra.mxu0 %v3645
        %4965 = vmatprep.subr.bf16.mxu0 %v3624
        %4966 = vmatpush2.bf16.msra.mxu0 %v3623
        %4967 = vmatprep.mubr.bf16.mxu0 %v510
        %4968 = vmatmul.mubr.bf16.gmra.mxu0 %v509
        %v4969 = vpop.f32.mrf.mxu0
        %v4970 = vadd.f32 %v1234, %v4969
        %v4971 = vpop.f32.mrf.mxu0
        %v4972 = vadd.f32 %v1238, %v4971
        %v4973 = vpop.f32.mrf.mxu0
        %v4974 = vpop.f32.mrf.mxu0
        %4975 = vdwg.mxu0
        %4976 = vmatprep.subr.bf16.mxu0 %v3954
        %4977 = vmatpush1.bf16.msra.mxu0 %v3953
        %4978 = vmatprep.subr.bf16.mxu0 %v3932
        %4979 = vmatpush1.bf16.msra.mxu0 %v3931
        %4980 = vmatprep.subr.bf16.mxu0 %v3910
        %4981 = vmatpush1.bf16.msra.mxu0 %v3909
        %4982 = vmatprep.subr.bf16.mxu0 %v3888
        %4983 = vmatpush1.bf16.msra.mxu0 %v3887
        %4984 = vmatprep.subr.bf16.mxu0 %v3866
        %4985 = vmatpush1.bf16.msra.mxu0 %v3865
        %4986 = vmatprep.subr.bf16.mxu0 %v3844
        %4987 = vmatpush1.bf16.msra.mxu0 %v3843
        %4988 = vmatprep.subr.bf16.mxu0 %v3822
        %4989 = vmatpush1.bf16.msra.mxu0 %v3821
        %4990 = vmatprep.subr.bf16.mxu0 %v3800
        %4991 = vmatpush1.bf16.msra.mxu0 %v3799
        %4992 = vmatprep.subr.bf16.mxu0 %v4130
        %4993 = vmatpush2.bf16.msra.mxu0 %v4129
        %4994 = vmatprep.subr.bf16.mxu0 %v4108
        %4995 = vmatpush2.bf16.msra.mxu0 %v4107
        %4996 = vmatprep.subr.bf16.mxu0 %v4086
        %4997 = vmatpush2.bf16.msra.mxu0 %v4085
        %4998 = vmatprep.subr.bf16.mxu0 %v4064
        %4999 = vmatpush2.bf16.msra.mxu0 %v4063
        %5000 = vmatprep.subr.bf16.mxu0 %v4042
        %5001 = vmatpush2.bf16.msra.mxu0 %v4041
        %5002 = vmatprep.subr.bf16.mxu0 %v4020
        %5003 = vmatpush2.bf16.msra.mxu0 %v4019
        %5004 = vmatprep.subr.bf16.mxu0 %v3998
        %5005 = vmatpush2.bf16.msra.mxu0 %v3997
        %5006 = vmatprep.subr.bf16.mxu0 %v3976
        %5007 = vmatpush2.bf16.msra.mxu0 %v3975
        %5008 = vmatprep.mubr.bf16.mxu0 %v512
        %5009 = vmatmul.mubr.bf16.gmra.mxu0 %v511
        %v5010 = vpop.f32.mrf.mxu0
        %v5011 = vadd.f32 %v4970, %v5010
        %v5012 = vpop.f32.mrf.mxu0
        %v5013 = vadd.f32 %v4972, %v5012
        %v5014 = vpop.f32.mrf.mxu0
        %v5015 = vpop.f32.mrf.mxu0
        %5016 = vdwg.mxu0
        %5017 = vmatprep.subr.bf16.mxu0 %v3604
        %5018 = vmatpush1.bf16.msra.mxu0 %v3603
        %5019 = vmatprep.subr.bf16.mxu0 %v3582
        %5020 = vmatpush1.bf16.msra.mxu0 %v3581
        %5021 = vmatprep.subr.bf16.mxu0 %v3560
        %5022 = vmatpush1.bf16.msra.mxu0 %v3559
        %5023 = vmatprep.subr.bf16.mxu0 %v3538
        %5024 = vmatpush1.bf16.msra.mxu0 %v3537
        %5025 = vmatprep.subr.bf16.mxu0 %v3516
        %5026 = vmatpush1.bf16.msra.mxu0 %v3515
        %5027 = vmatprep.subr.bf16.mxu0 %v3494
        %5028 = vmatpush1.bf16.msra.mxu0 %v3493
        %5029 = vmatprep.subr.bf16.mxu0 %v3472
        %5030 = vmatpush1.bf16.msra.mxu0 %v3471
        %5031 = vmatprep.subr.bf16.mxu0 %v3450
        %5032 = vmatpush1.bf16.msra.mxu0 %v3449
        %5033 = vmatprep.subr.bf16.mxu0 %v3780
        %5034 = vmatpush2.bf16.msra.mxu0 %v3779
        %5035 = vmatprep.subr.bf16.mxu0 %v3758
        %5036 = vmatpush2.bf16.msra.mxu0 %v3757
        %5037 = vmatprep.subr.bf16.mxu0 %v3736
        %5038 = vmatpush2.bf16.msra.mxu0 %v3735
        %5039 = vmatprep.subr.bf16.mxu0 %v3714
        %5040 = vmatpush2.bf16.msra.mxu0 %v3713
        %5041 = vmatprep.subr.bf16.mxu0 %v3692
        %5042 = vmatpush2.bf16.msra.mxu0 %v3691
        %5043 = vmatprep.subr.bf16.mxu0 %v3670
        %5044 = vmatpush2.bf16.msra.mxu0 %v3669
        %5045 = vmatprep.subr.bf16.mxu0 %v3648
        %5046 = vmatpush2.bf16.msra.mxu0 %v3647
        %5047 = vmatprep.subr.bf16.mxu0 %v3626
        %5048 = vmatpush2.bf16.msra.mxu0 %v3625
        %5049 = vmatprep.mubr.bf16.mxu0 %v510
        %5050 = vmatmul.mubr.bf16.gmra.mxu0 %v509
        %v5051 = vpop.f32.mrf.mxu0
        %v5052 = vadd.f32 %v1242, %v5051
        %v5053 = vpop.f32.mrf.mxu0
        %v5054 = vadd.f32 %v1246, %v5053
        %v5055 = vpop.f32.mrf.mxu0
        %v5056 = vpop.f32.mrf.mxu0
        %5057 = vdwg.mxu0
        %5058 = vmatprep.subr.bf16.mxu0 %v3956
        %5059 = vmatpush1.bf16.msra.mxu0 %v3955
        %5060 = vmatprep.subr.bf16.mxu0 %v3934
        %5061 = vmatpush1.bf16.msra.mxu0 %v3933
        %5062 = vmatprep.subr.bf16.mxu0 %v3912
        %5063 = vmatpush1.bf16.msra.mxu0 %v3911
        %5064 = vmatprep.subr.bf16.mxu0 %v3890
        %5065 = vmatpush1.bf16.msra.mxu0 %v3889
        %5066 = vmatprep.subr.bf16.mxu0 %v3868
        %5067 = vmatpush1.bf16.msra.mxu0 %v3867
        %5068 = vmatprep.subr.bf16.mxu0 %v3846
        %5069 = vmatpush1.bf16.msra.mxu0 %v3845
        %5070 = vmatprep.subr.bf16.mxu0 %v3824
        %5071 = vmatpush1.bf16.msra.mxu0 %v3823
        %5072 = vmatprep.subr.bf16.mxu0 %v3802
        %5073 = vmatpush1.bf16.msra.mxu0 %v3801
        %5074 = vmatprep.subr.bf16.mxu0 %v4132
        %5075 = vmatpush2.bf16.msra.mxu0 %v4131
        %5076 = vmatprep.subr.bf16.mxu0 %v4110
        %5077 = vmatpush2.bf16.msra.mxu0 %v4109
        %5078 = vmatprep.subr.bf16.mxu0 %v4088
        %5079 = vmatpush2.bf16.msra.mxu0 %v4087
        %5080 = vmatprep.subr.bf16.mxu0 %v4066
        %5081 = vmatpush2.bf16.msra.mxu0 %v4065
        %5082 = vmatprep.subr.bf16.mxu0 %v4044
        %5083 = vmatpush2.bf16.msra.mxu0 %v4043
        %5084 = vmatprep.subr.bf16.mxu0 %v4022
        %5085 = vmatpush2.bf16.msra.mxu0 %v4021
        %5086 = vmatprep.subr.bf16.mxu0 %v4000
        %5087 = vmatpush2.bf16.msra.mxu0 %v3999
        %5088 = vmatprep.subr.bf16.mxu0 %v3978
        %5089 = vmatpush2.bf16.msra.mxu0 %v3977
        %5090 = vmatprep.mubr.bf16.mxu0 %v512
        %5091 = vmatmul.mubr.bf16.gmra.mxu0 %v511
        %v5092 = vpop.f32.mrf.mxu0
        %v5093 = vadd.f32 %v5052, %v5092
        %v5094 = vpop.f32.mrf.mxu0
        %v5095 = vadd.f32 %v5054, %v5094
        %v5096 = vpop.f32.mrf.mxu0
        %v5097 = vpop.f32.mrf.mxu0
        %5098 = vdwg.mxu0
        %5099 = vmatprep.subr.bf16.mxu0 %v3606
        %5100 = vmatpush1.bf16.msra.mxu0 %v3605
        %5101 = vmatprep.subr.bf16.mxu0 %v3584
        %5102 = vmatpush1.bf16.msra.mxu0 %v3583
        %5103 = vmatprep.subr.bf16.mxu0 %v3562
        %5104 = vmatpush1.bf16.msra.mxu0 %v3561
        %5105 = vmatprep.subr.bf16.mxu0 %v3540
        %5106 = vmatpush1.bf16.msra.mxu0 %v3539
        %5107 = vmatprep.subr.bf16.mxu0 %v3518
        %5108 = vmatpush1.bf16.msra.mxu0 %v3517
        %5109 = vmatprep.subr.bf16.mxu0 %v3496
        %5110 = vmatpush1.bf16.msra.mxu0 %v3495
        %5111 = vmatprep.subr.bf16.mxu0 %v3474
        %5112 = vmatpush1.bf16.msra.mxu0 %v3473
        %5113 = vmatprep.subr.bf16.mxu0 %v3452
        %5114 = vmatpush1.bf16.msra.mxu0 %v3451
        %5115 = vmatprep.subr.bf16.mxu0 %v3782
        %5116 = vmatpush2.bf16.msra.mxu0 %v3781
        %5117 = vmatprep.subr.bf16.mxu0 %v3760
        %5118 = vmatpush2.bf16.msra.mxu0 %v3759
        %5119 = vmatprep.subr.bf16.mxu0 %v3738
        %5120 = vmatpush2.bf16.msra.mxu0 %v3737
        %5121 = vmatprep.subr.bf16.mxu0 %v3716
        %5122 = vmatpush2.bf16.msra.mxu0 %v3715
        %5123 = vmatprep.subr.bf16.mxu0 %v3694
        %5124 = vmatpush2.bf16.msra.mxu0 %v3693
        %5125 = vmatprep.subr.bf16.mxu0 %v3672
        %5126 = vmatpush2.bf16.msra.mxu0 %v3671
        %5127 = vmatprep.subr.bf16.mxu0 %v3650
        %5128 = vmatpush2.bf16.msra.mxu0 %v3649
        %5129 = vmatprep.subr.bf16.mxu0 %v3628
        %5130 = vmatpush2.bf16.msra.mxu0 %v3627
        %5131 = vmatprep.mubr.bf16.mxu0 %v510
        %5132 = vmatmul.mubr.bf16.gmra.mxu0 %v509
        %v5133 = vpop.f32.mrf.mxu0
        %v5134 = vadd.f32 %v1250, %v5133
        %v5135 = vpop.f32.mrf.mxu0
        %v5136 = vadd.f32 %v1254, %v5135
        %v5137 = vpop.f32.mrf.mxu0
        %v5138 = vpop.f32.mrf.mxu0
        %5139 = vdwg.mxu0
        %5140 = vmatprep.subr.bf16.mxu0 %v3958
        %5141 = vmatpush1.bf16.msra.mxu0 %v3957
        %5142 = vmatprep.subr.bf16.mxu0 %v3936
        %5143 = vmatpush1.bf16.msra.mxu0 %v3935
        %5144 = vmatprep.subr.bf16.mxu0 %v3914
        %5145 = vmatpush1.bf16.msra.mxu0 %v3913
        %5146 = vmatprep.subr.bf16.mxu0 %v3892
        %5147 = vmatpush1.bf16.msra.mxu0 %v3891
        %5148 = vmatprep.subr.bf16.mxu0 %v3870
        %5149 = vmatpush1.bf16.msra.mxu0 %v3869
        %5150 = vmatprep.subr.bf16.mxu0 %v3848
        %5151 = vmatpush1.bf16.msra.mxu0 %v3847
        %5152 = vmatprep.subr.bf16.mxu0 %v3826
        %5153 = vmatpush1.bf16.msra.mxu0 %v3825
        %5154 = vmatprep.subr.bf16.mxu0 %v3804
        %5155 = vmatpush1.bf16.msra.mxu0 %v3803
        %5156 = vmatprep.subr.bf16.mxu0 %v4134
        %5157 = vmatpush2.bf16.msra.mxu0 %v4133
        %5158 = vmatprep.subr.bf16.mxu0 %v4112
        %5159 = vmatpush2.bf16.msra.mxu0 %v4111
        %5160 = vmatprep.subr.bf16.mxu0 %v4090
        %5161 = vmatpush2.bf16.msra.mxu0 %v4089
        %5162 = vmatprep.subr.bf16.mxu0 %v4068
        %5163 = vmatpush2.bf16.msra.mxu0 %v4067
        %5164 = vmatprep.subr.bf16.mxu0 %v4046
        %5165 = vmatpush2.bf16.msra.mxu0 %v4045
        %5166 = vmatprep.subr.bf16.mxu0 %v4024
        %5167 = vmatpush2.bf16.msra.mxu0 %v4023
        %5168 = vmatprep.subr.bf16.mxu0 %v4002
        %5169 = vmatpush2.bf16.msra.mxu0 %v4001
        %5170 = vmatprep.subr.bf16.mxu0 %v3980
        %5171 = vmatpush2.bf16.msra.mxu0 %v3979
        %5172 = vmatprep.mubr.bf16.mxu0 %v512
        %5173 = vmatmul.mubr.bf16.gmra.mxu0 %v511
        %v5174 = vpop.f32.mrf.mxu0
        %v5175 = vadd.f32 %v5134, %v5174
        %v5176 = vpop.f32.mrf.mxu0
        %v5177 = vadd.f32 %v5136, %v5176
        %v5178 = vpop.f32.mrf.mxu0
        %v5179 = vpop.f32.mrf.mxu0
        %5180 = vdwg.mxu0
        %5181 = vmatprep.subr.bf16.mxu0 %v3608
        %5182 = vmatpush1.bf16.msra.mxu0 %v3607
        %5183 = vmatprep.subr.bf16.mxu0 %v3586
        %5184 = vmatpush1.bf16.msra.mxu0 %v3585
        %5185 = vmatprep.subr.bf16.mxu0 %v3564
        %5186 = vmatpush1.bf16.msra.mxu0 %v3563
        %5187 = vmatprep.subr.bf16.mxu0 %v3542
        %5188 = vmatpush1.bf16.msra.mxu0 %v3541
        %5189 = vmatprep.subr.bf16.mxu0 %v3520
        %5190 = vmatpush1.bf16.msra.mxu0 %v3519
        %5191 = vmatprep.subr.bf16.mxu0 %v3498
        %5192 = vmatpush1.bf16.msra.mxu0 %v3497
        %5193 = vmatprep.subr.bf16.mxu0 %v3476
        %5194 = vmatpush1.bf16.msra.mxu0 %v3475
        %5195 = vmatprep.subr.bf16.mxu0 %v3454
        %5196 = vmatpush1.bf16.msra.mxu0 %v3453
        %5197 = vmatprep.subr.bf16.mxu0 %v3784
        %5198 = vmatpush2.bf16.msra.mxu0 %v3783
        %5199 = vmatprep.subr.bf16.mxu0 %v3762
        %5200 = vmatpush2.bf16.msra.mxu0 %v3761
        %5201 = vmatprep.subr.bf16.mxu0 %v3740
        %5202 = vmatpush2.bf16.msra.mxu0 %v3739
        %5203 = vmatprep.subr.bf16.mxu0 %v3718
        %5204 = vmatpush2.bf16.msra.mxu0 %v3717
        %5205 = vmatprep.subr.bf16.mxu0 %v3696
        %5206 = vmatpush2.bf16.msra.mxu0 %v3695
        %5207 = vmatprep.subr.bf16.mxu0 %v3674
        %5208 = vmatpush2.bf16.msra.mxu0 %v3673
        %5209 = vmatprep.subr.bf16.mxu0 %v3652
        %5210 = vmatpush2.bf16.msra.mxu0 %v3651
        %5211 = vmatprep.subr.bf16.mxu0 %v3630
        %5212 = vmatpush2.bf16.msra.mxu0 %v3629
        %5213 = vmatprep.mubr.bf16.mxu0 %v510
        %5214 = vmatmul.mubr.bf16.gmra.mxu0 %v509
        %v5215 = vpop.f32.mrf.mxu0
        %v5216 = vadd.f32 %v1258, %v5215
        %v5217 = vpop.f32.mrf.mxu0
        %v5218 = vadd.f32 %v1262, %v5217
        %v5219 = vpop.f32.mrf.mxu0
        %v5220 = vpop.f32.mrf.mxu0
        %5221 = vdwg.mxu0
        %5222 = vmatprep.subr.bf16.mxu0 %v3960
        %5223 = vmatpush1.bf16.msra.mxu0 %v3959
        %5224 = vmatprep.subr.bf16.mxu0 %v3938
        %5225 = vmatpush1.bf16.msra.mxu0 %v3937
        %5226 = vmatprep.subr.bf16.mxu0 %v3916
        %5227 = vmatpush1.bf16.msra.mxu0 %v3915
        %5228 = vmatprep.subr.bf16.mxu0 %v3894
        %5229 = vmatpush1.bf16.msra.mxu0 %v3893
        %5230 = vmatprep.subr.bf16.mxu0 %v3872
        %5231 = vmatpush1.bf16.msra.mxu0 %v3871
        %5232 = vmatprep.subr.bf16.mxu0 %v3850
        %5233 = vmatpush1.bf16.msra.mxu0 %v3849
        %5234 = vmatprep.subr.bf16.mxu0 %v3828
        %5235 = vmatpush1.bf16.msra.mxu0 %v3827
        %5236 = vmatprep.subr.bf16.mxu0 %v3806
        %5237 = vmatpush1.bf16.msra.mxu0 %v3805
        %5238 = vmatprep.subr.bf16.mxu0 %v4136
        %5239 = vmatpush2.bf16.msra.mxu0 %v4135
        %5240 = vmatprep.subr.bf16.mxu0 %v4114
        %5241 = vmatpush2.bf16.msra.mxu0 %v4113
        %5242 = vmatprep.subr.bf16.mxu0 %v4092
        %5243 = vmatpush2.bf16.msra.mxu0 %v4091
        %5244 = vmatprep.subr.bf16.mxu0 %v4070
        %5245 = vmatpush2.bf16.msra.mxu0 %v4069
        %5246 = vmatprep.subr.bf16.mxu0 %v4048
        %5247 = vmatpush2.bf16.msra.mxu0 %v4047
        %5248 = vmatprep.subr.bf16.mxu0 %v4026
        %5249 = vmatpush2.bf16.msra.mxu0 %v4025
        %5250 = vmatprep.subr.bf16.mxu0 %v4004
        %5251 = vmatpush2.bf16.msra.mxu0 %v4003
        %5252 = vmatprep.subr.bf16.mxu0 %v3982
        %5253 = vmatpush2.bf16.msra.mxu0 %v3981
        %5254 = vmatprep.mubr.bf16.mxu0 %v512
        %5255 = vmatmul.mubr.bf16.gmra.mxu0 %v511
        %v5256 = vpop.f32.mrf.mxu0
        %v5257 = vadd.f32 %v5216, %v5256
        %v5258 = vpop.f32.mrf.mxu0
        %v5259 = vadd.f32 %v5218, %v5258
        %v5260 = vpop.f32.mrf.mxu0
        %v5261 = vpop.f32.mrf.mxu0
        %5262 = vdwg.mxu0
        %5263 = vmatprep.subr.bf16.mxu0 %v3610
        %5264 = vmatpush1.bf16.msra.mxu0 %v3609
        %5265 = vmatprep.subr.bf16.mxu0 %v3588
        %5266 = vmatpush1.bf16.msra.mxu0 %v3587
        %5267 = vmatprep.subr.bf16.mxu0 %v3566
        %5268 = vmatpush1.bf16.msra.mxu0 %v3565
        %5269 = vmatprep.subr.bf16.mxu0 %v3544
        %5270 = vmatpush1.bf16.msra.mxu0 %v3543
        %5271 = vmatprep.subr.bf16.mxu0 %v3522
        %5272 = vmatpush1.bf16.msra.mxu0 %v3521
        %5273 = vmatprep.subr.bf16.mxu0 %v3500
        %5274 = vmatpush1.bf16.msra.mxu0 %v3499
        %5275 = vmatprep.subr.bf16.mxu0 %v3478
        %5276 = vmatpush1.bf16.msra.mxu0 %v3477
        %5277 = vmatprep.subr.bf16.mxu0 %v3456
        %5278 = vmatpush1.bf16.msra.mxu0 %v3455
        %5279 = vmatprep.subr.bf16.mxu0 %v3786
        %5280 = vmatpush2.bf16.msra.mxu0 %v3785
        %5281 = vmatprep.subr.bf16.mxu0 %v3764
        %5282 = vmatpush2.bf16.msra.mxu0 %v3763
        %5283 = vmatprep.subr.bf16.mxu0 %v3742
        %5284 = vmatpush2.bf16.msra.mxu0 %v3741
        %5285 = vmatprep.subr.bf16.mxu0 %v3720
        %5286 = vmatpush2.bf16.msra.mxu0 %v3719
        %5287 = vmatprep.subr.bf16.mxu0 %v3698
        %5288 = vmatpush2.bf16.msra.mxu0 %v3697
        %5289 = vmatprep.subr.bf16.mxu0 %v3676
        %5290 = vmatpush2.bf16.msra.mxu0 %v3675
        %5291 = vmatprep.subr.bf16.mxu0 %v3654
        %5292 = vmatpush2.bf16.msra.mxu0 %v3653
        %5293 = vmatprep.subr.bf16.mxu0 %v3632
        %5294 = vmatpush2.bf16.msra.mxu0 %v3631
        %5295 = vmatprep.mubr.bf16.mxu0 %v510
        %5296 = vmatmul.mubr.bf16.gmra.mxu0 %v509
        %v5297 = vpop.f32.mrf.mxu0
        %v5298 = vadd.f32 %v1266, %v5297
        %v5299 = vpop.f32.mrf.mxu0
        %v5300 = vadd.f32 %v1270, %v5299
        %v5301 = vpop.f32.mrf.mxu0
        %v5302 = vpop.f32.mrf.mxu0
        %5303 = vdwg.mxu0
        %5304 = vmatprep.subr.bf16.mxu0 %v3962
        %5305 = vmatpush1.bf16.msra.mxu0 %v3961
        %5306 = vmatprep.subr.bf16.mxu0 %v3940
        %5307 = vmatpush1.bf16.msra.mxu0 %v3939
        %5308 = vmatprep.subr.bf16.mxu0 %v3918
        %5309 = vmatpush1.bf16.msra.mxu0 %v3917
        %5310 = vmatprep.subr.bf16.mxu0 %v3896
        %5311 = vmatpush1.bf16.msra.mxu0 %v3895
        %5312 = vmatprep.subr.bf16.mxu0 %v3874
        %5313 = vmatpush1.bf16.msra.mxu0 %v3873
        %5314 = vmatprep.subr.bf16.mxu0 %v3852
        %5315 = vmatpush1.bf16.msra.mxu0 %v3851
        %5316 = vmatprep.subr.bf16.mxu0 %v3830
        %5317 = vmatpush1.bf16.msra.mxu0 %v3829
        %5318 = vmatprep.subr.bf16.mxu0 %v3808
        %5319 = vmatpush1.bf16.msra.mxu0 %v3807
        %5320 = vmatprep.subr.bf16.mxu0 %v4138
        %5321 = vmatpush2.bf16.msra.mxu0 %v4137
        %5322 = vmatprep.subr.bf16.mxu0 %v4116
        %5323 = vmatpush2.bf16.msra.mxu0 %v4115
        %5324 = vmatprep.subr.bf16.mxu0 %v4094
        %5325 = vmatpush2.bf16.msra.mxu0 %v4093
        %5326 = vmatprep.subr.bf16.mxu0 %v4072
        %5327 = vmatpush2.bf16.msra.mxu0 %v4071
        %5328 = vmatprep.subr.bf16.mxu0 %v4050
        %5329 = vmatpush2.bf16.msra.mxu0 %v4049
        %5330 = vmatprep.subr.bf16.mxu0 %v4028
        %5331 = vmatpush2.bf16.msra.mxu0 %v4027
        %5332 = vmatprep.subr.bf16.mxu0 %v4006
        %5333 = vmatpush2.bf16.msra.mxu0 %v4005
        %5334 = vmatprep.subr.bf16.mxu0 %v3984
        %5335 = vmatpush2.bf16.msra.mxu0 %v3983
        %5336 = vmatprep.mubr.bf16.mxu0 %v512
        %5337 = vmatmul.mubr.bf16.gmra.mxu0 %v511
        %v5338 = vpop.f32.mrf.mxu0
        %v5339 = vadd.f32 %v5298, %v5338
        %v5340 = vpop.f32.mrf.mxu0
        %v5341 = vadd.f32 %v5300, %v5340
        %v5342 = vpop.f32.mrf.mxu0
        %v5343 = vpop.f32.mrf.mxu0
        %5344 = vdwg.mxu0
        %5345 = vmatprep.subr.bf16.mxu0 %v3612
        %5346 = vmatpush1.bf16.msra.mxu0 %v3611
        %5347 = vmatprep.subr.bf16.mxu0 %v3590
        %5348 = vmatpush1.bf16.msra.mxu0 %v3589
        %5349 = vmatprep.subr.bf16.mxu0 %v3568
        %5350 = vmatpush1.bf16.msra.mxu0 %v3567
        %5351 = vmatprep.subr.bf16.mxu0 %v3546
        %5352 = vmatpush1.bf16.msra.mxu0 %v3545
        %5353 = vmatprep.subr.bf16.mxu0 %v3524
        %5354 = vmatpush1.bf16.msra.mxu0 %v3523
        %5355 = vmatprep.subr.bf16.mxu0 %v3502
        %5356 = vmatpush1.bf16.msra.mxu0 %v3501
        %5357 = vmatprep.subr.bf16.mxu0 %v3480
        %5358 = vmatpush1.bf16.msra.mxu0 %v3479
        %5359 = vmatprep.subr.bf16.mxu0 %v3458
        %5360 = vmatpush1.bf16.msra.mxu0 %v3457
        %5361 = vmatprep.subr.bf16.mxu0 %v3788
        %5362 = vmatpush2.bf16.msra.mxu0 %v3787
        %5363 = vmatprep.subr.bf16.mxu0 %v3766
        %5364 = vmatpush2.bf16.msra.mxu0 %v3765
        %5365 = vmatprep.subr.bf16.mxu0 %v3744
        %5366 = vmatpush2.bf16.msra.mxu0 %v3743
        %5367 = vmatprep.subr.bf16.mxu0 %v3722
        %5368 = vmatpush2.bf16.msra.mxu0 %v3721
        %5369 = vmatprep.subr.bf16.mxu0 %v3700
        %5370 = vmatpush2.bf16.msra.mxu0 %v3699
        %5371 = vmatprep.subr.bf16.mxu0 %v3678
        %5372 = vmatpush2.bf16.msra.mxu0 %v3677
        %5373 = vmatprep.subr.bf16.mxu0 %v3656
        %5374 = vmatpush2.bf16.msra.mxu0 %v3655
        %5375 = vmatprep.subr.bf16.mxu0 %v3634
        %5376 = vmatpush2.bf16.msra.mxu0 %v3633
        %5377 = vmatprep.mubr.bf16.mxu0 %v510
        %5378 = vmatmul.mubr.bf16.gmra.mxu0 %v509
        %v5379 = vpop.f32.mrf.mxu0
        %v5380 = vadd.f32 %v1274, %v5379
        %v5381 = vpop.f32.mrf.mxu0
        %v5382 = vadd.f32 %v1278, %v5381
        %v5383 = vpop.f32.mrf.mxu0
        %v5384 = vpop.f32.mrf.mxu0
        %5385 = vdwg.mxu0
        %5386 = vmatprep.subr.bf16.mxu0 %v3964
        %5387 = vmatpush1.bf16.msra.mxu0 %v3963
        %5388 = vmatprep.subr.bf16.mxu0 %v3942
        %5389 = vmatpush1.bf16.msra.mxu0 %v3941
        %5390 = vmatprep.subr.bf16.mxu0 %v3920
        %5391 = vmatpush1.bf16.msra.mxu0 %v3919
        %5392 = vmatprep.subr.bf16.mxu0 %v3898
        %5393 = vmatpush1.bf16.msra.mxu0 %v3897
        %5394 = vmatprep.subr.bf16.mxu0 %v3876
        %5395 = vmatpush1.bf16.msra.mxu0 %v3875
        %5396 = vmatprep.subr.bf16.mxu0 %v3854
        %5397 = vmatpush1.bf16.msra.mxu0 %v3853
        %5398 = vmatprep.subr.bf16.mxu0 %v3832
        %5399 = vmatpush1.bf16.msra.mxu0 %v3831
        %5400 = vmatprep.subr.bf16.mxu0 %v3810
        %5401 = vmatpush1.bf16.msra.mxu0 %v3809
        %5402 = vmatprep.subr.bf16.mxu0 %v4140
        %5403 = vmatpush2.bf16.msra.mxu0 %v4139
        %5404 = vmatprep.subr.bf16.mxu0 %v4118
        %5405 = vmatpush2.bf16.msra.mxu0 %v4117
        %5406 = vmatprep.subr.bf16.mxu0 %v4096
        %5407 = vmatpush2.bf16.msra.mxu0 %v4095
        %5408 = vmatprep.subr.bf16.mxu0 %v4074
        %5409 = vmatpush2.bf16.msra.mxu0 %v4073
        %5410 = vmatprep.subr.bf16.mxu0 %v4052
        %5411 = vmatpush2.bf16.msra.mxu0 %v4051
        %5412 = vmatprep.subr.bf16.mxu0 %v4030
        %5413 = vmatpush2.bf16.msra.mxu0 %v4029
        %5414 = vmatprep.subr.bf16.mxu0 %v4008
        %5415 = vmatpush2.bf16.msra.mxu0 %v4007
        %5416 = vmatprep.subr.bf16.mxu0 %v3986
        %5417 = vmatpush2.bf16.msra.mxu0 %v3985
        %5418 = vmatprep.mubr.bf16.mxu0 %v512
        %5419 = vmatmul.mubr.bf16.gmra.mxu0 %v511
        %v5420 = vpop.f32.mrf.mxu0
        %v5421 = vadd.f32 %v5380, %v5420
        %v5422 = vpop.f32.mrf.mxu0
        %v5423 = vadd.f32 %v5382, %v5422
        %v5424 = vpop.f32.mrf.mxu0
        %v5425 = vpop.f32.mrf.mxu0
        %5426 = vdwg.mxu0
        %5427 = vmatprep.subr.bf16.mxu0 %v3614
        %5428 = vmatpush1.bf16.msra.mxu0 %v3613
        %5429 = vmatprep.subr.bf16.mxu0 %v3592
        %5430 = vmatpush1.bf16.msra.mxu0 %v3591
        %5431 = vmatprep.subr.bf16.mxu0 %v3570
        %5432 = vmatpush1.bf16.msra.mxu0 %v3569
        %5433 = vmatprep.subr.bf16.mxu0 %v3548
        %5434 = vmatpush1.bf16.msra.mxu0 %v3547
        %5435 = vmatprep.subr.bf16.mxu0 %v3526
        %5436 = vmatpush1.bf16.msra.mxu0 %v3525
        %5437 = vmatprep.subr.bf16.mxu0 %v3504
        %5438 = vmatpush1.bf16.msra.mxu0 %v3503
        %5439 = vmatprep.subr.bf16.mxu0 %v3482
        %5440 = vmatpush1.bf16.msra.mxu0 %v3481
        %5441 = vmatprep.subr.bf16.mxu0 %v3460
        %5442 = vmatpush1.bf16.msra.mxu0 %v3459
        %5443 = vmatprep.subr.bf16.mxu0 %v3790
        %5444 = vmatpush2.bf16.msra.mxu0 %v3789
        %5445 = vmatprep.subr.bf16.mxu0 %v3768
        %5446 = vmatpush2.bf16.msra.mxu0 %v3767
        %5447 = vmatprep.subr.bf16.mxu0 %v3746
        %5448 = vmatpush2.bf16.msra.mxu0 %v3745
        %5449 = vmatprep.subr.bf16.mxu0 %v3724
        %5450 = vmatpush2.bf16.msra.mxu0 %v3723
        %5451 = vmatprep.subr.bf16.mxu0 %v3702
        %5452 = vmatpush2.bf16.msra.mxu0 %v3701
        %5453 = vmatprep.subr.bf16.mxu0 %v3680
        %5454 = vmatpush2.bf16.msra.mxu0 %v3679
        %5455 = vmatprep.subr.bf16.mxu0 %v3658
        %5456 = vmatpush2.bf16.msra.mxu0 %v3657
        %5457 = vmatprep.subr.bf16.mxu0 %v3636
        %5458 = vmatpush2.bf16.msra.mxu0 %v3635
        %5459 = vmatprep.mubr.bf16.mxu0 %v510
        %5460 = vmatmul.mubr.bf16.gmra.mxu0 %v509
        %v5461 = vpop.f32.mrf.mxu0
        %v5462 = vadd.f32 %v1282, %v5461
        %v5463 = vpop.f32.mrf.mxu0
        %v5464 = vadd.f32 %v1286, %v5463
        %v5465 = vpop.f32.mrf.mxu0
        %v5466 = vpop.f32.mrf.mxu0
        %5467 = vdwg.mxu0
        %5468 = vmatprep.subr.bf16.mxu0 %v3966
        %5469 = vmatpush1.bf16.msra.mxu0 %v3965
        %5470 = vmatprep.subr.bf16.mxu0 %v3944
        %5471 = vmatpush1.bf16.msra.mxu0 %v3943
        %5472 = vmatprep.subr.bf16.mxu0 %v3922
        %5473 = vmatpush1.bf16.msra.mxu0 %v3921
        %5474 = vmatprep.subr.bf16.mxu0 %v3900
        %5475 = vmatpush1.bf16.msra.mxu0 %v3899
        %5476 = vmatprep.subr.bf16.mxu0 %v3878
        %5477 = vmatpush1.bf16.msra.mxu0 %v3877
        %5478 = vmatprep.subr.bf16.mxu0 %v3856
        %5479 = vmatpush1.bf16.msra.mxu0 %v3855
        %5480 = vmatprep.subr.bf16.mxu0 %v3834
        %5481 = vmatpush1.bf16.msra.mxu0 %v3833
        %5482 = vmatprep.subr.bf16.mxu0 %v3812
        %5483 = vmatpush1.bf16.msra.mxu0 %v3811
        %5484 = vmatprep.subr.bf16.mxu0 %v4142
        %5485 = vmatpush2.bf16.msra.mxu0 %v4141
        %5486 = vmatprep.subr.bf16.mxu0 %v4120
        %5487 = vmatpush2.bf16.msra.mxu0 %v4119
        %5488 = vmatprep.subr.bf16.mxu0 %v4098
        %5489 = vmatpush2.bf16.msra.mxu0 %v4097
        %5490 = vmatprep.subr.bf16.mxu0 %v4076
        %5491 = vmatpush2.bf16.msra.mxu0 %v4075
        %5492 = vmatprep.subr.bf16.mxu0 %v4054
        %5493 = vmatpush2.bf16.msra.mxu0 %v4053
        %5494 = vmatprep.subr.bf16.mxu0 %v4032
        %5495 = vmatpush2.bf16.msra.mxu0 %v4031
        %5496 = vmatprep.subr.bf16.mxu0 %v4010
        %5497 = vmatpush2.bf16.msra.mxu0 %v4009
        %5498 = vmatprep.subr.bf16.mxu0 %v3988
        %5499 = vmatpush2.bf16.msra.mxu0 %v3987
        %5500 = vmatprep.mubr.bf16.mxu0 %v512
        %5501 = vmatmul.mubr.bf16.gmra.mxu0 %v511
        %v5502 = vpop.f32.mrf.mxu0
        %v5503 = vadd.f32 %v5462, %v5502
        %v5504 = vpop.f32.mrf.mxu0
        %v5505 = vadd.f32 %v5464, %v5504
        %v5506 = vpop.f32.mrf.mxu0
        %v5507 = vpop.f32.mrf.mxu0
        %5508 = vdwg.mxu0
        %5509 = vmatprep.subr.bf16.mxu0 %v3616
        %5510 = vmatpush1.bf16.msra.mxu0 %v3615
        %5511 = vmatprep.subr.bf16.mxu0 %v3594
        %5512 = vmatpush1.bf16.msra.mxu0 %v3593
        %5513 = vmatprep.subr.bf16.mxu0 %v3572
        %5514 = vmatpush1.bf16.msra.mxu0 %v3571
        %5515 = vmatprep.subr.bf16.mxu0 %v3550
        %5516 = vmatpush1.bf16.msra.mxu0 %v3549
        %5517 = vmatprep.subr.bf16.mxu0 %v3528
        %5518 = vmatpush1.bf16.msra.mxu0 %v3527
        %5519 = vmatprep.subr.bf16.mxu0 %v3506
        %5520 = vmatpush1.bf16.msra.mxu0 %v3505
        %5521 = vmatprep.subr.bf16.mxu0 %v3484
        %5522 = vmatpush1.bf16.msra.mxu0 %v3483
        %5523 = vmatprep.subr.bf16.mxu0 %v3462
        %5524 = vmatpush1.bf16.msra.mxu0 %v3461
        %5525 = vmatprep.subr.bf16.mxu0 %v3792
        %5526 = vmatpush2.bf16.msra.mxu0 %v3791
        %5527 = vmatprep.subr.bf16.mxu0 %v3770
        %5528 = vmatpush2.bf16.msra.mxu0 %v3769
        %5529 = vmatprep.subr.bf16.mxu0 %v3748
        %5530 = vmatpush2.bf16.msra.mxu0 %v3747
        %5531 = vmatprep.subr.bf16.mxu0 %v3726
        %5532 = vmatpush2.bf16.msra.mxu0 %v3725
        %5533 = vmatprep.subr.bf16.mxu0 %v3704
        %5534 = vmatpush2.bf16.msra.mxu0 %v3703
        %5535 = vmatprep.subr.bf16.mxu0 %v3682
        %5536 = vmatpush2.bf16.msra.mxu0 %v3681
        %5537 = vmatprep.subr.bf16.mxu0 %v3660
        %5538 = vmatpush2.bf16.msra.mxu0 %v3659
        %5539 = vmatprep.subr.bf16.mxu0 %v3638
        %5540 = vmatpush2.bf16.msra.mxu0 %v3637
        %5541 = vmatprep.mubr.bf16.mxu0 %v510
        %5542 = vmatmul.mubr.bf16.gmra.mxu0 %v509
        %v5543 = vpop.f32.mrf.mxu0
        %v5544 = vadd.f32 %v1290, %v5543
        %v5545 = vpop.f32.mrf.mxu0
        %v5546 = vadd.f32 %v1294, %v5545
        %v5547 = vpop.f32.mrf.mxu0
        %v5548 = vpop.f32.mrf.mxu0
        %5549 = vdwg.mxu0
        %5550 = vmatprep.subr.bf16.mxu0 %v3968
        %5551 = vmatpush1.bf16.msra.mxu0 %v3967
        %5552 = vmatprep.subr.bf16.mxu0 %v3946
        %5553 = vmatpush1.bf16.msra.mxu0 %v3945
        %5554 = vmatprep.subr.bf16.mxu0 %v3924
        %5555 = vmatpush1.bf16.msra.mxu0 %v3923
        %5556 = vmatprep.subr.bf16.mxu0 %v3902
        %5557 = vmatpush1.bf16.msra.mxu0 %v3901
        %5558 = vmatprep.subr.bf16.mxu0 %v3880
        %5559 = vmatpush1.bf16.msra.mxu0 %v3879
        %5560 = vmatprep.subr.bf16.mxu0 %v3858
        %5561 = vmatpush1.bf16.msra.mxu0 %v3857
        %5562 = vmatprep.subr.bf16.mxu0 %v3836
        %5563 = vmatpush1.bf16.msra.mxu0 %v3835
        %5564 = vmatprep.subr.bf16.mxu0 %v3814
        %5565 = vmatpush1.bf16.msra.mxu0 %v3813
        %5566 = vmatprep.subr.bf16.mxu0 %v4144
        %5567 = vmatpush2.bf16.msra.mxu0 %v4143
        %5568 = vmatprep.subr.bf16.mxu0 %v4122
        %5569 = vmatpush2.bf16.msra.mxu0 %v4121
        %5570 = vmatprep.subr.bf16.mxu0 %v4100
        %5571 = vmatpush2.bf16.msra.mxu0 %v4099
        %5572 = vmatprep.subr.bf16.mxu0 %v4078
        %5573 = vmatpush2.bf16.msra.mxu0 %v4077
        %5574 = vmatprep.subr.bf16.mxu0 %v4056
        %5575 = vmatpush2.bf16.msra.mxu0 %v4055
        %5576 = vmatprep.subr.bf16.mxu0 %v4034
        %5577 = vmatpush2.bf16.msra.mxu0 %v4033
        %5578 = vmatprep.subr.bf16.mxu0 %v4012
        %5579 = vmatpush2.bf16.msra.mxu0 %v4011
        %5580 = vmatprep.subr.bf16.mxu0 %v3990
        %5581 = vmatpush2.bf16.msra.mxu0 %v3989
        %5582 = vmatprep.mubr.bf16.mxu0 %v512
        %5583 = vmatmul.mubr.bf16.gmra.mxu0 %v511
        %v5584 = vpop.f32.mrf.mxu0
        %v5585 = vadd.f32 %v5544, %v5584
        %v5586 = vpop.f32.mrf.mxu0
        %v5587 = vadd.f32 %v5546, %v5586
        %v5588 = vpop.f32.mrf.mxu0
        %v5589 = vpop.f32.mrf.mxu0
        %5590 = vdwg.mxu0
        %5591 = vmatprep.subr.bf16.mxu0 %v3618
        %5592 = vmatpush1.bf16.msra.mxu0 %v3617
        %5593 = vmatprep.subr.bf16.mxu0 %v3596
        %5594 = vmatpush1.bf16.msra.mxu0 %v3595
        %5595 = vmatprep.subr.bf16.mxu0 %v3574
        %5596 = vmatpush1.bf16.msra.mxu0 %v3573
        %5597 = vmatprep.subr.bf16.mxu0 %v3552
        %5598 = vmatpush1.bf16.msra.mxu0 %v3551
        %5599 = vmatprep.subr.bf16.mxu0 %v3530
        %5600 = vmatpush1.bf16.msra.mxu0 %v3529
        %5601 = vmatprep.subr.bf16.mxu0 %v3508
        %5602 = vmatpush1.bf16.msra.mxu0 %v3507
        %5603 = vmatprep.subr.bf16.mxu0 %v3486
        %5604 = vmatpush1.bf16.msra.mxu0 %v3485
        %5605 = vmatprep.subr.bf16.mxu0 %v3464
        %5606 = vmatpush1.bf16.msra.mxu0 %v3463
        %5607 = vmatprep.subr.bf16.mxu0 %v3794
        %5608 = vmatpush2.bf16.msra.mxu0 %v3793
        %5609 = vmatprep.subr.bf16.mxu0 %v3772
        %5610 = vmatpush2.bf16.msra.mxu0 %v3771
        %5611 = vmatprep.subr.bf16.mxu0 %v3750
        %5612 = vmatpush2.bf16.msra.mxu0 %v3749
        %5613 = vmatprep.subr.bf16.mxu0 %v3728
        %5614 = vmatpush2.bf16.msra.mxu0 %v3727
        %5615 = vmatprep.subr.bf16.mxu0 %v3706
        %5616 = vmatpush2.bf16.msra.mxu0 %v3705
        %5617 = vmatprep.subr.bf16.mxu0 %v3684
        %5618 = vmatpush2.bf16.msra.mxu0 %v3683
        %5619 = vmatprep.subr.bf16.mxu0 %v3662
        %5620 = vmatpush2.bf16.msra.mxu0 %v3661
        %5621 = vmatprep.subr.bf16.mxu0 %v3640
        %5622 = vmatpush2.bf16.msra.mxu0 %v3639
        %5623 = vmatprep.mubr.bf16.mxu0 %v510
        %5624 = vmatmul.mubr.bf16.gmra.mxu0 %v509
        %v5625 = vpop.f32.mrf.mxu0
        %v5626 = vadd.f32 %v1298, %v5625
        %v5627 = vpop.f32.mrf.mxu0
        %v5628 = vadd.f32 %v1302, %v5627
        %v5629 = vpop.f32.mrf.mxu0
        %v5630 = vpop.f32.mrf.mxu0
        %5631 = vdwg.mxu0
        %5632 = vmatprep.subr.bf16.mxu0 %v3970
        %5633 = vmatpush1.bf16.msra.mxu0 %v3969
        %5634 = vmatprep.subr.bf16.mxu0 %v3948
        %5635 = vmatpush1.bf16.msra.mxu0 %v3947
        %5636 = vmatprep.subr.bf16.mxu0 %v3926
        %5637 = vmatpush1.bf16.msra.mxu0 %v3925
        %5638 = vmatprep.subr.bf16.mxu0 %v3904
        %5639 = vmatpush1.bf16.msra.mxu0 %v3903
        %5640 = vmatprep.subr.bf16.mxu0 %v3882
        %5641 = vmatpush1.bf16.msra.mxu0 %v3881
        %5642 = vmatprep.subr.bf16.mxu0 %v3860
        %5643 = vmatpush1.bf16.msra.mxu0 %v3859
        %5644 = vmatprep.subr.bf16.mxu0 %v3838
        %5645 = vmatpush1.bf16.msra.mxu0 %v3837
        %5646 = vmatprep.subr.bf16.mxu0 %v3816
        %5647 = vmatpush1.bf16.msra.mxu0 %v3815
        %5648 = vmatprep.subr.bf16.mxu0 %v4146
        %5649 = vmatpush2.bf16.msra.mxu0 %v4145
        %5650 = vmatprep.subr.bf16.mxu0 %v4124
        %5651 = vmatpush2.bf16.msra.mxu0 %v4123
        %5652 = vmatprep.subr.bf16.mxu0 %v4102
        %5653 = vmatpush2.bf16.msra.mxu0 %v4101
        %5654 = vmatprep.subr.bf16.mxu0 %v4080
        %5655 = vmatpush2.bf16.msra.mxu0 %v4079
        %5656 = vmatprep.subr.bf16.mxu0 %v4058
        %5657 = vmatpush2.bf16.msra.mxu0 %v4057
        %5658 = vmatprep.subr.bf16.mxu0 %v4036
        %5659 = vmatpush2.bf16.msra.mxu0 %v4035
        %5660 = vmatprep.subr.bf16.mxu0 %v4014
        %5661 = vmatpush2.bf16.msra.mxu0 %v4013
        %5662 = vmatprep.subr.bf16.mxu0 %v3992
        %5663 = vmatpush2.bf16.msra.mxu0 %v3991
        %5664 = vmatprep.mubr.bf16.mxu0 %v512
        %5665 = vmatmul.mubr.bf16.gmra.mxu0 %v511
        %v5666 = vpop.f32.mrf.mxu0
        %v5667 = vadd.f32 %v5626, %v5666
        %v5668 = vpop.f32.mrf.mxu0
        %v5669 = vadd.f32 %v5628, %v5668
        %v5670 = vpop.f32.mrf.mxu0
        %v5671 = vpop.f32.mrf.mxu0
        %5672 = vdwg.mxu0
        %5673 = vmatprep.subr.bf16.mxu0 %v3620
        %5674 = vmatpush1.bf16.msra.mxu0 %v3619
        %5675 = vmatprep.subr.bf16.mxu0 %v3598
        %5676 = vmatpush1.bf16.msra.mxu0 %v3597
        %5677 = vmatprep.subr.bf16.mxu0 %v3576
        %5678 = vmatpush1.bf16.msra.mxu0 %v3575
        %5679 = vmatprep.subr.bf16.mxu0 %v3554
        %5680 = vmatpush1.bf16.msra.mxu0 %v3553
        %5681 = vmatprep.subr.bf16.mxu0 %v3532
        %5682 = vmatpush1.bf16.msra.mxu0 %v3531
        %5683 = vmatprep.subr.bf16.mxu0 %v3510
        %5684 = vmatpush1.bf16.msra.mxu0 %v3509
        %5685 = vmatprep.subr.bf16.mxu0 %v3488
        %5686 = vmatpush1.bf16.msra.mxu0 %v3487
        %5687 = vmatprep.subr.bf16.mxu0 %v3466
        %5688 = vmatpush1.bf16.msra.mxu0 %v3465
        %5689 = vmatprep.subr.bf16.mxu0 %v3796
        %5690 = vmatpush2.bf16.msra.mxu0 %v3795
        %5691 = vmatprep.subr.bf16.mxu0 %v3774
        %5692 = vmatpush2.bf16.msra.mxu0 %v3773
        %5693 = vmatprep.subr.bf16.mxu0 %v3752
        %5694 = vmatpush2.bf16.msra.mxu0 %v3751
        %5695 = vmatprep.subr.bf16.mxu0 %v3730
        %5696 = vmatpush2.bf16.msra.mxu0 %v3729
        %5697 = vmatprep.subr.bf16.mxu0 %v3708
        %5698 = vmatpush2.bf16.msra.mxu0 %v3707
        %5699 = vmatprep.subr.bf16.mxu0 %v3686
        %5700 = vmatpush2.bf16.msra.mxu0 %v3685
        %5701 = vmatprep.subr.bf16.mxu0 %v3664
        %5702 = vmatpush2.bf16.msra.mxu0 %v3663
        %5703 = vmatprep.subr.bf16.mxu0 %v3642
        %5704 = vmatpush2.bf16.msra.mxu0 %v3641
        %5705 = vmatprep.mubr.bf16.mxu0 %v510
        %5706 = vmatmul.mubr.bf16.gmra.mxu0 %v509
        %v5707 = vpop.f32.mrf.mxu0
        %v5708 = vadd.f32 %v1306, %v5707
        %v5709 = vpop.f32.mrf.mxu0
        %v5710 = vadd.f32 %v1310, %v5709
        %v5711 = vpop.f32.mrf.mxu0
        %v5712 = vpop.f32.mrf.mxu0
        %5713 = vdwg.mxu0
        %5714 = vmatprep.subr.bf16.mxu0 %v3972
        %5715 = vmatpush1.bf16.msra.mxu0 %v3971
        %5716 = vmatprep.subr.bf16.mxu0 %v3950
        %5717 = vmatpush1.bf16.msra.mxu0 %v3949
        %5718 = vmatprep.subr.bf16.mxu0 %v3928
        %5719 = vmatpush1.bf16.msra.mxu0 %v3927
        %5720 = vmatprep.subr.bf16.mxu0 %v3906
        %5721 = vmatpush1.bf16.msra.mxu0 %v3905
        %5722 = vmatprep.subr.bf16.mxu0 %v3884
        %5723 = vmatpush1.bf16.msra.mxu0 %v3883
        %5724 = vmatprep.subr.bf16.mxu0 %v3862
        %5725 = vmatpush1.bf16.msra.mxu0 %v3861
        %5726 = vmatprep.subr.bf16.mxu0 %v3840
        %5727 = vmatpush1.bf16.msra.mxu0 %v3839
        %5728 = vmatprep.subr.bf16.mxu0 %v3818
        %5729 = vmatpush1.bf16.msra.mxu0 %v3817
        %5730 = vmatprep.subr.bf16.mxu0 %v4148
        %5731 = vmatpush2.bf16.msra.mxu0 %v4147
        %5732 = vmatprep.subr.bf16.mxu0 %v4126
        %5733 = vmatpush2.bf16.msra.mxu0 %v4125
        %5734 = vmatprep.subr.bf16.mxu0 %v4104
        %5735 = vmatpush2.bf16.msra.mxu0 %v4103
        %5736 = vmatprep.subr.bf16.mxu0 %v4082
        %5737 = vmatpush2.bf16.msra.mxu0 %v4081
        %5738 = vmatprep.subr.bf16.mxu0 %v4060
        %5739 = vmatpush2.bf16.msra.mxu0 %v4059
        %5740 = vmatprep.subr.bf16.mxu0 %v4038
        %5741 = vmatpush2.bf16.msra.mxu0 %v4037
        %5742 = vmatprep.subr.bf16.mxu0 %v4016
        %5743 = vmatpush2.bf16.msra.mxu0 %v4015
        %5744 = vmatprep.subr.bf16.mxu0 %v3994
        %5745 = vmatpush2.bf16.msra.mxu0 %v3993
        %5746 = vmatprep.mubr.bf16.mxu0 %v512
        %5747 = vmatmul.mubr.bf16.gmra.mxu0 %v511
        %v5748 = vpop.f32.mrf.mxu0
        %v5749 = vadd.f32 %v5708, %v5748
        %v5750 = vpop.f32.mrf.mxu0
        %v5751 = vadd.f32 %v5710, %v5750
        %v5752 = vpop.f32.mrf.mxu0
        %v5753 = vpop.f32.mrf.mxu0
        %5754 = vdwg.mxu0
        %v5777 = vcombine.low %v4929, %v4931
        %v5778 = vcombine.low %v5011, %v5013
        %v5780 = vunpack.c.l.s4 1983009808
        %v5781 = vunpack.c.0.s8 %v5780
        %v5782 = vlaneseq
        %v5783 = vshrl.u32 %v5782, 7
        %v5784 = vsub.s32 %v5781, %v5783
        %v5785 = vrot.slane %v5777, %v5784
        %v5787 = vunpack.c.l.s4 1983009808
        %v5788 = vunpack.c.0.s8 %v5787
        %v5789 = vlaneseq
        %v5790 = vshrl.u32 %v5789, 7
        %v5791 = vsub.s32 %v5788, %v5790
        %v5792 = vrot.slane %v5778, %v5791
        %v5793 = vcombine.low %v5785, %v5792
        %v5794 = vcombine.low %v5093, %v5095
        %v5795 = vcombine.low %v5175, %v5177
        %v5797 = vunpack.c.l.s4 1983009808
        %v5798 = vunpack.c.0.s8 %v5797
        %v5799 = vlaneseq
        %v5800 = vshrl.u32 %v5799, 7
        %v5801 = vsub.s32 %v5798, %v5800
        %v5802 = vrot.slane %v5794, %v5801
        %v5804 = vunpack.c.l.s4 1983009808
        %v5805 = vunpack.c.0.s8 %v5804
        %v5806 = vlaneseq
        %v5807 = vshrl.u32 %v5806, 7
        %v5808 = vsub.s32 %v5805, %v5807
        %v5809 = vrot.slane %v5795, %v5808
        %v5810 = vcombine.low %v5802, %v5809
        %v5811 = vcombine.low %v5257, %v5259
        %v5812 = vcombine.low %v5339, %v5341
        %v5814 = vunpack.c.l.s4 1983009808
        %v5815 = vunpack.c.0.s8 %v5814
        %v5816 = vlaneseq
        %v5817 = vshrl.u32 %v5816, 7
        %v5818 = vsub.s32 %v5815, %v5817
        %v5819 = vrot.slane %v5811, %v5818
        %v5821 = vunpack.c.l.s4 1983009808
        %v5822 = vunpack.c.0.s8 %v5821
        %v5823 = vlaneseq
        %v5824 = vshrl.u32 %v5823, 7
        %v5825 = vsub.s32 %v5822, %v5824
        %v5826 = vrot.slane %v5812, %v5825
        %v5827 = vcombine.low %v5819, %v5826
        %v5828 = vcombine.low %v5421, %v5423
        %v5829 = vcombine.low %v5503, %v5505
        %v5831 = vunpack.c.l.s4 1983009808
        %v5832 = vunpack.c.0.s8 %v5831
        %v5833 = vlaneseq
        %v5834 = vshrl.u32 %v5833, 7
        %v5835 = vsub.s32 %v5832, %v5834
        %v5836 = vrot.slane %v5828, %v5835
        %v5838 = vunpack.c.l.s4 1983009808
        %v5839 = vunpack.c.0.s8 %v5838
        %v5840 = vlaneseq
        %v5841 = vshrl.u32 %v5840, 7
        %v5842 = vsub.s32 %v5839, %v5841
        %v5843 = vrot.slane %v5829, %v5842
        %v5844 = vcombine.low %v5836, %v5843
        %v5845 = vcombine.low %v5585, %v5587
        %v5846 = vcombine.low %v5667, %v5669
        %v5848 = vunpack.c.l.s4 1983009808
        %v5849 = vunpack.c.0.s8 %v5848
        %v5850 = vlaneseq
        %v5851 = vshrl.u32 %v5850, 7
        %v5852 = vsub.s32 %v5849, %v5851
        %v5853 = vrot.slane %v5845, %v5852
        %v5855 = vunpack.c.l.s4 1983009808
        %v5856 = vunpack.c.0.s8 %v5855
        %v5857 = vlaneseq
        %v5858 = vshrl.u32 %v5857, 7
        %v5859 = vsub.s32 %v5856, %v5858
        %v5860 = vrot.slane %v5846, %v5859
        %v5861 = vcombine.low %v5853, %v5860
        %v5862 = vcombine.low %v5749, %v5751
        %v5864 = vunpack.c.l.s4 1983009808
        %v5865 = vunpack.c.0.s8 %v5864
        %v5866 = vlaneseq
        %v5867 = vshrl.u32 %v5866, 7
        %v5868 = vsub.s32 %v5865, %v5867
        %v5869 = vrot.slane %v5862, %v5868
        %5876 = vst [vmem:[%s319] sm:$0xff] %v5793
        %5877 = vst [vmem:[%s319 + $0x8] sm:$0xff] %v5810
        %5878 = vst [vmem:[%s319 + $0x10] sm:$0xff] %v5827
        %5879 = vst [vmem:[%s319 + $0x18] sm:$0xff] %v5844
        %5880 = vst [vmem:[%s319 + $0x20] sm:$0xff] %v5861
        %5881 = vst [vmem:[%s319 + $0x28] sm:$0xf] %v5869
        %s5882 = smul.u32 22, %s21
        %p5883 = scmp.lt.s32.totalorder %s5882, 43
        %s5884 = scalar_select %p5883, %s5882, 43
        %s5885 = smul.addr %s5884, 2
        %s5886 = scalar_lea.vmem %s5, %s5885
        // Predicated region
        $region61: #{decoder_forward.1} parent=39 // pred_check
          %p5887 = pneg %p154
        $region62: #{decoder_forward.1} parent=39 // pred_check_branch
          %5889 = sbr.rel (%p5887) target = $region64
        $region63: #{decoder_forward.1} parent=39 // pred_region
          %s5890 = smul.u32 22, %s21
        $region64: #{decoder_forward.1} parent=39 // pred_fallthru
          _
      $region40: #{decoder_forward.1} parent=5 // pred_fallthru
        _
      %p5891 = scmp.le.s32.totalorder 2, %s16
      // Predicated region
      $region65: #{decoder_forward.1} parent=5 // pred_check
        %p5892 = pneg %p5891
      $region66: #{decoder_forward.1} parent=5 // pred_check_branch
        %5894 = sbr.rel (%p5892) target = $region68
      $region67: #{decoder_forward.1} parent=5 // pred_region
        %s5895 = ssub.s32 %s16, 2
        // Predicated region
        $region69: #{decoder_forward.1} parent=67 // pred_check
          %p5896 = pneg %p160
        $region70: #{decoder_forward.1} parent=67 // pred_check_branch
          %5898 = sbr.rel (%p5896) target = $region72
        $region71: #{decoder_forward.1} parent=67 // pred_region
          %s5899 = smul.u32 22, %s22
          %p5900 = scmp.lt.s32.totalorder %s5899, 43
          %s5901 = scalar_select %p5900, %s5899, 43
          %s5902 = smul.addr %s5901, 2
          %s5903 = scalar_lea.vmem %s5, %s5902
        $region72: #{decoder_forward.1} parent=67 // pred_fallthru
          _
      $region68: #{decoder_forward.1} parent=5 // pred_fallthru
        _
    $region6: #{decoder_forward.1} parent=1 // loop_footer
      %s20 = sadd.s32 1, %s16
    $region7: #{decoder_forward.1} parent=1 // loop_footer_branch
      %15 = sbr.rel target = $region3
    $region8: #{decoder_forward.1} parent=1 // loop_exit
      _
    %5904 = vsyncpa [#allocation3], 1
    %s5905 = scalar_lea.sflag [#allocation3], 1
    %5906 = vsyncpa %s5905, 1
    %5907 = vsyncpa [#allocation5], 1
    %5908 = vsyncpa [#allocation8], 1
    %s5909 = scalar_lea.sflag [#allocation8], 1
    %5910 = vsyncpa %s5909, 1

</llo_original>
